<compile_context>
chip_gen: v6e
topology: v6e:2x2x1
jax: 0.10.0
libtpu: 0.0.40
codegen_flags: <defaults>
</compile_context>

<pallas_src>
import functools

import jax
import jax.numpy as jnp
from jax.experimental import pallas as pl
from jax.experimental.pallas import tpu as pltpu

POW = 2


def _posneg_conv_kernel(x_ref, w_ref, b_ref, o_ref, *, kh, kw, precision):
    # x_ref: [1, Hp, Wp, Ccat]    full spatially padded image, NHWC, Ccat=2*C_in
    # w_ref: [kh, kw*Ccat, Npad]  squared, sign-folded, residual-folded, N-padded
    # b_ref: [1, Npad]
    # o_ref: [1, th, W, Npad]     one tile of output rows, cols = [y_pos|y_neg|0]
    _, th, w, npad = o_ref.shape
    ccat = x_ref.shape[-1]
    r0 = pl.program_id(1) * th          # first padded-input row for tap dy=0

    acc = jnp.zeros((th * w, npad), jnp.float32)
    for dy in range(kh):                # static unroll: kh accumulate-matmuls
        # Row slab: H is an outer (non-tiled) dim -> pure address offset, no relayout.
        rows = x_ref[0, pl.ds(r0 + dy, th), :, :]                 # [th, Wp, Ccat]
        # Width-im2col: fold the kw taps into the contraction dimension.
        patch = jnp.concatenate(
            [rows[:, dx:dx + w, :] for dx in range(kw)], axis=-1)  # [th, W, kw*Ccat]
        acc = acc + jnp.dot(
            patch.reshape(th * w, kw * ccat), w_ref[dy],
            preferred_element_type=jnp.float32, precision=precision)

    y = jnp.maximum(acc + b_ref[...], 0.0)       # bias + ReLU, f32 on the VPU
    o_ref[...] = y.reshape(o_ref.shape).astype(o_ref.dtype)


def posneg_conv2d(x_pos, x_neg, w_pp, w_pn, w_np, w_nn, bias_pos, bias_neg,
                  padding, stride=1, tile_h=None,
                  precision=jax.lax.Precision.HIGHEST):
    n, c_in, h, w = x_pos.shape
    c_out, _, kh, kw = w_pp.shape
    ph, pw = padding
    # The residual add in the reference module only type-checks when the conv
    # is shape-preserving; that is also what makes the centre-tap fold exact.
    assert stride == 1 and 2 * ph == kh - 1 and 2 * pw == kw - 1
    assert c_out >= c_in
    if tile_h is None:
        tile_h = next(t for t in (8, 4, 2, 1) if h % t == 0)
    assert h % tile_h == 0
    f32 = jnp.float32
    ccat = 2 * c_in
    cout2 = 2 * c_out
    npad = ((cout2 + 127) // 128) * 128      # lane-dense output channel count

    # ---- input: NCHW -> padded NHWC, pos|neg channels concatenated.
    # transpose+concat+pad fuse into one XLA copy: one HBM round trip for x.
    x_cat = jnp.concatenate(
        [jnp.transpose(x_pos, (0, 2, 3, 1)),
         jnp.transpose(x_neg, (0, 2, 3, 1))], axis=-1).astype(f32)
    x_pad = jnp.pad(x_cat, ((0, 0), (ph, ph), (pw, pw), (0, 0)))
    hp, wp = h + 2 * ph, w + 2 * pw

    # ---- weights: square (POW=2), fold signs, fold residual, pad N, fold kw->K.
    def prep(wt, sign):
        wt = wt.astype(f32)
        wt = wt * wt if POW == 2 else wt ** POW
        return sign * jnp.transpose(wt, (2, 3, 1, 0))      # -> [kh, kw, C_in, C_out]

    # rows (K) = [x_pos chans | x_neg chans], cols (N) = [y_pos | y_neg], signs folded.
    w4 = jnp.concatenate(
        [jnp.concatenate([prep(w_pp, 1.0), prep(w_pn, 1.0)], axis=-1),
         jnp.concatenate([prep(w_np, -1.0), prep(w_nn, -1.0)], axis=-1)],
        axis=2)                                            # [kh, kw, Ccat, 2*C_out]

    # Fold y_pos[:, :C_in] += x_pos and y_neg[:, :C_in] += x_neg into the centre
    # tap as identity columns (exact for stride=1 / same padding, f32 operands).
    res = jnp.zeros((ccat, cout2), f32)
    idx = jnp.arange(c_in)
    res = res.at[idx, idx].set(1.0).at[c_in + idx, c_out + idx].set(1.0)
    w4 = w4.at[ph, pw].add(res)

    w4 = jnp.pad(w4, ((0, 0), (0, 0), (0, 0), (0, npad - cout2)))
    w_packed = w4.reshape(kh, kw * ccat, npad)             # kw folded into K

    b_packed = jnp.concatenate(
        [bias_pos.reshape(c_out), bias_neg.reshape(c_out),
         jnp.zeros((npad - cout2,), f32)]).astype(f32).reshape(1, npad)

    kernel = functools.partial(_posneg_conv_kernel, kh=kh, kw=kw,
                               precision=precision)

    y_cat = pl.pallas_call(
        kernel,
        out_shape=jax.ShapeDtypeStruct((n, h, w, npad), f32),
        grid=(n, h // tile_h),
        in_specs=[
            # Full padded image per batch step; constant over the h-tile axis so
            # it is DMA'd once per batch element and reused.
            # TODO(synk): at very large H*W*C, halo-DMA only a (tile_h+kh-1)-row
            # window (pl.Element / manual make_async_copy) for the v7x 64 MiB budget.
            pl.BlockSpec((1, hp, wp, ccat), lambda b, i: (b, 0, 0, 0)),
            # Weights/bias: constant index map -> fetched once, VMEM-resident.
            # TODO(synk): pipeline_mode=pl.Buffered(1) here to drop the unused
            # second buffer once the sandbox jax version is confirmed to support it.
            pl.BlockSpec((kh, kw * ccat, npad), lambda b, i: (0, 0, 0)),
            pl.BlockSpec((1, npad), lambda b, i: (0, 0)),
        ],
        out_specs=pl.BlockSpec((1, tile_h, w, npad), lambda b, i: (b, i, 0, 0)),
        compiler_params=pltpu.CompilerParams(
            dimension_semantics=("parallel", "parallel"),
            vmem_limit_bytes=64 * 1024 * 1024),
    )(x_pad, w_packed, b_packed)

    # Drop the zero channel padding, split the fused slab, back to NCHW like torch.
    y_pos = jnp.transpose(y_cat[..., :c_out], (0, 3, 1, 2))
    y_neg = jnp.transpose(y_cat[..., c_out:cout2], (0, 3, 1, 2))
    return y_pos, y_neg


if __name__ == "__main__":
    key = jax.random.PRNGKey(0)
    keys = jax.random.split(key, 8)

    N, C_in, C_out, H, W = 2, 4, 8, 16, 16
    KH, KW = 3, 3
    padding = (1, 1)

    # Parameters (torch.rand -> uniform [0, 1))
    w_pp = jax.random.uniform(keys[0], (C_out, C_in, KH, KW), dtype=jnp.float32)
    w_pn = jax.random.uniform(keys[1], (C_out, C_in, KH, KW), dtype=jnp.float32)
    w_np = jax.random.uniform(keys[2], (C_out, C_in, KH, KW), dtype=jnp.float32)
    w_nn = jax.random.uniform(keys[3], (C_out, C_in, KH, KW), dtype=jnp.float32)
    bias_pos = jax.random.uniform(keys[4], (C_out, 1, 1), dtype=jnp.float32)
    bias_neg = jax.random.uniform(keys[5], (C_out, 1, 1), dtype=jnp.float32)

    # Inputs: xs = (x_pos, x_neg), NCHW
    x_pos = jax.random.uniform(keys[6], (N, C_in, H, W), dtype=jnp.float32)
    x_neg = jax.random.uniform(keys[7], (N, C_in, H, W), dtype=jnp.float32)

    y_pos, y_neg = posneg_conv2d(x_pos, x_neg, w_pp, w_pn, w_np, w_nn,
                                 bias_pos, bias_neg, padding, stride=1)
    y_pos, y_neg = jax.block_until_ready((y_pos, y_neg))

    # ---- pure-JAX reference matching the PyTorch forward ----
    def conv(x, wt):
        return jax.lax.conv_general_dilated(
            x, wt, window_strides=(1, 1),
            padding=((padding[0], padding[0]), (padding[1], padding[1])),
            dimension_numbers=("NCHW", "OIHW", "NCHW"),
            precision=jax.lax.Precision.HIGHEST)

    yp_ref = conv(x_pos, w_pp ** POW) - conv(x_neg, w_np ** POW) + bias_pos[None]
    yp_ref = yp_ref.at[:, :C_in].add(x_pos)
    yp_ref = jnp.maximum(yp_ref, 0.0)

    yn_ref = conv(x_pos, w_pn ** POW) - conv(x_neg, w_nn ** POW) + bias_neg[None]
    yn_ref = yn_ref.at[:, :C_in].add(x_neg)
    yn_ref = jnp.maximum(yn_ref, 0.0)

    assert jnp.allclose(y_pos, yp_ref, atol=1e-4, rtol=1e-5), "y_pos mismatch"
    assert jnp.allclose(y_neg, yn_ref, atol=1e-4, rtol=1e-5), "y_neg mismatch"

    print("KERNEL_OK")
</pallas_src>

<mosaic_0001>
module attributes {stable_mosaic.version = 11 : i64} {
  func.func @_posneg_conv_kernel(%arg0: i32, %arg1: i32, %arg2: memref<1x18x18x8xf32, #tpu.memory_space<vmem>>, %arg3: memref<3x24x128xf32, #tpu.memory_space<vmem>>, %arg4: memref<1x128xf32, #tpu.memory_space<vmem>>, %arg5: memref<1x8x16x128xf32, #tpu.memory_space<vmem>>) attributes {dimension_semantics = [#tpu.dimension_semantics<parallel>, #tpu.dimension_semantics<parallel>], iteration_bounds = array<i64: 2, 2>, scalar_prefetch = 0 : i64, scratch_operands = 0 : i64, tpu.core_type = #tpu.core_type<tc>, window_params = [{transform_indices = @transform_0, window_bounds = array<i64: 1, 18, 18, 8>}, {pipeline_mode = #tpu.pipeline_mode<synchronous>, transform_indices = @transform_1, window_bounds = array<i64: 3, 24, 128>}, {pipeline_mode = #tpu.pipeline_mode<synchronous>, transform_indices = @transform_2, window_bounds = array<i64: 1, 128>}, {transform_indices = @transform_3, window_bounds = array<i64: 1, 8, 16, 128>}]} {
    %c8_i32 = arith.constant 8 : i32
    %0 = arith.muli %arg1, %c8_i32 : i32
    %cst = arith.constant 0.000000e+00 : f32
    %1 = vector.broadcast %cst : f32 to vector<128x128xf32>
    %c0_i32 = arith.constant 0 : i32
    %2 = arith.addi %0, %c0_i32 : i32
    %c0 = arith.constant 0 : index
    %3 = arith.index_cast %2 : i32 to index
    %c0_0 = arith.constant 0 : index
    %c0_1 = arith.constant 0 : index
    %4 = vector.load %arg2[%c0, %3, %c0_0, %c0_1] : memref<1x18x18x8xf32, #tpu.memory_space<vmem>>, vector<1x8x18x8xf32>
    %5 = vector.shape_cast %4 : vector<1x8x18x8xf32> to vector<8x18x8xf32>
    %6 = vector.extract_strided_slice %5 {offsets = [0, 0, 0], sizes = [8, 16, 8], strides = [1, 1, 1]} : vector<8x18x8xf32> to vector<8x16x8xf32>
    %7 = vector.extract_strided_slice %5 {offsets = [0, 1, 0], sizes = [8, 16, 8], strides = [1, 1, 1]} : vector<8x18x8xf32> to vector<8x16x8xf32>
    %8 = vector.extract_strided_slice %5 {offsets = [0, 2, 0], sizes = [8, 16, 8], strides = [1, 1, 1]} : vector<8x18x8xf32> to vector<8x16x8xf32>
    %9 = tpu.concatenate %6, %7, %8 in 2 : vector<8x16x8xf32>, vector<8x16x8xf32>, vector<8x16x8xf32> -> vector<8x16x24xf32>
    %10 = vector.shape_cast %9 : vector<8x16x24xf32> to vector<128x24xf32>
    %c0_2 = arith.constant 0 : index
    %c0_3 = arith.constant 0 : index
    %c0_4 = arith.constant 0 : index
    %11 = vector.load %arg3[%c0_2, %c0_3, %c0_4] : memref<3x24x128xf32, #tpu.memory_space<vmem>>, vector<1x24x128xf32>
    %12 = vector.shape_cast %11 : vector<1x24x128xf32> to vector<24x128xf32>
    %cst_5 = arith.constant dense<0.000000e+00> : vector<128x128xf32>
    %13 = tpu.matmul %10, %12, %cst_5 {dimension_numbers = #tpu.dot_dimension_numbers<[1], [0], [0], [1], [0, 0, 1, 1], [], []>, precision = #tpu.contract_precision<fp32>} : vector<128x24xf32>, vector<24x128xf32>, vector<128x128xf32> -> vector<128x128xf32>
    %14 = arith.addf %1, %13 : vector<128x128xf32>
    %c1_i32 = arith.constant 1 : i32
    %15 = arith.addi %0, %c1_i32 : i32
    %c0_6 = arith.constant 0 : index
    %16 = arith.index_cast %15 : i32 to index
    %c0_7 = arith.constant 0 : index
    %c0_8 = arith.constant 0 : index
    %17 = vector.load %arg2[%c0_6, %16, %c0_7, %c0_8] : memref<1x18x18x8xf32, #tpu.memory_space<vmem>>, vector<1x8x18x8xf32>
    %18 = vector.shape_cast %17 : vector<1x8x18x8xf32> to vector<8x18x8xf32>
    %19 = vector.extract_strided_slice %18 {offsets = [0, 0, 0], sizes = [8, 16, 8], strides = [1, 1, 1]} : vector<8x18x8xf32> to vector<8x16x8xf32>
    %20 = vector.extract_strided_slice %18 {offsets = [0, 1, 0], sizes = [8, 16, 8], strides = [1, 1, 1]} : vector<8x18x8xf32> to vector<8x16x8xf32>
    %21 = vector.extract_strided_slice %18 {offsets = [0, 2, 0], sizes = [8, 16, 8], strides = [1, 1, 1]} : vector<8x18x8xf32> to vector<8x16x8xf32>
    %22 = tpu.concatenate %19, %20, %21 in 2 : vector<8x16x8xf32>, vector<8x16x8xf32>, vector<8x16x8xf32> -> vector<8x16x24xf32>
    %23 = vector.shape_cast %22 : vector<8x16x24xf32> to vector<128x24xf32>
    %c1 = arith.constant 1 : index
    %c0_9 = arith.constant 0 : index
    %c0_10 = arith.constant 0 : index
    %24 = vector.load %arg3[%c1, %c0_9, %c0_10] : memref<3x24x128xf32, #tpu.memory_space<vmem>>, vector<1x24x128xf32>
    %25 = vector.shape_cast %24 : vector<1x24x128xf32> to vector<24x128xf32>
    %cst_11 = arith.constant dense<0.000000e+00> : vector<128x128xf32>
    %26 = tpu.matmul %23, %25, %cst_11 {dimension_numbers = #tpu.dot_dimension_numbers<[1], [0], [0], [1], [0, 0, 1, 1], [], []>, precision = #tpu.contract_precision<fp32>} : vector<128x24xf32>, vector<24x128xf32>, vector<128x128xf32> -> vector<128x128xf32>
    %27 = arith.addf %14, %26 : vector<128x128xf32>
    %c2_i32 = arith.constant 2 : i32
    %28 = arith.addi %0, %c2_i32 : i32
    %c0_12 = arith.constant 0 : index
    %29 = arith.index_cast %28 : i32 to index
    %c0_13 = arith.constant 0 : index
    %c0_14 = arith.constant 0 : index
    %30 = vector.load %arg2[%c0_12, %29, %c0_13, %c0_14] : memref<1x18x18x8xf32, #tpu.memory_space<vmem>>, vector<1x8x18x8xf32>
    %31 = vector.shape_cast %30 : vector<1x8x18x8xf32> to vector<8x18x8xf32>
    %32 = vector.extract_strided_slice %31 {offsets = [0, 0, 0], sizes = [8, 16, 8], strides = [1, 1, 1]} : vector<8x18x8xf32> to vector<8x16x8xf32>
    %33 = vector.extract_strided_slice %31 {offsets = [0, 1, 0], sizes = [8, 16, 8], strides = [1, 1, 1]} : vector<8x18x8xf32> to vector<8x16x8xf32>
    %34 = vector.extract_strided_slice %31 {offsets = [0, 2, 0], sizes = [8, 16, 8], strides = [1, 1, 1]} : vector<8x18x8xf32> to vector<8x16x8xf32>
    %35 = tpu.concatenate %32, %33, %34 in 2 : vector<8x16x8xf32>, vector<8x16x8xf32>, vector<8x16x8xf32> -> vector<8x16x24xf32>
    %36 = vector.shape_cast %35 : vector<8x16x24xf32> to vector<128x24xf32>
    %c2 = arith.constant 2 : index
    %c0_15 = arith.constant 0 : index
    %c0_16 = arith.constant 0 : index
    %37 = vector.load %arg3[%c2, %c0_15, %c0_16] : memref<3x24x128xf32, #tpu.memory_space<vmem>>, vector<1x24x128xf32>
    %38 = vector.shape_cast %37 : vector<1x24x128xf32> to vector<24x128xf32>
    %cst_17 = arith.constant dense<0.000000e+00> : vector<128x128xf32>
    %39 = tpu.matmul %36, %38, %cst_17 {dimension_numbers = #tpu.dot_dimension_numbers<[1], [0], [0], [1], [0, 0, 1, 1], [], []>, precision = #tpu.contract_precision<fp32>} : vector<128x24xf32>, vector<24x128xf32>, vector<128x128xf32> -> vector<128x128xf32>
    %40 = arith.addf %27, %39 : vector<128x128xf32>
    %c0_18 = arith.constant 0 : index
    %c0_19 = arith.constant 0 : index
    %41 = vector.load %arg4[%c0_18, %c0_19] : memref<1x128xf32, #tpu.memory_space<vmem>>, vector<1x128xf32>
    %42 = vector.broadcast %41 : vector<1x128xf32> to vector<128x128xf32>
    %43 = arith.addf %40, %42 : vector<128x128xf32>
    %cst_20 = arith.constant 0.000000e+00 : f32
    %44 = vector.broadcast %cst_20 : f32 to vector<128x128xf32>
    %45 = arith.maximumf %43, %44 : vector<128x128xf32>
    %46 = vector.shape_cast %45 : vector<128x128xf32> to vector<1x8x16x128xf32>
    %c0_21 = arith.constant 0 : index
    %c0_22 = arith.constant 0 : index
    %c0_23 = arith.constant 0 : index
    %c0_24 = arith.constant 0 : index
    %47 = vector.load %arg5[%c0_21, %c0_22, %c0_23, %c0_24] : memref<1x8x16x128xf32, #tpu.memory_space<vmem>>, vector<1x8x16x128xf32>
    tpu.vector_store %arg5[%c0_21, %c0_22, %c0_23, %c0_24], %46 {strides = array<i32>} : memref<1x8x16x128xf32, #tpu.memory_space<vmem>>, vector<1x8x16x128xf32>,
    return
  }
  func.func @transform_0(%arg0: i32, %arg1: i32) -> (i32, i32, i32, i32) {
    %c0_i32 = arith.constant 0 : i32
    %c0_i32_0 = arith.constant 0 : i32
    %c0_i32_1 = arith.constant 0 : i32
    %c0_i32_2 = arith.constant 0 : i32
    return %arg0, %c0_i32, %c0_i32_0, %c0_i32_1 : i32, i32, i32, i32
  }
  func.func @transform_1(%arg0: i32, %arg1: i32) -> (i32, i32, i32) {
    %c0_i32 = arith.constant 0 : i32
    %c0_i32_0 = arith.constant 0 : i32
    %c0_i32_1 = arith.constant 0 : i32
    %c0_i32_2 = arith.constant 0 : i32
    return %c0_i32, %c0_i32_0, %c0_i32_1 : i32, i32, i32
  }
  func.func @transform_2(%arg0: i32, %arg1: i32) -> (i32, i32) {
    %c0_i32 = arith.constant 0 : i32
    %c0_i32_0 = arith.constant 0 : i32
    %c0_i32_1 = arith.constant 0 : i32
    return %c0_i32, %c0_i32_0 : i32, i32
  }
  func.func @transform_3(%arg0: i32, %arg1: i32) -> (i32, i32, i32, i32) {
    %c0_i32 = arith.constant 0 : i32
    %c0_i32_0 = arith.constant 0 : i32
    %c0_i32_1 = arith.constant 0 : i32
    return %arg0, %arg1, %c0_i32, %c0_i32_0 : i32, i32, i32, i32
  }
}

</mosaic_0001>

<llo_original>
// kernel: tpu_custom_call.1
$region0: #{tpu_custom_call.1}
  #allocation0 [shape = 'u32[]', space=smem, size = 0x4, offset = 0x4, fixed_abs, tag = 'smem constant byte address 0x4 - core index']
  #allocation1 [shape = 'u32[144,128]{1,0:T(1,128)}', space=vmem, size = 0x12000, scoped, tag = 'internal scratch']
  %s0 = inlined_call_operand.vmem [shape: f32[2,18,18,8], index: 0, kind: input, shape index: {}]
  %s1 = inlined_call_operand.vmem [shape: f32[3,24,128], index: 1, kind: input, shape index: {}]
  %s2 = inlined_call_operand.vmem [shape: f32[1,128], index: 2, kind: input, shape index: {}]
  %s3 = inlined_call_operand.hbm [shape: f32[2,16,16,128], index: 3, kind: output, shape index: {}]
  %s4 = sld [smem:[#allocation0]]
  $region45: #{tpu_custom_call.1} parent=0
    _
  %s6 = ssub.s32 1, %s4
  %s7 = scalar_select 0, %s6, %s4
  $region1: #{tpu_custom_call.1} parent=0
    #allocation2 [shape = 'u8[131072]{0}', space=vmem, size = 0x20000, scoped, tag = 'output window, operand 0']
    #allocation3 [shape = 's32[2]{0}', space=sflag, size = 0x8, scoped, tag = 'scoped memory for tpu_custom_call.1']
    %8 = vsyncpa [#allocation3], 0
    %s9 = scalar_lea.sflag [#allocation3], 1
    %10 = vsyncpa %s9, 0
    loop: start=0, step=1, limit=6
    $region2: #{tpu_custom_call.1} parent=1 // loop_pre_header
      _
    $region3: #{tpu_custom_call.1} parent=1 // loop_header
      %s12 = sphi 0, %s16
      %p13 = scmp.ge.s32.totalorder %s12, 6
      %s19 = sphi 0, %s31
      %s20 = sphi 0, %s27
      %s21 = sphi 0, %s19
      %s22 = sphi 0, %s20
      %s23 = sphi 0, %s21
      %s24 = sphi 0, %s22
      %s34 = sphi 0, %s36
      %s37 = sphi 0, %s34
      %s38 = sphi 0, %s37
      %s54 = sphi 0, %s38
      %s58 = sphi 0, %s58
      %s60 = sphi 0, %s58
      %s61 = sphi 0, %s60
      %s75 = sphi 0, %s61
      %s79 = sphi 0, %s79
      %s81 = sphi 0, %s79
      %s82 = sphi 0, %s81
      %s96 = sphi 0, %s82
      %s104 = sphi 0, %s106
      %s107 = sphi 0, %s104
      %s108 = sphi 0, %s107
      %s124 = sphi 0, %s108
    $region4: #{tpu_custom_call.1} parent=1 // loop_header_branch
      %15 = sbr.rel (%p13) target = $region8
    $region5: #{tpu_custom_call.1} parent=1 // loop_body
      %s17 = ssub.s32 %s12, 1
      %s18 = ssub.s32 %s12, 2
      %s25 = sadd.s32 1, %s20
      %p26 = scmp.ge.s32.totalorder %s25, 2
      %s27 = scalar_select %p26, 0, %s25
      %s28 = sadd.s32 1, %s19
      %s29 = scalar_select %p26, %s28, %s19
      %p30 = scmp.ge.s32.totalorder %s29, 2
      %s31 = scalar_select %p30, 0, %s29
      %s32 = ssub.s32 %s19, %s31
      %p33 = scmp.eq.s32.totalorder %s32, 0
      %s35 = sadd.s32 %s34, 1
      %s36 = scalar_select %p33, %s34, %s35
      %p39 = pneg %p33
      %p40 = scmp.eq.s32.totalorder %s12, 3
      %p41 = por %p39, %p40
      %p42 = scmp.ne.s32.totalorder %s34, %s37
      %p43 = scmp.eq.s32.totalorder %s12, 0
      %p44 = por %p42, %p43
      %p45 = scmp.ne.s32.totalorder %s34, %s37
      %p46 = scmp.eq.s32.totalorder %s17, 3
      %p47 = por %p45, %p46
      %p48 = scmp.ne.s32.totalorder %s37, %s38
      %p49 = scmp.eq.s32.totalorder %s17, 0
      %p50 = por %p48, %p49
      %p51 = scmp.ne.s32.totalorder %s37, %s38
      %p52 = scmp.eq.s32.totalorder %s18, 3
      %p53 = por %p51, %p52
      %p55 = scmp.ne.s32.totalorder %s38, %s54
      %p56 = scmp.eq.s32.totalorder %s18, 0
      %p57 = por %p55, %p56
      %s59 = sadd.s32 %s58, 1
      %p62 = scmp.eq.s32.totalorder %s12, 3
      %p63 = scmp.ne.s32.totalorder %s58, %s60
      %p64 = scmp.eq.s32.totalorder %s12, 0
      %p65 = por %p63, %p64
      %p66 = scmp.ne.s32.totalorder %s58, %s60
      %p67 = scmp.eq.s32.totalorder %s17, 3
      %p68 = por %p66, %p67
      %p69 = scmp.ne.s32.totalorder %s60, %s61
      %p70 = scmp.eq.s32.totalorder %s17, 0
      %p71 = por %p69, %p70
      %p72 = scmp.ne.s32.totalorder %s60, %s61
      %p73 = scmp.eq.s32.totalorder %s18, 3
      %p74 = por %p72, %p73
      %p76 = scmp.ne.s32.totalorder %s61, %s75
      %p77 = scmp.eq.s32.totalorder %s18, 0
      %p78 = por %p76, %p77
      %s80 = sadd.s32 %s79, 1
      %p83 = scmp.eq.s32.totalorder %s12, 3
      %p84 = scmp.ne.s32.totalorder %s79, %s81
      %p85 = scmp.eq.s32.totalorder %s12, 0
      %p86 = por %p84, %p85
      %p87 = scmp.ne.s32.totalorder %s79, %s81
      %p88 = scmp.eq.s32.totalorder %s17, 3
      %p89 = por %p87, %p88
      %p90 = scmp.ne.s32.totalorder %s81, %s82
      %p91 = scmp.eq.s32.totalorder %s17, 0
      %p92 = por %p90, %p91
      %p93 = scmp.ne.s32.totalorder %s81, %s82
      %p94 = scmp.eq.s32.totalorder %s18, 3
      %p95 = por %p93, %p94
      %p97 = scmp.ne.s32.totalorder %s82, %s96
      %p98 = scmp.eq.s32.totalorder %s18, 0
      %p99 = por %p97, %p98
      %s100 = ssub.s32 %s19, %s31
      %s101 = ssub.s32 %s20, %s27
      %s102 = sor.u32 %s100, %s101
      %p103 = scmp.eq.s32.totalorder %s102, 0
      %s105 = sadd.s32 %s104, 1
      %s106 = scalar_select %p103, %s104, %s105
      %p109 = pneg %p103
      %p110 = scmp.eq.s32.totalorder %s12, 3
      %p111 = por %p109, %p110
      %p112 = scmp.ne.s32.totalorder %s104, %s107
      %p113 = scmp.eq.s32.totalorder %s12, 0
      %p114 = por %p112, %p113
      %p115 = scmp.ne.s32.totalorder %s104, %s107
      %p116 = scmp.eq.s32.totalorder %s17, 3
      %p117 = por %p115, %p116
      %p118 = scmp.ne.s32.totalorder %s107, %s108
      %p119 = scmp.eq.s32.totalorder %s17, 0
      %p120 = por %p118, %p119
      %p121 = scmp.ne.s32.totalorder %s107, %s108
      %p122 = scmp.eq.s32.totalorder %s18, 3
      %p123 = por %p121, %p122
      %p125 = scmp.ne.s32.totalorder %s108, %s124
      %p126 = scmp.eq.s32.totalorder %s18, 0
      %p127 = por %p125, %p126
      %p128 = scmp.le.s32.totalorder 1, %s12
      %p129 = scmp.lt.s32.totalorder %s12, 5
      %p130 = pnand %p128, %p129
      %p131 = pneg %p130
      // Predicated region
      $region9: #{tpu_custom_call.1} parent=5 // pred_check
        _
      $region10: #{tpu_custom_call.1} parent=5 // pred_check_branch
        %133 = sbr.rel (%p130) target = $region12
      $region11: #{tpu_custom_call.1} parent=5 // pred_region
        %s134 = ssub.s32 %s12, 1
        // Predicated region
        $region13: #{tpu_custom_call.1} parent=11 // pred_check
          %p135 = pneg %p71
        $region14: #{tpu_custom_call.1} parent=11 // pred_check_branch
          %137 = sbr.rel (%p135) target = $region16
        $region15: #{tpu_custom_call.1} parent=11 // pred_region
          _
        $region16: #{tpu_custom_call.1} parent=11 // pred_fallthru
          _
        // Predicated region
        $region17: #{tpu_custom_call.1} parent=11 // pred_check
          %p138 = pneg %p92
        $region18: #{tpu_custom_call.1} parent=11 // pred_check_branch
          %140 = sbr.rel (%p138) target = $region20
        $region19: #{tpu_custom_call.1} parent=11 // pred_region
          _
        $region20: #{tpu_custom_call.1} parent=11 // pred_fallthru
          _
      $region12: #{tpu_custom_call.1} parent=5 // pred_fallthru
        _
      %p141 = scmp.lt.s32.totalorder %s12, 4
      // Predicated region
      $region21: #{tpu_custom_call.1} parent=5 // pred_check
        %p142 = pneg %p141
      $region22: #{tpu_custom_call.1} parent=5 // pred_check_branch
        %144 = sbr.rel (%p142) target = $region24
      $region23: #{tpu_custom_call.1} parent=5 // pred_region
        // Predicated region
        $region25: #{tpu_custom_call.1} parent=23 // pred_check
          %p145 = pneg %p44
        $region26: #{tpu_custom_call.1} parent=23 // pred_check_branch
          %147 = sbr.rel (%p145) target = $region28
        $region27: #{tpu_custom_call.1} parent=23 // pred_region
          %p148 = scmp.lt.s32.totalorder %s19, 1
          %s149 = scalar_select %p148, %s19, 1
          %s150 = smul.addr %s149, 54
          %s151 = smul.addr %s150, 8
          %s152 = scalar_lea.vmem %s0, %s151
        $region28: #{tpu_custom_call.1} parent=23 // pred_fallthru
          _
      $region24: #{tpu_custom_call.1} parent=5 // pred_fallthru
        _
      %p153 = scmp.le.s32.totalorder 1, %s12
      %p154 = scmp.lt.s32.totalorder %s12, 5
      %p155 = pnand %p153, %p154
      %p156 = pneg %p155
      // Predicated region
      $region29: #{tpu_custom_call.1} parent=5 // pred_check
        _
      $region30: #{tpu_custom_call.1} parent=5 // pred_check_branch
        %158 = sbr.rel (%p155) target = $region32
      $region31: #{tpu_custom_call.1} parent=5 // pred_region
        %s159 = ssub.s32 %s12, 1
        %p160 = scmp.lt.s32.totalorder %s21, 1
        %s161 = scalar_select %p160, %s21, 1
        %s162 = smul.addr %s161, 54
        %s163 = smul.addr %s162, 8
        %s164 = scalar_lea.vmem %s0, %s163
        %p165 = pneg %p50
        %p166 = pneg %p47
        %p167 = pneg %p71
        %p168 = pneg %p68
        %p169 = pneg %p92
        %p170 = pneg %p89
        %p171 = pneg %p120
        %p172 = pneg %p117
        %s173 = sand.u32 %s107, 1
        %s174 = scalar_lea.sflag [#allocation3], %s173
        %s175 = sand.u32 %s107, 1
        %s176 = smul.addr %s175, 128
        %s177 = scalar_lea.vmem [#allocation2], %s176
        %p178 = scmp.lt.s32.totalorder %s21, 1
        %s179 = scalar_select %p178, %s21, 1
        %s180 = smul.addr %s179, 54
        %s181 = smul.addr %s180, 8
        %s182 = scalar_lea.vmem %s0, %s181
        %s183 = smul.u32 8, %s22
        %s184 = smul.u32 %s22, 8
        %s185 = smul.u32 %s184, 24
        %s186 = scalar_lea.vmem %s182, %s185
        %v187 = vld [vmem:[%s186] sm:$0xff]
        %v188 = vld [vmem:[%s186 + $0x8] sm:$0xff]
        %v189 = vld [vmem:[%s186 + $0x10] sm:$0x3]
        %v190 = vld [vmem:[%s186 + $0x18] sm:$0xff]
        %v191 = vld [vmem:[%s186 + $0x20] sm:$0xff]
        %v192 = vld [vmem:[%s186 + $0x28] sm:$0x3]
        %v193 = vld [vmem:[%s186 + $0x30] sm:$0xff]
        %v194 = vld [vmem:[%s186 + $0x38] sm:$0xff]
        %v195 = vld [vmem:[%s186 + $0x40] sm:$0x3]
        %v196 = vld [vmem:[%s186 + $0x48] sm:$0xff]
        %v197 = vld [vmem:[%s186 + $0x50] sm:$0xff]
        %v198 = vld [vmem:[%s186 + $0x58] sm:$0x3]
        %v199 = vld [vmem:[%s186 + $0x60] sm:$0xff]
        %v200 = vld [vmem:[%s186 + $0x68] sm:$0xff]
        %v201 = vld [vmem:[%s186 + $0x70] sm:$0x3]
        %v202 = vld [vmem:[%s186 + $0x78] sm:$0xff]
        %v203 = vld [vmem:[%s186 + $0x80] sm:$0xff]
        %v204 = vld [vmem:[%s186 + $0x88] sm:$0x3]
        %v205 = vld [vmem:[%s186 + $0x90] sm:$0xff]
        %v206 = vld [vmem:[%s186 + $0x98] sm:$0xff]
        %v207 = vld [vmem:[%s186 + $0xa0] sm:$0x3]
        %v208 = vld [vmem:[%s186 + $0xa8] sm:$0xff]
        %v209 = vld [vmem:[%s186 + $0xb0] sm:$0xff]
        %v210 = vld [vmem:[%s186 + $0xb8] sm:$0x3]
        %vm235 = vcmask 1046528
        %v236 = vrot.slane %v187, 1
        %v237 = vrot.slane %v188, 1
        %v238 = vsel %vm235, %v236, %v237
        %v239 = vrot.slane %v189, 1
        %v240 = vsel %vm235, %v237, %v239
        %v241 = vrot.slane %v190, 1
        %v242 = vrot.slane %v191, 1
        %v243 = vsel %vm235, %v241, %v242
        %v244 = vrot.slane %v192, 1
        %v245 = vsel %vm235, %v242, %v244
        %v246 = vrot.slane %v193, 1
        %v247 = vrot.slane %v194, 1
        %v248 = vsel %vm235, %v246, %v247
        %v249 = vrot.slane %v195, 1
        %v250 = vsel %vm235, %v247, %v249
        %v251 = vrot.slane %v196, 1
        %v252 = vrot.slane %v197, 1
        %v253 = vsel %vm235, %v251, %v252
        %v254 = vrot.slane %v198, 1
        %v255 = vsel %vm235, %v252, %v254
        %v256 = vrot.slane %v199, 1
        %v257 = vrot.slane %v200, 1
        %v258 = vsel %vm235, %v256, %v257
        %v259 = vrot.slane %v201, 1
        %v260 = vsel %vm235, %v257, %v259
        %v261 = vrot.slane %v202, 1
        %v262 = vrot.slane %v203, 1
        %v263 = vsel %vm235, %v261, %v262
        %v264 = vrot.slane %v204, 1
        %v265 = vsel %vm235, %v262, %v264
        %v266 = vrot.slane %v205, 1
        %v267 = vrot.slane %v206, 1
        %v268 = vsel %vm235, %v266, %v267
        %v269 = vrot.slane %v207, 1
        %v270 = vsel %vm235, %v267, %v269
        %v271 = vrot.slane %v208, 1
        %v272 = vrot.slane %v209, 1
        %v273 = vsel %vm235, %v271, %v272
        %v274 = vrot.slane %v210, 1
        %v275 = vsel %vm235, %v272, %v274
        %276 = vrot.lane.b32.xlu0 %v238, 8
        %v277 = vpop.permute.xlu0 %276
        %278 = vrot.lane.b32.xlu0 %v240, 8
        %v279 = vpop.permute.xlu0 %278
        %280 = vrot.lane.b32.xlu0 %v243, 8
        %v281 = vpop.permute.xlu0 %280
        %282 = vrot.lane.b32.xlu0 %v245, 8
        %v283 = vpop.permute.xlu0 %282
        %284 = vrot.lane.b32.xlu0 %v248, 8
        %v285 = vpop.permute.xlu0 %284
        %286 = vrot.lane.b32.xlu0 %v250, 8
        %v287 = vpop.permute.xlu0 %286
        %288 = vrot.lane.b32.xlu0 %v253, 8
        %v289 = vpop.permute.xlu0 %288
        %290 = vrot.lane.b32.xlu0 %v255, 8
        %v291 = vpop.permute.xlu0 %290
        %292 = vrot.lane.b32.xlu0 %v258, 8
        %v293 = vpop.permute.xlu0 %292
        %294 = vrot.lane.b32.xlu0 %v260, 8
        %v295 = vpop.permute.xlu0 %294
        %296 = vrot.lane.b32.xlu0 %v263, 8
        %v297 = vpop.permute.xlu0 %296
        %298 = vrot.lane.b32.xlu0 %v265, 8
        %v299 = vpop.permute.xlu0 %298
        %300 = vrot.lane.b32.xlu0 %v268, 8
        %v301 = vpop.permute.xlu0 %300
        %302 = vrot.lane.b32.xlu0 %v270, 8
        %v303 = vpop.permute.xlu0 %302
        %304 = vrot.lane.b32.xlu0 %v273, 8
        %v305 = vpop.permute.xlu0 %304
        %306 = vrot.lane.b32.xlu0 %v275, 8
        %v307 = vpop.permute.xlu0 %306
        %vm324 = vcmask 1045504
        %v325 = vrot.slane %v187, 2
        %v326 = vrot.slane %v188, 2
        %v327 = vsel %vm324, %v325, %v326
        %v328 = vrot.slane %v189, 2
        %v329 = vsel %vm324, %v326, %v328
        %v330 = vrot.slane %v190, 2
        %v331 = vrot.slane %v191, 2
        %v332 = vsel %vm324, %v330, %v331
        %v333 = vrot.slane %v192, 2
        %v334 = vsel %vm324, %v331, %v333
        %v335 = vrot.slane %v193, 2
        %v336 = vrot.slane %v194, 2
        %v337 = vsel %vm324, %v335, %v336
        %v338 = vrot.slane %v195, 2
        %v339 = vsel %vm324, %v336, %v338
        %v340 = vrot.slane %v196, 2
        %v341 = vrot.slane %v197, 2
        %v342 = vsel %vm324, %v340, %v341
        %v343 = vrot.slane %v198, 2
        %v344 = vsel %vm324, %v341, %v343
        %v345 = vrot.slane %v199, 2
        %v346 = vrot.slane %v200, 2
        %v347 = vsel %vm324, %v345, %v346
        %v348 = vrot.slane %v201, 2
        %v349 = vsel %vm324, %v346, %v348
        %v350 = vrot.slane %v202, 2
        %v351 = vrot.slane %v203, 2
        %v352 = vsel %vm324, %v350, %v351
        %v353 = vrot.slane %v204, 2
        %v354 = vsel %vm324, %v351, %v353
        %v355 = vrot.slane %v205, 2
        %v356 = vrot.slane %v206, 2
        %v357 = vsel %vm324, %v355, %v356
        %v358 = vrot.slane %v207, 2
        %v359 = vsel %vm324, %v356, %v358
        %v360 = vrot.slane %v208, 2
        %v361 = vrot.slane %v209, 2
        %v362 = vsel %vm324, %v360, %v361
        %v363 = vrot.slane %v210, 2
        %v364 = vsel %vm324, %v361, %v363
        %365 = vrot.lane.b32.xlu0 %v327, 16
        %v366 = vpop.permute.xlu0 %365
        %367 = vrot.lane.b32.xlu0 %v329, 16
        %v368 = vpop.permute.xlu0 %367
        %369 = vrot.lane.b32.xlu0 %v332, 16
        %v370 = vpop.permute.xlu0 %369
        %371 = vrot.lane.b32.xlu0 %v334, 16
        %v372 = vpop.permute.xlu0 %371
        %373 = vrot.lane.b32.xlu0 %v337, 16
        %v374 = vpop.permute.xlu0 %373
        %375 = vrot.lane.b32.xlu0 %v339, 16
        %v376 = vpop.permute.xlu0 %375
        %377 = vrot.lane.b32.xlu0 %v342, 16
        %v378 = vpop.permute.xlu0 %377
        %379 = vrot.lane.b32.xlu0 %v344, 16
        %v380 = vpop.permute.xlu0 %379
        %381 = vrot.lane.b32.xlu0 %v347, 16
        %v382 = vpop.permute.xlu0 %381
        %383 = vrot.lane.b32.xlu0 %v349, 16
        %v384 = vpop.permute.xlu0 %383
        %385 = vrot.lane.b32.xlu0 %v352, 16
        %v386 = vpop.permute.xlu0 %385
        %387 = vrot.lane.b32.xlu0 %v354, 16
        %v388 = vpop.permute.xlu0 %387
        %389 = vrot.lane.b32.xlu0 %v357, 16
        %v390 = vpop.permute.xlu0 %389
        %391 = vrot.lane.b32.xlu0 %v359, 16
        %v392 = vpop.permute.xlu0 %391
        %393 = vrot.lane.b32.xlu0 %v362, 16
        %v394 = vpop.permute.xlu0 %393
        %395 = vrot.lane.b32.xlu0 %v364, 16
        %v396 = vpop.permute.xlu0 %395
        %vm413 = vcmask 64512
        %v414 = vsel %vm413, %v187, %v277
        %v415 = vsel %vm413, %v188, %v279
        %v416 = vsel %vm413, %v190, %v281
        %v417 = vsel %vm413, %v191, %v283
        %v418 = vsel %vm413, %v193, %v285
        %v419 = vsel %vm413, %v194, %v287
        %v420 = vsel %vm413, %v196, %v289
        %v421 = vsel %vm413, %v197, %v291
        %v422 = vsel %vm413, %v199, %v293
        %v423 = vsel %vm413, %v200, %v295
        %v424 = vsel %vm413, %v202, %v297
        %v425 = vsel %vm413, %v203, %v299
        %v426 = vsel %vm413, %v205, %v301
        %v427 = vsel %vm413, %v206, %v303
        %v428 = vsel %vm413, %v208, %v305
        %v429 = vsel %vm413, %v209, %v307
        %vm430 = vcmask 130048
        %v431 = vsel %vm430, %v414, %v366
        %v432 = vsel %vm430, %v415, %v368
        %v433 = vsel %vm430, %v416, %v370
        %v434 = vsel %vm430, %v417, %v372
        %v435 = vsel %vm430, %v418, %v374
        %v436 = vsel %vm430, %v419, %v376
        %v437 = vsel %vm430, %v420, %v378
        %v438 = vsel %vm430, %v421, %v380
        %v439 = vsel %vm430, %v422, %v382
        %v440 = vsel %vm430, %v423, %v384
        %v441 = vsel %vm430, %v424, %v386
        %v442 = vsel %vm430, %v425, %v388
        %v443 = vsel %vm430, %v426, %v390
        %v444 = vsel %vm430, %v427, %v392
        %v445 = vsel %vm430, %v428, %v394
        %v446 = vsel %vm430, %v429, %v396
        %v447 = vld [vmem:[%s1] sm:$0xff]
        %v448 = vld [vmem:[%s1 + $0x8] sm:$0xff]
        %v449 = vld [vmem:[%s1 + $0x10] sm:$0xff]
        %s450 = sadd.s32 %s184, 1
        %s451 = smul.u32 %s450, 24
        %s452 = scalar_lea.vmem %s182, %s451
        %v453 = vld [vmem:[%s452] sm:$0xff]
        %v454 = vld [vmem:[%s452 + $0x8] sm:$0xff]
        %v455 = vld [vmem:[%s452 + $0x10] sm:$0x3]
        %v456 = vld [vmem:[%s452 + $0x18] sm:$0xff]
        %v457 = vld [vmem:[%s452 + $0x20] sm:$0xff]
        %v458 = vld [vmem:[%s452 + $0x28] sm:$0x3]
        %v459 = vld [vmem:[%s452 + $0x30] sm:$0xff]
        %v460 = vld [vmem:[%s452 + $0x38] sm:$0xff]
        %v461 = vld [vmem:[%s452 + $0x40] sm:$0x3]
        %v462 = vld [vmem:[%s452 + $0x48] sm:$0xff]
        %v463 = vld [vmem:[%s452 + $0x50] sm:$0xff]
        %v464 = vld [vmem:[%s452 + $0x58] sm:$0x3]
        %v465 = vld [vmem:[%s452 + $0x60] sm:$0xff]
        %v466 = vld [vmem:[%s452 + $0x68] sm:$0xff]
        %v467 = vld [vmem:[%s452 + $0x70] sm:$0x3]
        %v468 = vld [vmem:[%s452 + $0x78] sm:$0xff]
        %v469 = vld [vmem:[%s452 + $0x80] sm:$0xff]
        %v470 = vld [vmem:[%s452 + $0x88] sm:$0x3]
        %v471 = vld [vmem:[%s452 + $0x90] sm:$0xff]
        %v472 = vld [vmem:[%s452 + $0x98] sm:$0xff]
        %v473 = vld [vmem:[%s452 + $0xa0] sm:$0x3]
        %v474 = vld [vmem:[%s452 + $0xa8] sm:$0xff]
        %v475 = vld [vmem:[%s452 + $0xb0] sm:$0xff]
        %v476 = vld [vmem:[%s452 + $0xb8] sm:$0x3]
        %v501 = vrot.slane %v453, 1
        %v502 = vrot.slane %v454, 1
        %v503 = vsel %vm235, %v501, %v502
        %v504 = vrot.slane %v455, 1
        %v505 = vsel %vm235, %v502, %v504
        %v506 = vrot.slane %v456, 1
        %v507 = vrot.slane %v457, 1
        %v508 = vsel %vm235, %v506, %v507
        %v509 = vrot.slane %v458, 1
        %v510 = vsel %vm235, %v507, %v509
        %v511 = vrot.slane %v459, 1
        %v512 = vrot.slane %v460, 1
        %v513 = vsel %vm235, %v511, %v512
        %v514 = vrot.slane %v461, 1
        %v515 = vsel %vm235, %v512, %v514
        %v516 = vrot.slane %v462, 1
        %v517 = vrot.slane %v463, 1
        %v518 = vsel %vm235, %v516, %v517
        %v519 = vrot.slane %v464, 1
        %v520 = vsel %vm235, %v517, %v519
        %v521 = vrot.slane %v465, 1
        %v522 = vrot.slane %v466, 1
        %v523 = vsel %vm235, %v521, %v522
        %v524 = vrot.slane %v467, 1
        %v525 = vsel %vm235, %v522, %v524
        %v526 = vrot.slane %v468, 1
        %v527 = vrot.slane %v469, 1
        %v528 = vsel %vm235, %v526, %v527
        %v529 = vrot.slane %v470, 1
        %v530 = vsel %vm235, %v527, %v529
        %v531 = vrot.slane %v471, 1
        %v532 = vrot.slane %v472, 1
        %v533 = vsel %vm235, %v531, %v532
        %v534 = vrot.slane %v473, 1
        %v535 = vsel %vm235, %v532, %v534
        %v536 = vrot.slane %v474, 1
        %v537 = vrot.slane %v475, 1
        %v538 = vsel %vm235, %v536, %v537
        %v539 = vrot.slane %v476, 1
        %v540 = vsel %vm235, %v537, %v539
        %541 = vrot.lane.b32.xlu0 %v503, 8
        %v542 = vpop.permute.xlu0 %541
        %543 = vrot.lane.b32.xlu0 %v505, 8
        %v544 = vpop.permute.xlu0 %543
        %545 = vrot.lane.b32.xlu0 %v508, 8
        %v546 = vpop.permute.xlu0 %545
        %547 = vrot.lane.b32.xlu0 %v510, 8
        %v548 = vpop.permute.xlu0 %547
        %549 = vrot.lane.b32.xlu0 %v513, 8
        %v550 = vpop.permute.xlu0 %549
        %551 = vrot.lane.b32.xlu0 %v515, 8
        %v552 = vpop.permute.xlu0 %551
        %553 = vrot.lane.b32.xlu0 %v518, 8
        %v554 = vpop.permute.xlu0 %553
        %555 = vrot.lane.b32.xlu0 %v520, 8
        %v556 = vpop.permute.xlu0 %555
        %557 = vrot.lane.b32.xlu0 %v523, 8
        %v558 = vpop.permute.xlu0 %557
        %559 = vrot.lane.b32.xlu0 %v525, 8
        %v560 = vpop.permute.xlu0 %559
        %561 = vrot.lane.b32.xlu0 %v528, 8
        %v562 = vpop.permute.xlu0 %561
        %563 = vrot.lane.b32.xlu0 %v530, 8
        %v564 = vpop.permute.xlu0 %563
        %565 = vrot.lane.b32.xlu0 %v533, 8
        %v566 = vpop.permute.xlu0 %565
        %567 = vrot.lane.b32.xlu0 %v535, 8
        %v568 = vpop.permute.xlu0 %567
        %569 = vrot.lane.b32.xlu0 %v538, 8
        %v570 = vpop.permute.xlu0 %569
        %571 = vrot.lane.b32.xlu0 %v540, 8
        %v572 = vpop.permute.xlu0 %571
        %v589 = vrot.slane %v453, 2
        %v590 = vrot.slane %v454, 2
        %v591 = vsel %vm324, %v589, %v590
        %v592 = vrot.slane %v455, 2
        %v593 = vsel %vm324, %v590, %v592
        %v594 = vrot.slane %v456, 2
        %v595 = vrot.slane %v457, 2
        %v596 = vsel %vm324, %v594, %v595
        %v597 = vrot.slane %v458, 2
        %v598 = vsel %vm324, %v595, %v597
        %v599 = vrot.slane %v459, 2
        %v600 = vrot.slane %v460, 2
        %v601 = vsel %vm324, %v599, %v600
        %v602 = vrot.slane %v461, 2
        %v603 = vsel %vm324, %v600, %v602
        %v604 = vrot.slane %v462, 2
        %v605 = vrot.slane %v463, 2
        %v606 = vsel %vm324, %v604, %v605
        %v607 = vrot.slane %v464, 2
        %v608 = vsel %vm324, %v605, %v607
        %v609 = vrot.slane %v465, 2
        %v610 = vrot.slane %v466, 2
        %v611 = vsel %vm324, %v609, %v610
        %v612 = vrot.slane %v467, 2
        %v613 = vsel %vm324, %v610, %v612
        %v614 = vrot.slane %v468, 2
        %v615 = vrot.slane %v469, 2
        %v616 = vsel %vm324, %v614, %v615
        %v617 = vrot.slane %v470, 2
        %v618 = vsel %vm324, %v615, %v617
        %v619 = vrot.slane %v471, 2
        %v620 = vrot.slane %v472, 2
        %v621 = vsel %vm324, %v619, %v620
        %v622 = vrot.slane %v473, 2
        %v623 = vsel %vm324, %v620, %v622
        %v624 = vrot.slane %v474, 2
        %v625 = vrot.slane %v475, 2
        %v626 = vsel %vm324, %v624, %v625
        %v627 = vrot.slane %v476, 2
        %v628 = vsel %vm324, %v625, %v627
        %629 = vrot.lane.b32.xlu0 %v591, 16
        %v630 = vpop.permute.xlu0 %629
        %631 = vrot.lane.b32.xlu0 %v593, 16
        %v632 = vpop.permute.xlu0 %631
        %633 = vrot.lane.b32.xlu0 %v596, 16
        %v634 = vpop.permute.xlu0 %633
        %635 = vrot.lane.b32.xlu0 %v598, 16
        %v636 = vpop.permute.xlu0 %635
        %637 = vrot.lane.b32.xlu0 %v601, 16
        %v638 = vpop.permute.xlu0 %637
        %639 = vrot.lane.b32.xlu0 %v603, 16
        %v640 = vpop.permute.xlu0 %639
        %641 = vrot.lane.b32.xlu0 %v606, 16
        %v642 = vpop.permute.xlu0 %641
        %643 = vrot.lane.b32.xlu0 %v608, 16
        %v644 = vpop.permute.xlu0 %643
        %645 = vrot.lane.b32.xlu0 %v611, 16
        %v646 = vpop.permute.xlu0 %645
        %647 = vrot.lane.b32.xlu0 %v613, 16
        %v648 = vpop.permute.xlu0 %647
        %649 = vrot.lane.b32.xlu0 %v616, 16
        %v650 = vpop.permute.xlu0 %649
        %651 = vrot.lane.b32.xlu0 %v618, 16
        %v652 = vpop.permute.xlu0 %651
        %653 = vrot.lane.b32.xlu0 %v621, 16
        %v654 = vpop.permute.xlu0 %653
        %655 = vrot.lane.b32.xlu0 %v623, 16
        %v656 = vpop.permute.xlu0 %655
        %657 = vrot.lane.b32.xlu0 %v626, 16
        %v658 = vpop.permute.xlu0 %657
        %659 = vrot.lane.b32.xlu0 %v628, 16
        %v660 = vpop.permute.xlu0 %659
        %v677 = vsel %vm413, %v453, %v542
        %v678 = vsel %vm413, %v454, %v544
        %v679 = vsel %vm413, %v456, %v546
        %v680 = vsel %vm413, %v457, %v548
        %v681 = vsel %vm413, %v459, %v550
        %v682 = vsel %vm413, %v460, %v552
        %v683 = vsel %vm413, %v462, %v554
        %v684 = vsel %vm413, %v463, %v556
        %v685 = vsel %vm413, %v465, %v558
        %v686 = vsel %vm413, %v466, %v560
        %v687 = vsel %vm413, %v468, %v562
        %v688 = vsel %vm413, %v469, %v564
        %v689 = vsel %vm413, %v471, %v566
        %v690 = vsel %vm413, %v472, %v568
        %v691 = vsel %vm413, %v474, %v570
        %v692 = vsel %vm413, %v475, %v572
        %v693 = vsel %vm430, %v677, %v630
        %v694 = vsel %vm430, %v678, %v632
        %v695 = vsel %vm430, %v679, %v634
        %v696 = vsel %vm430, %v680, %v636
        %v697 = vsel %vm430, %v681, %v638
        %v698 = vsel %vm430, %v682, %v640
        %v699 = vsel %vm430, %v683, %v642
        %v700 = vsel %vm430, %v684, %v644
        %v701 = vsel %vm430, %v685, %v646
        %v702 = vsel %vm430, %v686, %v648
        %v703 = vsel %vm430, %v687, %v650
        %v704 = vsel %vm430, %v688, %v652
        %v705 = vsel %vm430, %v689, %v654
        %v706 = vsel %vm430, %v690, %v656
        %v707 = vsel %vm430, %v691, %v658
        %v708 = vsel %vm430, %v692, %v660
        %s709 = scalar_lea.vmem %s1, 24
        %v710 = vld [vmem:[%s709] sm:$0xff]
        %v711 = vld [vmem:[%s709 + $0x8] sm:$0xff]
        %v712 = vld [vmem:[%s709 + $0x10] sm:$0xff]
        %vm713 = vcmask 195584
        %v715 = vsel %vm713, %v693, 0
        %v718 = vsel %vm713, %v694, 0
        %v721 = vsel %vm713, %v695, 0
        %v724 = vsel %vm713, %v696, 0
        %v727 = vsel %vm713, %v697, 0
        %v730 = vsel %vm713, %v698, 0
        %v733 = vsel %vm713, %v699, 0
        %v736 = vsel %vm713, %v700, 0
        %v739 = vsel %vm713, %v701, 0
        %v742 = vsel %vm713, %v702, 0
        %v745 = vsel %vm713, %v703, 0
        %v748 = vsel %vm713, %v704, 0
        %v751 = vsel %vm713, %v705, 0
        %v754 = vsel %vm713, %v706, 0
        %v757 = vsel %vm713, %v707, 0
        %v760 = vsel %vm713, %v708, 0
        %762 = vmatprep.subr.mxu0 0.0
        %763 = vmatpush1.msra.mxu0 0.0
        %764 = vmatprep.subr.mxu0 0.0
        %765 = vmatpush1.msra.mxu0 0.0
        %766 = vmatprep.subr.mxu0 0.0
        %767 = vmatpush1.msra.mxu0 0.0
        %768 = vmatprep.subr.mxu0 0.0
        %769 = vmatpush1.msra.mxu0 0.0
        %770 = vmatprep.subr.mxu0 0.0
        %771 = vmatpush1.msra.mxu0 0.0
        %772 = vmatprep.subr.mxu0 0.0
        %773 = vmatpush1.msra.mxu0 0.0
        %774 = vmatprep.subr.mxu0 0.0
        %775 = vmatpush1.msra.mxu0 0.0
        %776 = vmatprep.subr.mxu0 0.0
        %777 = vmatpush1.msra.mxu0 0.0
        %778 = vmatprep.subr.mxu0 0.0
        %779 = vmatpush1.msra.mxu0 0.0
        %780 = vmatprep.subr.mxu0 0.0
        %781 = vmatpush1.msra.mxu0 0.0
        %782 = vmatprep.subr.mxu0 0.0
        %783 = vmatpush1.msra.mxu0 0.0
        %784 = vmatprep.subr.mxu0 0.0
        %785 = vmatpush1.msra.mxu0 0.0
        %786 = vmatprep.subr.mxu0 0.0
        %787 = vmatpush1.msra.mxu0 0.0
        %788 = vmatprep.subr.mxu0 0.0
        %v789 = vand.u32 %v712, 4294901760
        %790 = vmatpush1.msra.mxu0 %v789
        %791 = vmatprep.subr.mxu0 0.0
        %v792 = vand.u32 %v711, 4294901760
        %793 = vmatpush1.msra.mxu0 %v792
        %794 = vmatprep.subr.mxu0 0.0
        %v795 = vand.u32 %v710, 4294901760
        %796 = vmatpush1.msra.mxu0 %v795
        %797 = vmatprep.subr.mxu0 0.0
        %798 = vmatpush2.msra.mxu0 0.0
        %799 = vmatprep.subr.mxu0 0.0
        %800 = vmatpush2.msra.mxu0 0.0
        %801 = vmatprep.subr.mxu0 0.0
        %802 = vmatpush2.msra.mxu0 0.0
        %803 = vmatprep.subr.mxu0 0.0
        %804 = vmatpush2.msra.mxu0 0.0
        %805 = vmatprep.subr.mxu0 0.0
        %806 = vmatpush2.msra.mxu0 0.0
        %807 = vmatprep.subr.mxu0 0.0
        %808 = vmatpush2.msra.mxu0 0.0
        %809 = vmatprep.subr.mxu0 0.0
        %810 = vmatpush2.msra.mxu0 0.0
        %811 = vmatprep.subr.mxu0 0.0
        %812 = vmatpush2.msra.mxu0 0.0
        %813 = vmatprep.subr.mxu0 0.0
        %814 = vmatpush2.msra.mxu0 0.0
        %815 = vmatprep.subr.mxu0 0.0
        %816 = vmatpush2.msra.mxu0 0.0
        %817 = vmatprep.subr.mxu0 0.0
        %818 = vmatpush2.msra.mxu0 0.0
        %819 = vmatprep.subr.mxu0 0.0
        %820 = vmatpush2.msra.mxu0 0.0
        %821 = vmatprep.subr.mxu0 0.0
        %822 = vmatpush2.msra.mxu0 0.0
        %823 = vmatprep.subr.mxu0 0.0
        %824 = vmatpush2.msra.mxu0 0.0
        %825 = vmatprep.subr.mxu0 0.0
        %826 = vmatpush2.msra.mxu0 0.0
        %827 = vmatprep.subr.mxu0 0.0
        %828 = vmatpush2.msra.mxu0 0.0
        %829 = vmatprep.mubr.f32.mxu0 0.0
        %v830 = vand.u32 %v715, 4294901760
        %v831 = vsub.f32 %v715, %v830
        %v832 = vand.u32 %v831, 4294901760
        %v833 = vsub.f32 %v831, %v832
        %v834 = vand.u32 %v833, 4294901760
        %835 = vmatmul.mubr.f32.gmra.mxu0 %v834
        %v836 = vpop.f32.mrf.mxu0
        %v837 = vadd.f32 0.0, %v836
        %v838 = vpop.f32.mrf.mxu0
        %839 = vmatprep.mubr.f32.mxu0 0.0
        %v840 = vand.u32 %v718, 4294901760
        %v841 = vsub.f32 %v718, %v840
        %v842 = vand.u32 %v841, 4294901760
        %v843 = vsub.f32 %v841, %v842
        %v844 = vand.u32 %v843, 4294901760
        %845 = vmatmul.mubr.f32.gmra.mxu0 %v844
        %v846 = vpop.f32.mrf.mxu0
        %v847 = vadd.f32 0.0, %v846
        %v848 = vpop.f32.mrf.mxu0
        %849 = vmatprep.mubr.f32.mxu0 0.0
        %v850 = vand.u32 %v721, 4294901760
        %v851 = vsub.f32 %v721, %v850
        %v852 = vand.u32 %v851, 4294901760
        %v853 = vsub.f32 %v851, %v852
        %v854 = vand.u32 %v853, 4294901760
        %855 = vmatmul.mubr.f32.gmra.mxu0 %v854
        %v856 = vpop.f32.mrf.mxu0
        %v857 = vadd.f32 0.0, %v856
        %v858 = vpop.f32.mrf.mxu0
        %859 = vmatprep.mubr.f32.mxu0 0.0
        %v860 = vand.u32 %v724, 4294901760
        %v861 = vsub.f32 %v724, %v860
        %v862 = vand.u32 %v861, 4294901760
        %v863 = vsub.f32 %v861, %v862
        %v864 = vand.u32 %v863, 4294901760
        %865 = vmatmul.mubr.f32.gmra.mxu0 %v864
        %v866 = vpop.f32.mrf.mxu0
        %v867 = vadd.f32 0.0, %v866
        %v868 = vpop.f32.mrf.mxu0
        %869 = vmatprep.mubr.f32.mxu0 0.0
        %v870 = vand.u32 %v727, 4294901760
        %v871 = vsub.f32 %v727, %v870
        %v872 = vand.u32 %v871, 4294901760
        %v873 = vsub.f32 %v871, %v872
        %v874 = vand.u32 %v873, 4294901760
        %875 = vmatmul.mubr.f32.gmra.mxu0 %v874
        %v876 = vpop.f32.mrf.mxu0
        %v877 = vadd.f32 0.0, %v876
        %v878 = vpop.f32.mrf.mxu0
        %879 = vmatprep.mubr.f32.mxu0 0.0
        %v880 = vand.u32 %v730, 4294901760
        %v881 = vsub.f32 %v730, %v880
        %v882 = vand.u32 %v881, 4294901760
        %v883 = vsub.f32 %v881, %v882
        %v884 = vand.u32 %v883, 4294901760
        %885 = vmatmul.mubr.f32.gmra.mxu0 %v884
        %v886 = vpop.f32.mrf.mxu0
        %v887 = vadd.f32 0.0, %v886
        %v888 = vpop.f32.mrf.mxu0
        %889 = vmatprep.mubr.f32.mxu0 0.0
        %v890 = vand.u32 %v733, 4294901760
        %v891 = vsub.f32 %v733, %v890
        %v892 = vand.u32 %v891, 4294901760
        %v893 = vsub.f32 %v891, %v892
        %v894 = vand.u32 %v893, 4294901760
        %895 = vmatmul.mubr.f32.gmra.mxu0 %v894
        %v896 = vpop.f32.mrf.mxu0
        %v897 = vadd.f32 0.0, %v896
        %v898 = vpop.f32.mrf.mxu0
        %899 = vmatprep.mubr.f32.mxu0 0.0
        %v900 = vand.u32 %v736, 4294901760
        %v901 = vsub.f32 %v736, %v900
        %v902 = vand.u32 %v901, 4294901760
        %v903 = vsub.f32 %v901, %v902
        %v904 = vand.u32 %v903, 4294901760
        %905 = vmatmul.mubr.f32.gmra.mxu0 %v904
        %v906 = vpop.f32.mrf.mxu0
        %v907 = vadd.f32 0.0, %v906
        %v908 = vpop.f32.mrf.mxu0
        %909 = vmatprep.mubr.f32.mxu0 0.0
        %v910 = vand.u32 %v739, 4294901760
        %v911 = vsub.f32 %v739, %v910
        %v912 = vand.u32 %v911, 4294901760
        %v913 = vsub.f32 %v911, %v912
        %v914 = vand.u32 %v913, 4294901760
        %915 = vmatmul.mubr.f32.gmra.mxu0 %v914
        %v916 = vpop.f32.mrf.mxu0
        %v917 = vadd.f32 0.0, %v916
        %v918 = vpop.f32.mrf.mxu0
        %919 = vmatprep.mubr.f32.mxu0 0.0
        %v920 = vand.u32 %v742, 4294901760
        %v921 = vsub.f32 %v742, %v920
        %v922 = vand.u32 %v921, 4294901760
        %v923 = vsub.f32 %v921, %v922
        %v924 = vand.u32 %v923, 4294901760
        %925 = vmatmul.mubr.f32.gmra.mxu0 %v924
        %v926 = vpop.f32.mrf.mxu0
        %v927 = vadd.f32 0.0, %v926
        %v928 = vpop.f32.mrf.mxu0
        %929 = vmatprep.mubr.f32.mxu0 0.0
        %v930 = vand.u32 %v745, 4294901760
        %v931 = vsub.f32 %v745, %v930
        %v932 = vand.u32 %v931, 4294901760
        %v933 = vsub.f32 %v931, %v932
        %v934 = vand.u32 %v933, 4294901760
        %935 = vmatmul.mubr.f32.gmra.mxu0 %v934
        %v936 = vpop.f32.mrf.mxu0
        %v937 = vadd.f32 0.0, %v936
        %v938 = vpop.f32.mrf.mxu0
        %939 = vmatprep.mubr.f32.mxu0 0.0
        %v940 = vand.u32 %v748, 4294901760
        %v941 = vsub.f32 %v748, %v940
        %v942 = vand.u32 %v941, 4294901760
        %v943 = vsub.f32 %v941, %v942
        %v944 = vand.u32 %v943, 4294901760
        %945 = vmatmul.mubr.f32.gmra.mxu0 %v944
        %v946 = vpop.f32.mrf.mxu0
        %v947 = vadd.f32 0.0, %v946
        %v948 = vpop.f32.mrf.mxu0
        %949 = vmatprep.mubr.f32.mxu0 0.0
        %v950 = vand.u32 %v751, 4294901760
        %v951 = vsub.f32 %v751, %v950
        %v952 = vand.u32 %v951, 4294901760
        %v953 = vsub.f32 %v951, %v952
        %v954 = vand.u32 %v953, 4294901760
        %955 = vmatmul.mubr.f32.gmra.mxu0 %v954
        %v956 = vpop.f32.mrf.mxu0
        %v957 = vadd.f32 0.0, %v956
        %v958 = vpop.f32.mrf.mxu0
        %959 = vmatprep.mubr.f32.mxu0 0.0
        %v960 = vand.u32 %v754, 4294901760
        %v961 = vsub.f32 %v754, %v960
        %v962 = vand.u32 %v961, 4294901760
        %v963 = vsub.f32 %v961, %v962
        %v964 = vand.u32 %v963, 4294901760
        %965 = vmatmul.mubr.f32.gmra.mxu0 %v964
        %v966 = vpop.f32.mrf.mxu0
        %v967 = vadd.f32 0.0, %v966
        %v968 = vpop.f32.mrf.mxu0
        %969 = vmatprep.mubr.f32.mxu0 0.0
        %v970 = vand.u32 %v757, 4294901760
        %v971 = vsub.f32 %v757, %v970
        %v972 = vand.u32 %v971, 4294901760
        %v973 = vsub.f32 %v971, %v972
        %v974 = vand.u32 %v973, 4294901760
        %975 = vmatmul.mubr.f32.gmra.mxu0 %v974
        %v976 = vpop.f32.mrf.mxu0
        %v977 = vadd.f32 0.0, %v976
        %v978 = vpop.f32.mrf.mxu0
        %979 = vmatprep.mubr.f32.mxu0 0.0
        %v980 = vand.u32 %v760, 4294901760
        %v981 = vsub.f32 %v760, %v980
        %v982 = vand.u32 %v981, 4294901760
        %v983 = vsub.f32 %v981, %v982
        %v984 = vand.u32 %v983, 4294901760
        %985 = vmatmul.mubr.f32.gmra.mxu0 %v984
        %v986 = vpop.f32.mrf.mxu0
        %v987 = vadd.f32 0.0, %v986
        %v988 = vpop.f32.mrf.mxu0
        %989 = vdwg.mxu0
        %990 = vmatprep.subr.mxu0 0.0
        %991 = vmatpush1.msra.mxu0 0.0
        %992 = vmatprep.subr.mxu0 0.0
        %993 = vmatpush1.msra.mxu0 0.0
        %994 = vmatprep.subr.mxu0 0.0
        %995 = vmatpush1.msra.mxu0 0.0
        %996 = vmatprep.subr.mxu0 0.0
        %997 = vmatpush1.msra.mxu0 0.0
        %998 = vmatprep.subr.mxu0 0.0
        %999 = vmatpush1.msra.mxu0 0.0
        %1000 = vmatprep.subr.mxu0 0.0
        %1001 = vmatpush1.msra.mxu0 0.0
        %1002 = vmatprep.subr.mxu0 0.0
        %1003 = vmatpush1.msra.mxu0 0.0
        %1004 = vmatprep.subr.mxu0 0.0
        %1005 = vmatpush1.msra.mxu0 0.0
        %1006 = vmatprep.subr.mxu0 0.0
        %1007 = vmatpush1.msra.mxu0 0.0
        %1008 = vmatprep.subr.mxu0 0.0
        %1009 = vmatpush1.msra.mxu0 0.0
        %1010 = vmatprep.subr.mxu0 0.0
        %1011 = vmatpush1.msra.mxu0 0.0
        %1012 = vmatprep.subr.mxu0 0.0
        %1013 = vmatpush1.msra.mxu0 0.0
        %1014 = vmatprep.subr.mxu0 0.0
        %1015 = vmatpush1.msra.mxu0 0.0
        %1016 = vmatprep.subr.mxu0 0.0
        %v1017 = vand.u32 %v712, 4294901760
        %v1018 = vsub.f32 %v712, %v1017
        %v1019 = vand.u32 %v1018, 4294901760
        %v1020 = vsub.f32 %v1018, %v1019
        %v1021 = vand.u32 %v1020, 4294901760
        %1022 = vmatpush1.msra.mxu0 %v1021
        %1023 = vmatprep.subr.mxu0 0.0
        %v1024 = vand.u32 %v711, 4294901760
        %v1025 = vsub.f32 %v711, %v1024
        %v1026 = vand.u32 %v1025, 4294901760
        %v1027 = vsub.f32 %v1025, %v1026
        %v1028 = vand.u32 %v1027, 4294901760
        %1029 = vmatpush1.msra.mxu0 %v1028
        %1030 = vmatprep.subr.mxu0 0.0
        %v1031 = vand.u32 %v710, 4294901760
        %v1032 = vsub.f32 %v710, %v1031
        %v1033 = vand.u32 %v1032, 4294901760
        %v1034 = vsub.f32 %v1032, %v1033
        %v1035 = vand.u32 %v1034, 4294901760
        %1036 = vmatpush1.msra.mxu0 %v1035
        %1037 = vmatprep.subr.mxu0 0.0
        %1038 = vmatpush2.msra.mxu0 0.0
        %1039 = vmatprep.subr.mxu0 0.0
        %1040 = vmatpush2.msra.mxu0 0.0
        %1041 = vmatprep.subr.mxu0 0.0
        %1042 = vmatpush2.msra.mxu0 0.0
        %1043 = vmatprep.subr.mxu0 0.0
        %1044 = vmatpush2.msra.mxu0 0.0
        %1045 = vmatprep.subr.mxu0 0.0
        %1046 = vmatpush2.msra.mxu0 0.0
        %1047 = vmatprep.subr.mxu0 0.0
        %1048 = vmatpush2.msra.mxu0 0.0
        %1049 = vmatprep.subr.mxu0 0.0
        %1050 = vmatpush2.msra.mxu0 0.0
        %1051 = vmatprep.subr.mxu0 0.0
        %1052 = vmatpush2.msra.mxu0 0.0
        %1053 = vmatprep.subr.mxu0 0.0
        %1054 = vmatpush2.msra.mxu0 0.0
        %1055 = vmatprep.subr.mxu0 0.0
        %1056 = vmatpush2.msra.mxu0 0.0
        %1057 = vmatprep.subr.mxu0 0.0
        %1058 = vmatpush2.msra.mxu0 0.0
        %1059 = vmatprep.subr.mxu0 0.0
        %1060 = vmatpush2.msra.mxu0 0.0
        %1061 = vmatprep.subr.mxu0 0.0
        %1062 = vmatpush2.msra.mxu0 0.0
        %1063 = vmatprep.subr.mxu0 0.0
        %1064 = vmatpush2.msra.mxu0 0.0
        %1065 = vmatprep.subr.mxu0 0.0
        %1066 = vmatpush2.msra.mxu0 0.0
        %1067 = vmatprep.subr.mxu0 0.0
        %1068 = vmatpush2.msra.mxu0 0.0
        %1069 = vmatprep.mubr.f32.mxu0 0.0
        %v1070 = vand.u32 %v715, 4294901760
        %1071 = vmatmul.mubr.f32.gmra.mxu0 %v1070
        %v1072 = vpop.f32.mrf.mxu0
        %v1073 = vadd.f32 %v837, %v1072
        %v1074 = vpop.f32.mrf.mxu0
        %1075 = vmatprep.mubr.f32.mxu0 0.0
        %v1076 = vand.u32 %v718, 4294901760
        %1077 = vmatmul.mubr.f32.gmra.mxu0 %v1076
        %v1078 = vpop.f32.mrf.mxu0
        %v1079 = vadd.f32 %v847, %v1078
        %v1080 = vpop.f32.mrf.mxu0
        %1081 = vmatprep.mubr.f32.mxu0 0.0
        %v1082 = vand.u32 %v721, 4294901760
        %1083 = vmatmul.mubr.f32.gmra.mxu0 %v1082
        %v1084 = vpop.f32.mrf.mxu0
        %v1085 = vadd.f32 %v857, %v1084
        %v1086 = vpop.f32.mrf.mxu0
        %1087 = vmatprep.mubr.f32.mxu0 0.0
        %v1088 = vand.u32 %v724, 4294901760
        %1089 = vmatmul.mubr.f32.gmra.mxu0 %v1088
        %v1090 = vpop.f32.mrf.mxu0
        %v1091 = vadd.f32 %v867, %v1090
        %v1092 = vpop.f32.mrf.mxu0
        %1093 = vmatprep.mubr.f32.mxu0 0.0
        %v1094 = vand.u32 %v727, 4294901760
        %1095 = vmatmul.mubr.f32.gmra.mxu0 %v1094
        %v1096 = vpop.f32.mrf.mxu0
        %v1097 = vadd.f32 %v877, %v1096
        %v1098 = vpop.f32.mrf.mxu0
        %1099 = vmatprep.mubr.f32.mxu0 0.0
        %v1100 = vand.u32 %v730, 4294901760
        %1101 = vmatmul.mubr.f32.gmra.mxu0 %v1100
        %v1102 = vpop.f32.mrf.mxu0
        %v1103 = vadd.f32 %v887, %v1102
        %v1104 = vpop.f32.mrf.mxu0
        %1105 = vmatprep.mubr.f32.mxu0 0.0
        %v1106 = vand.u32 %v733, 4294901760
        %1107 = vmatmul.mubr.f32.gmra.mxu0 %v1106
        %v1108 = vpop.f32.mrf.mxu0
        %v1109 = vadd.f32 %v897, %v1108
        %v1110 = vpop.f32.mrf.mxu0
        %1111 = vmatprep.mubr.f32.mxu0 0.0
        %v1112 = vand.u32 %v736, 4294901760
        %1113 = vmatmul.mubr.f32.gmra.mxu0 %v1112
        %v1114 = vpop.f32.mrf.mxu0
        %v1115 = vadd.f32 %v907, %v1114
        %v1116 = vpop.f32.mrf.mxu0
        %1117 = vmatprep.mubr.f32.mxu0 0.0
        %v1118 = vand.u32 %v739, 4294901760
        %1119 = vmatmul.mubr.f32.gmra.mxu0 %v1118
        %v1120 = vpop.f32.mrf.mxu0
        %v1121 = vadd.f32 %v917, %v1120
        %v1122 = vpop.f32.mrf.mxu0
        %1123 = vmatprep.mubr.f32.mxu0 0.0
        %v1124 = vand.u32 %v742, 4294901760
        %1125 = vmatmul.mubr.f32.gmra.mxu0 %v1124
        %v1126 = vpop.f32.mrf.mxu0
        %v1127 = vadd.f32 %v927, %v1126
        %v1128 = vpop.f32.mrf.mxu0
        %1129 = vmatprep.mubr.f32.mxu0 0.0
        %v1130 = vand.u32 %v745, 4294901760
        %1131 = vmatmul.mubr.f32.gmra.mxu0 %v1130
        %v1132 = vpop.f32.mrf.mxu0
        %v1133 = vadd.f32 %v937, %v1132
        %v1134 = vpop.f32.mrf.mxu0
        %1135 = vmatprep.mubr.f32.mxu0 0.0
        %v1136 = vand.u32 %v748, 4294901760
        %1137 = vmatmul.mubr.f32.gmra.mxu0 %v1136
        %v1138 = vpop.f32.mrf.mxu0
        %v1139 = vadd.f32 %v947, %v1138
        %v1140 = vpop.f32.mrf.mxu0
        %1141 = vmatprep.mubr.f32.mxu0 0.0
        %v1142 = vand.u32 %v751, 4294901760
        %1143 = vmatmul.mubr.f32.gmra.mxu0 %v1142
        %v1144 = vpop.f32.mrf.mxu0
        %v1145 = vadd.f32 %v957, %v1144
        %v1146 = vpop.f32.mrf.mxu0
        %1147 = vmatprep.mubr.f32.mxu0 0.0
        %v1148 = vand.u32 %v754, 4294901760
        %1149 = vmatmul.mubr.f32.gmra.mxu0 %v1148
        %v1150 = vpop.f32.mrf.mxu0
        %v1151 = vadd.f32 %v967, %v1150
        %v1152 = vpop.f32.mrf.mxu0
        %1153 = vmatprep.mubr.f32.mxu0 0.0
        %v1154 = vand.u32 %v757, 4294901760
        %1155 = vmatmul.mubr.f32.gmra.mxu0 %v1154
        %v1156 = vpop.f32.mrf.mxu0
        %v1157 = vadd.f32 %v977, %v1156
        %v1158 = vpop.f32.mrf.mxu0
        %1159 = vmatprep.mubr.f32.mxu0 0.0
        %v1160 = vand.u32 %v760, 4294901760
        %1161 = vmatmul.mubr.f32.gmra.mxu0 %v1160
        %v1162 = vpop.f32.mrf.mxu0
        %v1163 = vadd.f32 %v987, %v1162
        %v1164 = vpop.f32.mrf.mxu0
        %1165 = vdwg.mxu0
        %1166 = vmatprep.subr.mxu0 0.0
        %1167 = vmatpush1.msra.mxu0 0.0
        %1168 = vmatprep.subr.mxu0 0.0
        %1169 = vmatpush1.msra.mxu0 0.0
        %1170 = vmatprep.subr.mxu0 0.0
        %1171 = vmatpush1.msra.mxu0 0.0
        %1172 = vmatprep.subr.mxu0 0.0
        %1173 = vmatpush1.msra.mxu0 0.0
        %1174 = vmatprep.subr.mxu0 0.0
        %1175 = vmatpush1.msra.mxu0 0.0
        %1176 = vmatprep.subr.mxu0 0.0
        %1177 = vmatpush1.msra.mxu0 0.0
        %1178 = vmatprep.subr.mxu0 0.0
        %1179 = vmatpush1.msra.mxu0 0.0
        %1180 = vmatprep.subr.mxu0 0.0
        %1181 = vmatpush1.msra.mxu0 0.0
        %1182 = vmatprep.subr.mxu0 0.0
        %1183 = vmatpush1.msra.mxu0 0.0
        %1184 = vmatprep.subr.mxu0 0.0
        %1185 = vmatpush1.msra.mxu0 0.0
        %1186 = vmatprep.subr.mxu0 0.0
        %1187 = vmatpush1.msra.mxu0 0.0
        %1188 = vmatprep.subr.mxu0 0.0
        %1189 = vmatpush1.msra.mxu0 0.0
        %1190 = vmatprep.subr.mxu0 0.0
        %1191 = vmatpush1.msra.mxu0 0.0
        %1192 = vmatprep.subr.mxu0 0.0
        %v1193 = vand.u32 %v712, 4294901760
        %v1194 = vsub.f32 %v712, %v1193
        %1195 = vmatpush1.msra.mxu0 %v1194
        %1196 = vmatprep.subr.mxu0 0.0
        %v1197 = vand.u32 %v711, 4294901760
        %v1198 = vsub.f32 %v711, %v1197
        %1199 = vmatpush1.msra.mxu0 %v1198
        %1200 = vmatprep.subr.mxu0 0.0
        %v1201 = vand.u32 %v710, 4294901760
        %v1202 = vsub.f32 %v710, %v1201
        %1203 = vmatpush1.msra.mxu0 %v1202
        %1204 = vmatprep.subr.mxu0 0.0
        %1205 = vmatpush2.msra.mxu0 0.0
        %1206 = vmatprep.subr.mxu0 0.0
        %1207 = vmatpush2.msra.mxu0 0.0
        %1208 = vmatprep.subr.mxu0 0.0
        %1209 = vmatpush2.msra.mxu0 0.0
        %1210 = vmatprep.subr.mxu0 0.0
        %1211 = vmatpush2.msra.mxu0 0.0
        %1212 = vmatprep.subr.mxu0 0.0
        %1213 = vmatpush2.msra.mxu0 0.0
        %1214 = vmatprep.subr.mxu0 0.0
        %1215 = vmatpush2.msra.mxu0 0.0
        %1216 = vmatprep.subr.mxu0 0.0
        %1217 = vmatpush2.msra.mxu0 0.0
        %1218 = vmatprep.subr.mxu0 0.0
        %1219 = vmatpush2.msra.mxu0 0.0
        %1220 = vmatprep.subr.mxu0 0.0
        %1221 = vmatpush2.msra.mxu0 0.0
        %1222 = vmatprep.subr.mxu0 0.0
        %1223 = vmatpush2.msra.mxu0 0.0
        %1224 = vmatprep.subr.mxu0 0.0
        %1225 = vmatpush2.msra.mxu0 0.0
        %1226 = vmatprep.subr.mxu0 0.0
        %1227 = vmatpush2.msra.mxu0 0.0
        %1228 = vmatprep.subr.mxu0 0.0
        %1229 = vmatpush2.msra.mxu0 0.0
        %1230 = vmatprep.subr.mxu0 0.0
        %1231 = vmatpush2.msra.mxu0 0.0
        %1232 = vmatprep.subr.mxu0 0.0
        %1233 = vmatpush2.msra.mxu0 0.0
        %1234 = vmatprep.subr.mxu0 0.0
        %1235 = vmatpush2.msra.mxu0 0.0
        %1236 = vmatprep.mubr.f32.mxu0 0.0
        %v1237 = vand.u32 %v715, 4294901760
        %v1238 = vsub.f32 %v715, %v1237
        %1239 = vmatmul.mubr.f32.gmra.mxu0 %v1238
        %v1240 = vpop.f32.mrf.mxu0
        %v1241 = vadd.f32 %v1073, %v1240
        %v1242 = vpop.f32.mrf.mxu0
        %1243 = vmatprep.mubr.f32.mxu0 0.0
        %v1244 = vand.u32 %v718, 4294901760
        %v1245 = vsub.f32 %v718, %v1244
        %1246 = vmatmul.mubr.f32.gmra.mxu0 %v1245
        %v1247 = vpop.f32.mrf.mxu0
        %v1248 = vadd.f32 %v1079, %v1247
        %v1249 = vpop.f32.mrf.mxu0
        %1250 = vmatprep.mubr.f32.mxu0 0.0
        %v1251 = vand.u32 %v721, 4294901760
        %v1252 = vsub.f32 %v721, %v1251
        %1253 = vmatmul.mubr.f32.gmra.mxu0 %v1252
        %v1254 = vpop.f32.mrf.mxu0
        %v1255 = vadd.f32 %v1085, %v1254
        %v1256 = vpop.f32.mrf.mxu0
        %1257 = vmatprep.mubr.f32.mxu0 0.0
        %v1258 = vand.u32 %v724, 4294901760
        %v1259 = vsub.f32 %v724, %v1258
        %1260 = vmatmul.mubr.f32.gmra.mxu0 %v1259
        %v1261 = vpop.f32.mrf.mxu0
        %v1262 = vadd.f32 %v1091, %v1261
        %v1263 = vpop.f32.mrf.mxu0
        %1264 = vmatprep.mubr.f32.mxu0 0.0
        %v1265 = vand.u32 %v727, 4294901760
        %v1266 = vsub.f32 %v727, %v1265
        %1267 = vmatmul.mubr.f32.gmra.mxu0 %v1266
        %v1268 = vpop.f32.mrf.mxu0
        %v1269 = vadd.f32 %v1097, %v1268
        %v1270 = vpop.f32.mrf.mxu0
        %1271 = vmatprep.mubr.f32.mxu0 0.0
        %v1272 = vand.u32 %v730, 4294901760
        %v1273 = vsub.f32 %v730, %v1272
        %1274 = vmatmul.mubr.f32.gmra.mxu0 %v1273
        %v1275 = vpop.f32.mrf.mxu0
        %v1276 = vadd.f32 %v1103, %v1275
        %v1277 = vpop.f32.mrf.mxu0
        %1278 = vmatprep.mubr.f32.mxu0 0.0
        %v1279 = vand.u32 %v733, 4294901760
        %v1280 = vsub.f32 %v733, %v1279
        %1281 = vmatmul.mubr.f32.gmra.mxu0 %v1280
        %v1282 = vpop.f32.mrf.mxu0
        %v1283 = vadd.f32 %v1109, %v1282
        %v1284 = vpop.f32.mrf.mxu0
        %1285 = vmatprep.mubr.f32.mxu0 0.0
        %v1286 = vand.u32 %v736, 4294901760
        %v1287 = vsub.f32 %v736, %v1286
        %1288 = vmatmul.mubr.f32.gmra.mxu0 %v1287
        %v1289 = vpop.f32.mrf.mxu0
        %v1290 = vadd.f32 %v1115, %v1289
        %v1291 = vpop.f32.mrf.mxu0
        %1292 = vmatprep.mubr.f32.mxu0 0.0
        %v1293 = vand.u32 %v739, 4294901760
        %v1294 = vsub.f32 %v739, %v1293
        %1295 = vmatmul.mubr.f32.gmra.mxu0 %v1294
        %v1296 = vpop.f32.mrf.mxu0
        %v1297 = vadd.f32 %v1121, %v1296
        %v1298 = vpop.f32.mrf.mxu0
        %1299 = vmatprep.mubr.f32.mxu0 0.0
        %v1300 = vand.u32 %v742, 4294901760
        %v1301 = vsub.f32 %v742, %v1300
        %1302 = vmatmul.mubr.f32.gmra.mxu0 %v1301
        %v1303 = vpop.f32.mrf.mxu0
        %v1304 = vadd.f32 %v1127, %v1303
        %v1305 = vpop.f32.mrf.mxu0
        %1306 = vmatprep.mubr.f32.mxu0 0.0
        %v1307 = vand.u32 %v745, 4294901760
        %v1308 = vsub.f32 %v745, %v1307
        %1309 = vmatmul.mubr.f32.gmra.mxu0 %v1308
        %v1310 = vpop.f32.mrf.mxu0
        %v1311 = vadd.f32 %v1133, %v1310
        %v1312 = vpop.f32.mrf.mxu0
        %1313 = vmatprep.mubr.f32.mxu0 0.0
        %v1314 = vand.u32 %v748, 4294901760
        %v1315 = vsub.f32 %v748, %v1314
        %1316 = vmatmul.mubr.f32.gmra.mxu0 %v1315
        %v1317 = vpop.f32.mrf.mxu0
        %v1318 = vadd.f32 %v1139, %v1317
        %v1319 = vpop.f32.mrf.mxu0
        %1320 = vmatprep.mubr.f32.mxu0 0.0
        %v1321 = vand.u32 %v751, 4294901760
        %v1322 = vsub.f32 %v751, %v1321
        %1323 = vmatmul.mubr.f32.gmra.mxu0 %v1322
        %v1324 = vpop.f32.mrf.mxu0
        %v1325 = vadd.f32 %v1145, %v1324
        %v1326 = vpop.f32.mrf.mxu0
        %1327 = vmatprep.mubr.f32.mxu0 0.0
        %v1328 = vand.u32 %v754, 4294901760
        %v1329 = vsub.f32 %v754, %v1328
        %1330 = vmatmul.mubr.f32.gmra.mxu0 %v1329
        %v1331 = vpop.f32.mrf.mxu0
        %v1332 = vadd.f32 %v1151, %v1331
        %v1333 = vpop.f32.mrf.mxu0
        %1334 = vmatprep.mubr.f32.mxu0 0.0
        %v1335 = vand.u32 %v757, 4294901760
        %v1336 = vsub.f32 %v757, %v1335
        %1337 = vmatmul.mubr.f32.gmra.mxu0 %v1336
        %v1338 = vpop.f32.mrf.mxu0
        %v1339 = vadd.f32 %v1157, %v1338
        %v1340 = vpop.f32.mrf.mxu0
        %1341 = vmatprep.mubr.f32.mxu0 0.0
        %v1342 = vand.u32 %v760, 4294901760
        %v1343 = vsub.f32 %v760, %v1342
        %1344 = vmatmul.mubr.f32.gmra.mxu0 %v1343
        %v1345 = vpop.f32.mrf.mxu0
        %v1346 = vadd.f32 %v1163, %v1345
        %v1347 = vpop.f32.mrf.mxu0
        %1348 = vdwg.mxu0
        %1349 = vmatprep.subr.mxu0 0.0
        %1350 = vmatpush1.msra.mxu0 0.0
        %1351 = vmatprep.subr.mxu0 0.0
        %1352 = vmatpush1.msra.mxu0 0.0
        %1353 = vmatprep.subr.mxu0 0.0
        %1354 = vmatpush1.msra.mxu0 0.0
        %1355 = vmatprep.subr.mxu0 0.0
        %1356 = vmatpush1.msra.mxu0 0.0
        %1357 = vmatprep.subr.mxu0 0.0
        %1358 = vmatpush1.msra.mxu0 0.0
        %1359 = vmatprep.subr.mxu0 0.0
        %1360 = vmatpush1.msra.mxu0 0.0
        %1361 = vmatprep.subr.mxu0 0.0
        %1362 = vmatpush1.msra.mxu0 0.0
        %1363 = vmatprep.subr.mxu0 0.0
        %1364 = vmatpush1.msra.mxu0 0.0
        %1365 = vmatprep.subr.mxu0 0.0
        %1366 = vmatpush1.msra.mxu0 0.0
        %1367 = vmatprep.subr.mxu0 0.0
        %1368 = vmatpush1.msra.mxu0 0.0
        %1369 = vmatprep.subr.mxu0 0.0
        %1370 = vmatpush1.msra.mxu0 0.0
        %1371 = vmatprep.subr.mxu0 0.0
        %1372 = vmatpush1.msra.mxu0 0.0
        %1373 = vmatprep.subr.mxu0 0.0
        %1374 = vmatpush1.msra.mxu0 0.0
        %1375 = vmatprep.subr.mxu0 0.0
        %v1376 = vand.u32 %v712, 4294901760
        %1377 = vmatpush1.msra.mxu0 %v1376
        %1378 = vmatprep.subr.mxu0 0.0
        %v1379 = vand.u32 %v711, 4294901760
        %1380 = vmatpush1.msra.mxu0 %v1379
        %1381 = vmatprep.subr.mxu0 0.0
        %v1382 = vand.u32 %v710, 4294901760
        %1383 = vmatpush1.msra.mxu0 %v1382
        %1384 = vmatprep.subr.mxu0 0.0
        %1385 = vmatpush2.msra.mxu0 0.0
        %1386 = vmatprep.subr.mxu0 0.0
        %1387 = vmatpush2.msra.mxu0 0.0
        %1388 = vmatprep.subr.mxu0 0.0
        %1389 = vmatpush2.msra.mxu0 0.0
        %1390 = vmatprep.subr.mxu0 0.0
        %1391 = vmatpush2.msra.mxu0 0.0
        %1392 = vmatprep.subr.mxu0 0.0
        %1393 = vmatpush2.msra.mxu0 0.0
        %1394 = vmatprep.subr.mxu0 0.0
        %1395 = vmatpush2.msra.mxu0 0.0
        %1396 = vmatprep.subr.mxu0 0.0
        %1397 = vmatpush2.msra.mxu0 0.0
        %1398 = vmatprep.subr.mxu0 0.0
        %1399 = vmatpush2.msra.mxu0 0.0
        %1400 = vmatprep.subr.mxu0 0.0
        %1401 = vmatpush2.msra.mxu0 0.0
        %1402 = vmatprep.subr.mxu0 0.0
        %1403 = vmatpush2.msra.mxu0 0.0
        %1404 = vmatprep.subr.mxu0 0.0
        %1405 = vmatpush2.msra.mxu0 0.0
        %1406 = vmatprep.subr.mxu0 0.0
        %1407 = vmatpush2.msra.mxu0 0.0
        %1408 = vmatprep.subr.mxu0 0.0
        %1409 = vmatpush2.msra.mxu0 0.0
        %1410 = vmatprep.subr.mxu0 0.0
        %1411 = vmatpush2.msra.mxu0 0.0
        %1412 = vmatprep.subr.mxu0 0.0
        %1413 = vmatpush2.msra.mxu0 0.0
        %1414 = vmatprep.subr.mxu0 0.0
        %1415 = vmatpush2.msra.mxu0 0.0
        %1416 = vmatprep.mubr.f32.mxu0 0.0
        %v1417 = vand.u32 %v715, 4294901760
        %v1418 = vsub.f32 %v715, %v1417
        %v1419 = vand.u32 %v1418, 4294901760
        %1420 = vmatmul.mubr.f32.gmra.mxu0 %v1419
        %v1421 = vpop.f32.mrf.mxu0
        %v1422 = vadd.f32 %v1241, %v1421
        %v1423 = vpop.f32.mrf.mxu0
        %1424 = vmatprep.mubr.f32.mxu0 0.0
        %v1425 = vand.u32 %v718, 4294901760
        %v1426 = vsub.f32 %v718, %v1425
        %v1427 = vand.u32 %v1426, 4294901760
        %1428 = vmatmul.mubr.f32.gmra.mxu0 %v1427
        %v1429 = vpop.f32.mrf.mxu0
        %v1430 = vadd.f32 %v1248, %v1429
        %v1431 = vpop.f32.mrf.mxu0
        %1432 = vmatprep.mubr.f32.mxu0 0.0
        %v1433 = vand.u32 %v721, 4294901760
        %v1434 = vsub.f32 %v721, %v1433
        %v1435 = vand.u32 %v1434, 4294901760
        %1436 = vmatmul.mubr.f32.gmra.mxu0 %v1435
        %v1437 = vpop.f32.mrf.mxu0
        %v1438 = vadd.f32 %v1255, %v1437
        %v1439 = vpop.f32.mrf.mxu0
        %1440 = vmatprep.mubr.f32.mxu0 0.0
        %v1441 = vand.u32 %v724, 4294901760
        %v1442 = vsub.f32 %v724, %v1441
        %v1443 = vand.u32 %v1442, 4294901760
        %1444 = vmatmul.mubr.f32.gmra.mxu0 %v1443
        %v1445 = vpop.f32.mrf.mxu0
        %v1446 = vadd.f32 %v1262, %v1445
        %v1447 = vpop.f32.mrf.mxu0
        %1448 = vmatprep.mubr.f32.mxu0 0.0
        %v1449 = vand.u32 %v727, 4294901760
        %v1450 = vsub.f32 %v727, %v1449
        %v1451 = vand.u32 %v1450, 4294901760
        %1452 = vmatmul.mubr.f32.gmra.mxu0 %v1451
        %v1453 = vpop.f32.mrf.mxu0
        %v1454 = vadd.f32 %v1269, %v1453
        %v1455 = vpop.f32.mrf.mxu0
        %1456 = vmatprep.mubr.f32.mxu0 0.0
        %v1457 = vand.u32 %v730, 4294901760
        %v1458 = vsub.f32 %v730, %v1457
        %v1459 = vand.u32 %v1458, 4294901760
        %1460 = vmatmul.mubr.f32.gmra.mxu0 %v1459
        %v1461 = vpop.f32.mrf.mxu0
        %v1462 = vadd.f32 %v1276, %v1461
        %v1463 = vpop.f32.mrf.mxu0
        %1464 = vmatprep.mubr.f32.mxu0 0.0
        %v1465 = vand.u32 %v733, 4294901760
        %v1466 = vsub.f32 %v733, %v1465
        %v1467 = vand.u32 %v1466, 4294901760
        %1468 = vmatmul.mubr.f32.gmra.mxu0 %v1467
        %v1469 = vpop.f32.mrf.mxu0
        %v1470 = vadd.f32 %v1283, %v1469
        %v1471 = vpop.f32.mrf.mxu0
        %1472 = vmatprep.mubr.f32.mxu0 0.0
        %v1473 = vand.u32 %v736, 4294901760
        %v1474 = vsub.f32 %v736, %v1473
        %v1475 = vand.u32 %v1474, 4294901760
        %1476 = vmatmul.mubr.f32.gmra.mxu0 %v1475
        %v1477 = vpop.f32.mrf.mxu0
        %v1478 = vadd.f32 %v1290, %v1477
        %v1479 = vpop.f32.mrf.mxu0
        %1480 = vmatprep.mubr.f32.mxu0 0.0
        %v1481 = vand.u32 %v739, 4294901760
        %v1482 = vsub.f32 %v739, %v1481
        %v1483 = vand.u32 %v1482, 4294901760
        %1484 = vmatmul.mubr.f32.gmra.mxu0 %v1483
        %v1485 = vpop.f32.mrf.mxu0
        %v1486 = vadd.f32 %v1297, %v1485
        %v1487 = vpop.f32.mrf.mxu0
        %1488 = vmatprep.mubr.f32.mxu0 0.0
        %v1489 = vand.u32 %v742, 4294901760
        %v1490 = vsub.f32 %v742, %v1489
        %v1491 = vand.u32 %v1490, 4294901760
        %1492 = vmatmul.mubr.f32.gmra.mxu0 %v1491
        %v1493 = vpop.f32.mrf.mxu0
        %v1494 = vadd.f32 %v1304, %v1493
        %v1495 = vpop.f32.mrf.mxu0
        %1496 = vmatprep.mubr.f32.mxu0 0.0
        %v1497 = vand.u32 %v745, 4294901760
        %v1498 = vsub.f32 %v745, %v1497
        %v1499 = vand.u32 %v1498, 4294901760
        %1500 = vmatmul.mubr.f32.gmra.mxu0 %v1499
        %v1501 = vpop.f32.mrf.mxu0
        %v1502 = vadd.f32 %v1311, %v1501
        %v1503 = vpop.f32.mrf.mxu0
        %1504 = vmatprep.mubr.f32.mxu0 0.0
        %v1505 = vand.u32 %v748, 4294901760
        %v1506 = vsub.f32 %v748, %v1505
        %v1507 = vand.u32 %v1506, 4294901760
        %1508 = vmatmul.mubr.f32.gmra.mxu0 %v1507
        %v1509 = vpop.f32.mrf.mxu0
        %v1510 = vadd.f32 %v1318, %v1509
        %v1511 = vpop.f32.mrf.mxu0
        %1512 = vmatprep.mubr.f32.mxu0 0.0
        %v1513 = vand.u32 %v751, 4294901760
        %v1514 = vsub.f32 %v751, %v1513
        %v1515 = vand.u32 %v1514, 4294901760
        %1516 = vmatmul.mubr.f32.gmra.mxu0 %v1515
        %v1517 = vpop.f32.mrf.mxu0
        %v1518 = vadd.f32 %v1325, %v1517
        %v1519 = vpop.f32.mrf.mxu0
        %1520 = vmatprep.mubr.f32.mxu0 0.0
        %v1521 = vand.u32 %v754, 4294901760
        %v1522 = vsub.f32 %v754, %v1521
        %v1523 = vand.u32 %v1522, 4294901760
        %1524 = vmatmul.mubr.f32.gmra.mxu0 %v1523
        %v1525 = vpop.f32.mrf.mxu0
        %v1526 = vadd.f32 %v1332, %v1525
        %v1527 = vpop.f32.mrf.mxu0
        %1528 = vmatprep.mubr.f32.mxu0 0.0
        %v1529 = vand.u32 %v757, 4294901760
        %v1530 = vsub.f32 %v757, %v1529
        %v1531 = vand.u32 %v1530, 4294901760
        %1532 = vmatmul.mubr.f32.gmra.mxu0 %v1531
        %v1533 = vpop.f32.mrf.mxu0
        %v1534 = vadd.f32 %v1339, %v1533
        %v1535 = vpop.f32.mrf.mxu0
        %1536 = vmatprep.mubr.f32.mxu0 0.0
        %v1537 = vand.u32 %v760, 4294901760
        %v1538 = vsub.f32 %v760, %v1537
        %v1539 = vand.u32 %v1538, 4294901760
        %1540 = vmatmul.mubr.f32.gmra.mxu0 %v1539
        %v1541 = vpop.f32.mrf.mxu0
        %v1542 = vadd.f32 %v1346, %v1541
        %v1543 = vpop.f32.mrf.mxu0
        %1544 = vdwg.mxu0
        %1545 = vmatprep.subr.mxu0 0.0
        %1546 = vmatpush1.msra.mxu0 0.0
        %1547 = vmatprep.subr.mxu0 0.0
        %1548 = vmatpush1.msra.mxu0 0.0
        %1549 = vmatprep.subr.mxu0 0.0
        %1550 = vmatpush1.msra.mxu0 0.0
        %1551 = vmatprep.subr.mxu0 0.0
        %1552 = vmatpush1.msra.mxu0 0.0
        %1553 = vmatprep.subr.mxu0 0.0
        %1554 = vmatpush1.msra.mxu0 0.0
        %1555 = vmatprep.subr.mxu0 0.0
        %1556 = vmatpush1.msra.mxu0 0.0
        %1557 = vmatprep.subr.mxu0 0.0
        %1558 = vmatpush1.msra.mxu0 0.0
        %1559 = vmatprep.subr.mxu0 0.0
        %1560 = vmatpush1.msra.mxu0 0.0
        %1561 = vmatprep.subr.mxu0 0.0
        %1562 = vmatpush1.msra.mxu0 0.0
        %1563 = vmatprep.subr.mxu0 0.0
        %1564 = vmatpush1.msra.mxu0 0.0
        %1565 = vmatprep.subr.mxu0 0.0
        %1566 = vmatpush1.msra.mxu0 0.0
        %1567 = vmatprep.subr.mxu0 0.0
        %1568 = vmatpush1.msra.mxu0 0.0
        %1569 = vmatprep.subr.mxu0 0.0
        %1570 = vmatpush1.msra.mxu0 0.0
        %1571 = vmatprep.subr.mxu0 0.0
        %v1572 = vand.u32 %v712, 4294901760
        %v1573 = vsub.f32 %v712, %v1572
        %v1574 = vand.u32 %v1573, 4294901760
        %1575 = vmatpush1.msra.mxu0 %v1574
        %1576 = vmatprep.subr.mxu0 0.0
        %v1577 = vand.u32 %v711, 4294901760
        %v1578 = vsub.f32 %v711, %v1577
        %v1579 = vand.u32 %v1578, 4294901760
        %1580 = vmatpush1.msra.mxu0 %v1579
        %1581 = vmatprep.subr.mxu0 0.0
        %v1582 = vand.u32 %v710, 4294901760
        %v1583 = vsub.f32 %v710, %v1582
        %v1584 = vand.u32 %v1583, 4294901760
        %1585 = vmatpush1.msra.mxu0 %v1584
        %1586 = vmatprep.subr.mxu0 0.0
        %1587 = vmatpush2.msra.mxu0 0.0
        %1588 = vmatprep.subr.mxu0 0.0
        %1589 = vmatpush2.msra.mxu0 0.0
        %1590 = vmatprep.subr.mxu0 0.0
        %1591 = vmatpush2.msra.mxu0 0.0
        %1592 = vmatprep.subr.mxu0 0.0
        %1593 = vmatpush2.msra.mxu0 0.0
        %1594 = vmatprep.subr.mxu0 0.0
        %1595 = vmatpush2.msra.mxu0 0.0
        %1596 = vmatprep.subr.mxu0 0.0
        %1597 = vmatpush2.msra.mxu0 0.0
        %1598 = vmatprep.subr.mxu0 0.0
        %1599 = vmatpush2.msra.mxu0 0.0
        %1600 = vmatprep.subr.mxu0 0.0
        %1601 = vmatpush2.msra.mxu0 0.0
        %1602 = vmatprep.subr.mxu0 0.0
        %1603 = vmatpush2.msra.mxu0 0.0
        %1604 = vmatprep.subr.mxu0 0.0
        %1605 = vmatpush2.msra.mxu0 0.0
        %1606 = vmatprep.subr.mxu0 0.0
        %1607 = vmatpush2.msra.mxu0 0.0
        %1608 = vmatprep.subr.mxu0 0.0
        %1609 = vmatpush2.msra.mxu0 0.0
        %1610 = vmatprep.subr.mxu0 0.0
        %1611 = vmatpush2.msra.mxu0 0.0
        %1612 = vmatprep.subr.mxu0 0.0
        %1613 = vmatpush2.msra.mxu0 0.0
        %1614 = vmatprep.subr.mxu0 0.0
        %1615 = vmatpush2.msra.mxu0 0.0
        %1616 = vmatprep.subr.mxu0 0.0
        %1617 = vmatpush2.msra.mxu0 0.0
        %1618 = vmatprep.mubr.f32.mxu0 0.0
        %v1619 = vand.u32 %v715, 4294901760
        %1620 = vmatmul.mubr.f32.gmra.mxu0 %v1619
        %v1621 = vpop.f32.mrf.mxu0
        %v1622 = vadd.f32 %v1422, %v1621
        %v1623 = vpop.f32.mrf.mxu0
        %1624 = vmatprep.mubr.f32.mxu0 0.0
        %v1625 = vand.u32 %v718, 4294901760
        %1626 = vmatmul.mubr.f32.gmra.mxu0 %v1625
        %v1627 = vpop.f32.mrf.mxu0
        %v1628 = vadd.f32 %v1430, %v1627
        %v1629 = vpop.f32.mrf.mxu0
        %1630 = vmatprep.mubr.f32.mxu0 0.0
        %v1631 = vand.u32 %v721, 4294901760
        %1632 = vmatmul.mubr.f32.gmra.mxu0 %v1631
        %v1633 = vpop.f32.mrf.mxu0
        %v1634 = vadd.f32 %v1438, %v1633
        %v1635 = vpop.f32.mrf.mxu0
        %1636 = vmatprep.mubr.f32.mxu0 0.0
        %v1637 = vand.u32 %v724, 4294901760
        %1638 = vmatmul.mubr.f32.gmra.mxu0 %v1637
        %v1639 = vpop.f32.mrf.mxu0
        %v1640 = vadd.f32 %v1446, %v1639
        %v1641 = vpop.f32.mrf.mxu0
        %1642 = vmatprep.mubr.f32.mxu0 0.0
        %v1643 = vand.u32 %v727, 4294901760
        %1644 = vmatmul.mubr.f32.gmra.mxu0 %v1643
        %v1645 = vpop.f32.mrf.mxu0
        %v1646 = vadd.f32 %v1454, %v1645
        %v1647 = vpop.f32.mrf.mxu0
        %1648 = vmatprep.mubr.f32.mxu0 0.0
        %v1649 = vand.u32 %v730, 4294901760
        %1650 = vmatmul.mubr.f32.gmra.mxu0 %v1649
        %v1651 = vpop.f32.mrf.mxu0
        %v1652 = vadd.f32 %v1462, %v1651
        %v1653 = vpop.f32.mrf.mxu0
        %1654 = vmatprep.mubr.f32.mxu0 0.0
        %v1655 = vand.u32 %v733, 4294901760
        %1656 = vmatmul.mubr.f32.gmra.mxu0 %v1655
        %v1657 = vpop.f32.mrf.mxu0
        %v1658 = vadd.f32 %v1470, %v1657
        %v1659 = vpop.f32.mrf.mxu0
        %1660 = vmatprep.mubr.f32.mxu0 0.0
        %v1661 = vand.u32 %v736, 4294901760
        %1662 = vmatmul.mubr.f32.gmra.mxu0 %v1661
        %v1663 = vpop.f32.mrf.mxu0
        %v1664 = vadd.f32 %v1478, %v1663
        %v1665 = vpop.f32.mrf.mxu0
        %1666 = vmatprep.mubr.f32.mxu0 0.0
        %v1667 = vand.u32 %v739, 4294901760
        %1668 = vmatmul.mubr.f32.gmra.mxu0 %v1667
        %v1669 = vpop.f32.mrf.mxu0
        %v1670 = vadd.f32 %v1486, %v1669
        %v1671 = vpop.f32.mrf.mxu0
        %1672 = vmatprep.mubr.f32.mxu0 0.0
        %v1673 = vand.u32 %v742, 4294901760
        %1674 = vmatmul.mubr.f32.gmra.mxu0 %v1673
        %v1675 = vpop.f32.mrf.mxu0
        %v1676 = vadd.f32 %v1494, %v1675
        %v1677 = vpop.f32.mrf.mxu0
        %1678 = vmatprep.mubr.f32.mxu0 0.0
        %v1679 = vand.u32 %v745, 4294901760
        %1680 = vmatmul.mubr.f32.gmra.mxu0 %v1679
        %v1681 = vpop.f32.mrf.mxu0
        %v1682 = vadd.f32 %v1502, %v1681
        %v1683 = vpop.f32.mrf.mxu0
        %1684 = vmatprep.mubr.f32.mxu0 0.0
        %v1685 = vand.u32 %v748, 4294901760
        %1686 = vmatmul.mubr.f32.gmra.mxu0 %v1685
        %v1687 = vpop.f32.mrf.mxu0
        %v1688 = vadd.f32 %v1510, %v1687
        %v1689 = vpop.f32.mrf.mxu0
        %1690 = vmatprep.mubr.f32.mxu0 0.0
        %v1691 = vand.u32 %v751, 4294901760
        %1692 = vmatmul.mubr.f32.gmra.mxu0 %v1691
        %v1693 = vpop.f32.mrf.mxu0
        %v1694 = vadd.f32 %v1518, %v1693
        %v1695 = vpop.f32.mrf.mxu0
        %1696 = vmatprep.mubr.f32.mxu0 0.0
        %v1697 = vand.u32 %v754, 4294901760
        %1698 = vmatmul.mubr.f32.gmra.mxu0 %v1697
        %v1699 = vpop.f32.mrf.mxu0
        %v1700 = vadd.f32 %v1526, %v1699
        %v1701 = vpop.f32.mrf.mxu0
        %1702 = vmatprep.mubr.f32.mxu0 0.0
        %v1703 = vand.u32 %v757, 4294901760
        %1704 = vmatmul.mubr.f32.gmra.mxu0 %v1703
        %v1705 = vpop.f32.mrf.mxu0
        %v1706 = vadd.f32 %v1534, %v1705
        %v1707 = vpop.f32.mrf.mxu0
        %1708 = vmatprep.mubr.f32.mxu0 0.0
        %v1709 = vand.u32 %v760, 4294901760
        %1710 = vmatmul.mubr.f32.gmra.mxu0 %v1709
        %v1711 = vpop.f32.mrf.mxu0
        %v1712 = vadd.f32 %v1542, %v1711
        %v1713 = vpop.f32.mrf.mxu0
        %1714 = vdwg.mxu0
        %1715 = vmatprep.subr.mxu0 0.0
        %1716 = vmatpush1.msra.mxu0 0.0
        %1717 = vmatprep.subr.mxu0 0.0
        %1718 = vmatpush1.msra.mxu0 0.0
        %1719 = vmatprep.subr.mxu0 0.0
        %1720 = vmatpush1.msra.mxu0 0.0
        %1721 = vmatprep.subr.mxu0 0.0
        %1722 = vmatpush1.msra.mxu0 0.0
        %1723 = vmatprep.subr.mxu0 0.0
        %1724 = vmatpush1.msra.mxu0 0.0
        %1725 = vmatprep.subr.mxu0 0.0
        %1726 = vmatpush1.msra.mxu0 0.0
        %1727 = vmatprep.subr.mxu0 0.0
        %1728 = vmatpush1.msra.mxu0 0.0
        %1729 = vmatprep.subr.mxu0 0.0
        %1730 = vmatpush1.msra.mxu0 0.0
        %1731 = vmatprep.subr.mxu0 0.0
        %1732 = vmatpush1.msra.mxu0 0.0
        %1733 = vmatprep.subr.mxu0 0.0
        %1734 = vmatpush1.msra.mxu0 0.0
        %1735 = vmatprep.subr.mxu0 0.0
        %1736 = vmatpush1.msra.mxu0 0.0
        %1737 = vmatprep.subr.mxu0 0.0
        %1738 = vmatpush1.msra.mxu0 0.0
        %1739 = vmatprep.subr.mxu0 0.0
        %1740 = vmatpush1.msra.mxu0 0.0
        %1741 = vmatprep.subr.mxu0 0.0
        %v1742 = vand.u32 %v712, 4294901760
        %1743 = vmatpush1.msra.mxu0 %v1742
        %1744 = vmatprep.subr.mxu0 0.0
        %v1745 = vand.u32 %v711, 4294901760
        %1746 = vmatpush1.msra.mxu0 %v1745
        %1747 = vmatprep.subr.mxu0 0.0
        %v1748 = vand.u32 %v710, 4294901760
        %1749 = vmatpush1.msra.mxu0 %v1748
        %1750 = vmatprep.subr.mxu0 0.0
        %1751 = vmatpush2.msra.mxu0 0.0
        %1752 = vmatprep.subr.mxu0 0.0
        %1753 = vmatpush2.msra.mxu0 0.0
        %1754 = vmatprep.subr.mxu0 0.0
        %1755 = vmatpush2.msra.mxu0 0.0
        %1756 = vmatprep.subr.mxu0 0.0
        %1757 = vmatpush2.msra.mxu0 0.0
        %1758 = vmatprep.subr.mxu0 0.0
        %1759 = vmatpush2.msra.mxu0 0.0
        %1760 = vmatprep.subr.mxu0 0.0
        %1761 = vmatpush2.msra.mxu0 0.0
        %1762 = vmatprep.subr.mxu0 0.0
        %1763 = vmatpush2.msra.mxu0 0.0
        %1764 = vmatprep.subr.mxu0 0.0
        %1765 = vmatpush2.msra.mxu0 0.0
        %1766 = vmatprep.subr.mxu0 0.0
        %1767 = vmatpush2.msra.mxu0 0.0
        %1768 = vmatprep.subr.mxu0 0.0
        %1769 = vmatpush2.msra.mxu0 0.0
        %1770 = vmatprep.subr.mxu0 0.0
        %1771 = vmatpush2.msra.mxu0 0.0
        %1772 = vmatprep.subr.mxu0 0.0
        %1773 = vmatpush2.msra.mxu0 0.0
        %1774 = vmatprep.subr.mxu0 0.0
        %1775 = vmatpush2.msra.mxu0 0.0
        %1776 = vmatprep.subr.mxu0 0.0
        %1777 = vmatpush2.msra.mxu0 0.0
        %1778 = vmatprep.subr.mxu0 0.0
        %1779 = vmatpush2.msra.mxu0 0.0
        %1780 = vmatprep.subr.mxu0 0.0
        %1781 = vmatpush2.msra.mxu0 0.0
        %1782 = vmatprep.mubr.f32.mxu0 0.0
        %v1783 = vand.u32 %v715, 4294901760
        %1784 = vmatmul.mubr.f32.gmra.mxu0 %v1783
        %v1785 = vpop.f32.mrf.mxu0
        %v1786 = vadd.f32 %v1622, %v1785
        %v1787 = vpop.f32.mrf.mxu0
        %1788 = vmatprep.mubr.f32.mxu0 0.0
        %v1789 = vand.u32 %v718, 4294901760
        %1790 = vmatmul.mubr.f32.gmra.mxu0 %v1789
        %v1791 = vpop.f32.mrf.mxu0
        %v1792 = vadd.f32 %v1628, %v1791
        %v1793 = vpop.f32.mrf.mxu0
        %1794 = vmatprep.mubr.f32.mxu0 0.0
        %v1795 = vand.u32 %v721, 4294901760
        %1796 = vmatmul.mubr.f32.gmra.mxu0 %v1795
        %v1797 = vpop.f32.mrf.mxu0
        %v1798 = vadd.f32 %v1634, %v1797
        %v1799 = vpop.f32.mrf.mxu0
        %1800 = vmatprep.mubr.f32.mxu0 0.0
        %v1801 = vand.u32 %v724, 4294901760
        %1802 = vmatmul.mubr.f32.gmra.mxu0 %v1801
        %v1803 = vpop.f32.mrf.mxu0
        %v1804 = vadd.f32 %v1640, %v1803
        %v1805 = vpop.f32.mrf.mxu0
        %1806 = vmatprep.mubr.f32.mxu0 0.0
        %v1807 = vand.u32 %v727, 4294901760
        %1808 = vmatmul.mubr.f32.gmra.mxu0 %v1807
        %v1809 = vpop.f32.mrf.mxu0
        %v1810 = vadd.f32 %v1646, %v1809
        %v1811 = vpop.f32.mrf.mxu0
        %1812 = vmatprep.mubr.f32.mxu0 0.0
        %v1813 = vand.u32 %v730, 4294901760
        %1814 = vmatmul.mubr.f32.gmra.mxu0 %v1813
        %v1815 = vpop.f32.mrf.mxu0
        %v1816 = vadd.f32 %v1652, %v1815
        %v1817 = vpop.f32.mrf.mxu0
        %1818 = vmatprep.mubr.f32.mxu0 0.0
        %v1819 = vand.u32 %v733, 4294901760
        %1820 = vmatmul.mubr.f32.gmra.mxu0 %v1819
        %v1821 = vpop.f32.mrf.mxu0
        %v1822 = vadd.f32 %v1658, %v1821
        %v1823 = vpop.f32.mrf.mxu0
        %1824 = vmatprep.mubr.f32.mxu0 0.0
        %v1825 = vand.u32 %v736, 4294901760
        %1826 = vmatmul.mubr.f32.gmra.mxu0 %v1825
        %v1827 = vpop.f32.mrf.mxu0
        %v1828 = vadd.f32 %v1664, %v1827
        %v1829 = vpop.f32.mrf.mxu0
        %1830 = vmatprep.mubr.f32.mxu0 0.0
        %v1831 = vand.u32 %v739, 4294901760
        %1832 = vmatmul.mubr.f32.gmra.mxu0 %v1831
        %v1833 = vpop.f32.mrf.mxu0
        %v1834 = vadd.f32 %v1670, %v1833
        %v1835 = vpop.f32.mrf.mxu0
        %1836 = vmatprep.mubr.f32.mxu0 0.0
        %v1837 = vand.u32 %v742, 4294901760
        %1838 = vmatmul.mubr.f32.gmra.mxu0 %v1837
        %v1839 = vpop.f32.mrf.mxu0
        %v1840 = vadd.f32 %v1676, %v1839
        %v1841 = vpop.f32.mrf.mxu0
        %1842 = vmatprep.mubr.f32.mxu0 0.0
        %v1843 = vand.u32 %v745, 4294901760
        %1844 = vmatmul.mubr.f32.gmra.mxu0 %v1843
        %v1845 = vpop.f32.mrf.mxu0
        %v1846 = vadd.f32 %v1682, %v1845
        %v1847 = vpop.f32.mrf.mxu0
        %1848 = vmatprep.mubr.f32.mxu0 0.0
        %v1849 = vand.u32 %v748, 4294901760
        %1850 = vmatmul.mubr.f32.gmra.mxu0 %v1849
        %v1851 = vpop.f32.mrf.mxu0
        %v1852 = vadd.f32 %v1688, %v1851
        %v1853 = vpop.f32.mrf.mxu0
        %1854 = vmatprep.mubr.f32.mxu0 0.0
        %v1855 = vand.u32 %v751, 4294901760
        %1856 = vmatmul.mubr.f32.gmra.mxu0 %v1855
        %v1857 = vpop.f32.mrf.mxu0
        %v1858 = vadd.f32 %v1694, %v1857
        %v1859 = vpop.f32.mrf.mxu0
        %1860 = vmatprep.mubr.f32.mxu0 0.0
        %v1861 = vand.u32 %v754, 4294901760
        %1862 = vmatmul.mubr.f32.gmra.mxu0 %v1861
        %v1863 = vpop.f32.mrf.mxu0
        %v1864 = vadd.f32 %v1700, %v1863
        %v1865 = vpop.f32.mrf.mxu0
        %1866 = vmatprep.mubr.f32.mxu0 0.0
        %v1867 = vand.u32 %v757, 4294901760
        %1868 = vmatmul.mubr.f32.gmra.mxu0 %v1867
        %v1869 = vpop.f32.mrf.mxu0
        %v1870 = vadd.f32 %v1706, %v1869
        %v1871 = vpop.f32.mrf.mxu0
        %1872 = vmatprep.mubr.f32.mxu0 0.0
        %v1873 = vand.u32 %v760, 4294901760
        %1874 = vmatmul.mubr.f32.gmra.mxu0 %v1873
        %v1875 = vpop.f32.mrf.mxu0
        %v1876 = vadd.f32 %v1712, %v1875
        %v1877 = vpop.f32.mrf.mxu0
        %1878 = vdwg.mxu0
        %v1880 = vsel %vm713, %v431, 0
        %v1883 = vsel %vm713, %v432, 0
        %v1886 = vsel %vm713, %v433, 0
        %v1889 = vsel %vm713, %v434, 0
        %v1892 = vsel %vm713, %v435, 0
        %v1895 = vsel %vm713, %v436, 0
        %v1898 = vsel %vm713, %v437, 0
        %v1901 = vsel %vm713, %v438, 0
        %v1904 = vsel %vm713, %v439, 0
        %v1907 = vsel %vm713, %v440, 0
        %v1910 = vsel %vm713, %v441, 0
        %v1913 = vsel %vm713, %v442, 0
        %v1916 = vsel %vm713, %v443, 0
        %v1919 = vsel %vm713, %v444, 0
        %v1922 = vsel %vm713, %v445, 0
        %v1925 = vsel %vm713, %v446, 0
        %1927 = vmatprep.subr.mxu0 0.0
        %1928 = vmatpush1.msra.mxu0 0.0
        %1929 = vmatprep.subr.mxu0 0.0
        %1930 = vmatpush1.msra.mxu0 0.0
        %1931 = vmatprep.subr.mxu0 0.0
        %1932 = vmatpush1.msra.mxu0 0.0
        %1933 = vmatprep.subr.mxu0 0.0
        %1934 = vmatpush1.msra.mxu0 0.0
        %1935 = vmatprep.subr.mxu0 0.0
        %1936 = vmatpush1.msra.mxu0 0.0
        %1937 = vmatprep.subr.mxu0 0.0
        %1938 = vmatpush1.msra.mxu0 0.0
        %1939 = vmatprep.subr.mxu0 0.0
        %1940 = vmatpush1.msra.mxu0 0.0
        %1941 = vmatprep.subr.mxu0 0.0
        %1942 = vmatpush1.msra.mxu0 0.0
        %1943 = vmatprep.subr.mxu0 0.0
        %1944 = vmatpush1.msra.mxu0 0.0
        %1945 = vmatprep.subr.mxu0 0.0
        %1946 = vmatpush1.msra.mxu0 0.0
        %1947 = vmatprep.subr.mxu0 0.0
        %1948 = vmatpush1.msra.mxu0 0.0
        %1949 = vmatprep.subr.mxu0 0.0
        %1950 = vmatpush1.msra.mxu0 0.0
        %1951 = vmatprep.subr.mxu0 0.0
        %1952 = vmatpush1.msra.mxu0 0.0
        %1953 = vmatprep.subr.mxu0 0.0
        %v1954 = vand.u32 %v449, 4294901760
        %1955 = vmatpush1.msra.mxu0 %v1954
        %1956 = vmatprep.subr.mxu0 0.0
        %v1957 = vand.u32 %v448, 4294901760
        %1958 = vmatpush1.msra.mxu0 %v1957
        %1959 = vmatprep.subr.mxu0 0.0
        %v1960 = vand.u32 %v447, 4294901760
        %1961 = vmatpush1.msra.mxu0 %v1960
        %1962 = vmatprep.subr.mxu0 0.0
        %1963 = vmatpush2.msra.mxu0 0.0
        %1964 = vmatprep.subr.mxu0 0.0
        %1965 = vmatpush2.msra.mxu0 0.0
        %1966 = vmatprep.subr.mxu0 0.0
        %1967 = vmatpush2.msra.mxu0 0.0
        %1968 = vmatprep.subr.mxu0 0.0
        %1969 = vmatpush2.msra.mxu0 0.0
        %1970 = vmatprep.subr.mxu0 0.0
        %1971 = vmatpush2.msra.mxu0 0.0
        %1972 = vmatprep.subr.mxu0 0.0
        %1973 = vmatpush2.msra.mxu0 0.0
        %1974 = vmatprep.subr.mxu0 0.0
        %1975 = vmatpush2.msra.mxu0 0.0
        %1976 = vmatprep.subr.mxu0 0.0
        %1977 = vmatpush2.msra.mxu0 0.0
        %1978 = vmatprep.subr.mxu0 0.0
        %1979 = vmatpush2.msra.mxu0 0.0
        %1980 = vmatprep.subr.mxu0 0.0
        %1981 = vmatpush2.msra.mxu0 0.0
        %1982 = vmatprep.subr.mxu0 0.0
        %1983 = vmatpush2.msra.mxu0 0.0
        %1984 = vmatprep.subr.mxu0 0.0
        %1985 = vmatpush2.msra.mxu0 0.0
        %1986 = vmatprep.subr.mxu0 0.0
        %1987 = vmatpush2.msra.mxu0 0.0
        %1988 = vmatprep.subr.mxu0 0.0
        %1989 = vmatpush2.msra.mxu0 0.0
        %1990 = vmatprep.subr.mxu0 0.0
        %1991 = vmatpush2.msra.mxu0 0.0
        %1992 = vmatprep.subr.mxu0 0.0
        %1993 = vmatpush2.msra.mxu0 0.0
        %1994 = vmatprep.mubr.f32.mxu0 0.0
        %v1995 = vand.u32 %v1880, 4294901760
        %v1996 = vsub.f32 %v1880, %v1995
        %v1997 = vand.u32 %v1996, 4294901760
        %v1998 = vsub.f32 %v1996, %v1997
        %v1999 = vand.u32 %v1998, 4294901760
        %2000 = vmatmul.mubr.f32.gmra.mxu0 %v1999
        %v2001 = vpop.f32.mrf.mxu0
        %v2002 = vadd.f32 %v1786, %v2001
        %v2003 = vpop.f32.mrf.mxu0
        %2004 = vmatprep.mubr.f32.mxu0 0.0
        %v2005 = vand.u32 %v1883, 4294901760
        %v2006 = vsub.f32 %v1883, %v2005
        %v2007 = vand.u32 %v2006, 4294901760
        %v2008 = vsub.f32 %v2006, %v2007
        %v2009 = vand.u32 %v2008, 4294901760
        %2010 = vmatmul.mubr.f32.gmra.mxu0 %v2009
        %v2011 = vpop.f32.mrf.mxu0
        %v2012 = vadd.f32 %v1792, %v2011
        %v2013 = vpop.f32.mrf.mxu0
        %2014 = vmatprep.mubr.f32.mxu0 0.0
        %v2015 = vand.u32 %v1886, 4294901760
        %v2016 = vsub.f32 %v1886, %v2015
        %v2017 = vand.u32 %v2016, 4294901760
        %v2018 = vsub.f32 %v2016, %v2017
        %v2019 = vand.u32 %v2018, 4294901760
        %2020 = vmatmul.mubr.f32.gmra.mxu0 %v2019
        %v2021 = vpop.f32.mrf.mxu0
        %v2022 = vadd.f32 %v1798, %v2021
        %v2023 = vpop.f32.mrf.mxu0
        %2024 = vmatprep.mubr.f32.mxu0 0.0
        %v2025 = vand.u32 %v1889, 4294901760
        %v2026 = vsub.f32 %v1889, %v2025
        %v2027 = vand.u32 %v2026, 4294901760
        %v2028 = vsub.f32 %v2026, %v2027
        %v2029 = vand.u32 %v2028, 4294901760
        %2030 = vmatmul.mubr.f32.gmra.mxu0 %v2029
        %v2031 = vpop.f32.mrf.mxu0
        %v2032 = vadd.f32 %v1804, %v2031
        %v2033 = vpop.f32.mrf.mxu0
        %2034 = vmatprep.mubr.f32.mxu0 0.0
        %v2035 = vand.u32 %v1892, 4294901760
        %v2036 = vsub.f32 %v1892, %v2035
        %v2037 = vand.u32 %v2036, 4294901760
        %v2038 = vsub.f32 %v2036, %v2037
        %v2039 = vand.u32 %v2038, 4294901760
        %2040 = vmatmul.mubr.f32.gmra.mxu0 %v2039
        %v2041 = vpop.f32.mrf.mxu0
        %v2042 = vadd.f32 %v1810, %v2041
        %v2043 = vpop.f32.mrf.mxu0
        %2044 = vmatprep.mubr.f32.mxu0 0.0
        %v2045 = vand.u32 %v1895, 4294901760
        %v2046 = vsub.f32 %v1895, %v2045
        %v2047 = vand.u32 %v2046, 4294901760
        %v2048 = vsub.f32 %v2046, %v2047
        %v2049 = vand.u32 %v2048, 4294901760
        %2050 = vmatmul.mubr.f32.gmra.mxu0 %v2049
        %v2051 = vpop.f32.mrf.mxu0
        %v2052 = vadd.f32 %v1816, %v2051
        %v2053 = vpop.f32.mrf.mxu0
        %2054 = vmatprep.mubr.f32.mxu0 0.0
        %v2055 = vand.u32 %v1898, 4294901760
        %v2056 = vsub.f32 %v1898, %v2055
        %v2057 = vand.u32 %v2056, 4294901760
        %v2058 = vsub.f32 %v2056, %v2057
        %v2059 = vand.u32 %v2058, 4294901760
        %2060 = vmatmul.mubr.f32.gmra.mxu0 %v2059
        %v2061 = vpop.f32.mrf.mxu0
        %v2062 = vadd.f32 %v1822, %v2061
        %v2063 = vpop.f32.mrf.mxu0
        %2064 = vmatprep.mubr.f32.mxu0 0.0
        %v2065 = vand.u32 %v1901, 4294901760
        %v2066 = vsub.f32 %v1901, %v2065
        %v2067 = vand.u32 %v2066, 4294901760
        %v2068 = vsub.f32 %v2066, %v2067
        %v2069 = vand.u32 %v2068, 4294901760
        %2070 = vmatmul.mubr.f32.gmra.mxu0 %v2069
        %v2071 = vpop.f32.mrf.mxu0
        %v2072 = vadd.f32 %v1828, %v2071
        %v2073 = vpop.f32.mrf.mxu0
        %2074 = vmatprep.mubr.f32.mxu0 0.0
        %v2075 = vand.u32 %v1904, 4294901760
        %v2076 = vsub.f32 %v1904, %v2075
        %v2077 = vand.u32 %v2076, 4294901760
        %v2078 = vsub.f32 %v2076, %v2077
        %v2079 = vand.u32 %v2078, 4294901760
        %2080 = vmatmul.mubr.f32.gmra.mxu0 %v2079
        %v2081 = vpop.f32.mrf.mxu0
        %v2082 = vadd.f32 %v1834, %v2081
        %v2083 = vpop.f32.mrf.mxu0
        %2084 = vmatprep.mubr.f32.mxu0 0.0
        %v2085 = vand.u32 %v1907, 4294901760
        %v2086 = vsub.f32 %v1907, %v2085
        %v2087 = vand.u32 %v2086, 4294901760
        %v2088 = vsub.f32 %v2086, %v2087
        %v2089 = vand.u32 %v2088, 4294901760
        %2090 = vmatmul.mubr.f32.gmra.mxu0 %v2089
        %v2091 = vpop.f32.mrf.mxu0
        %v2092 = vadd.f32 %v1840, %v2091
        %v2093 = vpop.f32.mrf.mxu0
        %2094 = vmatprep.mubr.f32.mxu0 0.0
        %v2095 = vand.u32 %v1910, 4294901760
        %v2096 = vsub.f32 %v1910, %v2095
        %v2097 = vand.u32 %v2096, 4294901760
        %v2098 = vsub.f32 %v2096, %v2097
        %v2099 = vand.u32 %v2098, 4294901760
        %2100 = vmatmul.mubr.f32.gmra.mxu0 %v2099
        %v2101 = vpop.f32.mrf.mxu0
        %v2102 = vadd.f32 %v1846, %v2101
        %v2103 = vpop.f32.mrf.mxu0
        %2104 = vmatprep.mubr.f32.mxu0 0.0
        %v2105 = vand.u32 %v1913, 4294901760
        %v2106 = vsub.f32 %v1913, %v2105
        %v2107 = vand.u32 %v2106, 4294901760
        %v2108 = vsub.f32 %v2106, %v2107
        %v2109 = vand.u32 %v2108, 4294901760
        %2110 = vmatmul.mubr.f32.gmra.mxu0 %v2109
        %v2111 = vpop.f32.mrf.mxu0
        %v2112 = vadd.f32 %v1852, %v2111
        %v2113 = vpop.f32.mrf.mxu0
        %2114 = vmatprep.mubr.f32.mxu0 0.0
        %v2115 = vand.u32 %v1916, 4294901760
        %v2116 = vsub.f32 %v1916, %v2115
        %v2117 = vand.u32 %v2116, 4294901760
        %v2118 = vsub.f32 %v2116, %v2117
        %v2119 = vand.u32 %v2118, 4294901760
        %2120 = vmatmul.mubr.f32.gmra.mxu0 %v2119
        %v2121 = vpop.f32.mrf.mxu0
        %v2122 = vadd.f32 %v1858, %v2121
        %v2123 = vpop.f32.mrf.mxu0
        %2124 = vmatprep.mubr.f32.mxu0 0.0
        %v2125 = vand.u32 %v1919, 4294901760
        %v2126 = vsub.f32 %v1919, %v2125
        %v2127 = vand.u32 %v2126, 4294901760
        %v2128 = vsub.f32 %v2126, %v2127
        %v2129 = vand.u32 %v2128, 4294901760
        %2130 = vmatmul.mubr.f32.gmra.mxu0 %v2129
        %v2131 = vpop.f32.mrf.mxu0
        %v2132 = vadd.f32 %v1864, %v2131
        %v2133 = vpop.f32.mrf.mxu0
        %2134 = vmatprep.mubr.f32.mxu0 0.0
        %v2135 = vand.u32 %v1922, 4294901760
        %v2136 = vsub.f32 %v1922, %v2135
        %v2137 = vand.u32 %v2136, 4294901760
        %v2138 = vsub.f32 %v2136, %v2137
        %v2139 = vand.u32 %v2138, 4294901760
        %2140 = vmatmul.mubr.f32.gmra.mxu0 %v2139
        %v2141 = vpop.f32.mrf.mxu0
        %v2142 = vadd.f32 %v1870, %v2141
        %v2143 = vpop.f32.mrf.mxu0
        %2144 = vmatprep.mubr.f32.mxu0 0.0
        %v2145 = vand.u32 %v1925, 4294901760
        %v2146 = vsub.f32 %v1925, %v2145
        %v2147 = vand.u32 %v2146, 4294901760
        %v2148 = vsub.f32 %v2146, %v2147
        %v2149 = vand.u32 %v2148, 4294901760
        %2150 = vmatmul.mubr.f32.gmra.mxu0 %v2149
        %v2151 = vpop.f32.mrf.mxu0
        %v2152 = vadd.f32 %v1876, %v2151
        %v2153 = vpop.f32.mrf.mxu0
        %2154 = vdwg.mxu0
        %2155 = vmatprep.subr.mxu0 0.0
        %2156 = vmatpush1.msra.mxu0 0.0
        %2157 = vmatprep.subr.mxu0 0.0
        %2158 = vmatpush1.msra.mxu0 0.0
        %2159 = vmatprep.subr.mxu0 0.0
        %2160 = vmatpush1.msra.mxu0 0.0
        %2161 = vmatprep.subr.mxu0 0.0
        %2162 = vmatpush1.msra.mxu0 0.0
        %2163 = vmatprep.subr.mxu0 0.0
        %2164 = vmatpush1.msra.mxu0 0.0
        %2165 = vmatprep.subr.mxu0 0.0
        %2166 = vmatpush1.msra.mxu0 0.0
        %2167 = vmatprep.subr.mxu0 0.0
        %2168 = vmatpush1.msra.mxu0 0.0
        %2169 = vmatprep.subr.mxu0 0.0
        %2170 = vmatpush1.msra.mxu0 0.0
        %2171 = vmatprep.subr.mxu0 0.0
        %2172 = vmatpush1.msra.mxu0 0.0
        %2173 = vmatprep.subr.mxu0 0.0
        %2174 = vmatpush1.msra.mxu0 0.0
        %2175 = vmatprep.subr.mxu0 0.0
        %2176 = vmatpush1.msra.mxu0 0.0
        %2177 = vmatprep.subr.mxu0 0.0
        %2178 = vmatpush1.msra.mxu0 0.0
        %2179 = vmatprep.subr.mxu0 0.0
        %2180 = vmatpush1.msra.mxu0 0.0
        %2181 = vmatprep.subr.mxu0 0.0
        %v2182 = vand.u32 %v449, 4294901760
        %v2183 = vsub.f32 %v449, %v2182
        %v2184 = vand.u32 %v2183, 4294901760
        %v2185 = vsub.f32 %v2183, %v2184
        %v2186 = vand.u32 %v2185, 4294901760
        %2187 = vmatpush1.msra.mxu0 %v2186
        %2188 = vmatprep.subr.mxu0 0.0
        %v2189 = vand.u32 %v448, 4294901760
        %v2190 = vsub.f32 %v448, %v2189
        %v2191 = vand.u32 %v2190, 4294901760
        %v2192 = vsub.f32 %v2190, %v2191
        %v2193 = vand.u32 %v2192, 4294901760
        %2194 = vmatpush1.msra.mxu0 %v2193
        %2195 = vmatprep.subr.mxu0 0.0
        %v2196 = vand.u32 %v447, 4294901760
        %v2197 = vsub.f32 %v447, %v2196
        %v2198 = vand.u32 %v2197, 4294901760
        %v2199 = vsub.f32 %v2197, %v2198
        %v2200 = vand.u32 %v2199, 4294901760
        %2201 = vmatpush1.msra.mxu0 %v2200
        %2202 = vmatprep.subr.mxu0 0.0
        %2203 = vmatpush2.msra.mxu0 0.0
        %2204 = vmatprep.subr.mxu0 0.0
        %2205 = vmatpush2.msra.mxu0 0.0
        %2206 = vmatprep.subr.mxu0 0.0
        %2207 = vmatpush2.msra.mxu0 0.0
        %2208 = vmatprep.subr.mxu0 0.0
        %2209 = vmatpush2.msra.mxu0 0.0
        %2210 = vmatprep.subr.mxu0 0.0
        %2211 = vmatpush2.msra.mxu0 0.0
        %2212 = vmatprep.subr.mxu0 0.0
        %2213 = vmatpush2.msra.mxu0 0.0
        %2214 = vmatprep.subr.mxu0 0.0
        %2215 = vmatpush2.msra.mxu0 0.0
        %2216 = vmatprep.subr.mxu0 0.0
        %2217 = vmatpush2.msra.mxu0 0.0
        %2218 = vmatprep.subr.mxu0 0.0
        %2219 = vmatpush2.msra.mxu0 0.0
        %2220 = vmatprep.subr.mxu0 0.0
        %2221 = vmatpush2.msra.mxu0 0.0
        %2222 = vmatprep.subr.mxu0 0.0
        %2223 = vmatpush2.msra.mxu0 0.0
        %2224 = vmatprep.subr.mxu0 0.0
        %2225 = vmatpush2.msra.mxu0 0.0
        %2226 = vmatprep.subr.mxu0 0.0
        %2227 = vmatpush2.msra.mxu0 0.0
        %2228 = vmatprep.subr.mxu0 0.0
        %2229 = vmatpush2.msra.mxu0 0.0
        %2230 = vmatprep.subr.mxu0 0.0
        %2231 = vmatpush2.msra.mxu0 0.0
        %2232 = vmatprep.subr.mxu0 0.0
        %2233 = vmatpush2.msra.mxu0 0.0
        %2234 = vmatprep.mubr.f32.mxu0 0.0
        %v2235 = vand.u32 %v1880, 4294901760
        %2236 = vmatmul.mubr.f32.gmra.mxu0 %v2235
        %v2237 = vpop.f32.mrf.mxu0
        %v2238 = vadd.f32 %v2002, %v2237
        %v2239 = vpop.f32.mrf.mxu0
        %2240 = vmatprep.mubr.f32.mxu0 0.0
        %v2241 = vand.u32 %v1883, 4294901760
        %2242 = vmatmul.mubr.f32.gmra.mxu0 %v2241
        %v2243 = vpop.f32.mrf.mxu0
        %v2244 = vadd.f32 %v2012, %v2243
        %v2245 = vpop.f32.mrf.mxu0
        %2246 = vmatprep.mubr.f32.mxu0 0.0
        %v2247 = vand.u32 %v1886, 4294901760
        %2248 = vmatmul.mubr.f32.gmra.mxu0 %v2247
        %v2249 = vpop.f32.mrf.mxu0
        %v2250 = vadd.f32 %v2022, %v2249
        %v2251 = vpop.f32.mrf.mxu0
        %2252 = vmatprep.mubr.f32.mxu0 0.0
        %v2253 = vand.u32 %v1889, 4294901760
        %2254 = vmatmul.mubr.f32.gmra.mxu0 %v2253
        %v2255 = vpop.f32.mrf.mxu0
        %v2256 = vadd.f32 %v2032, %v2255
        %v2257 = vpop.f32.mrf.mxu0
        %2258 = vmatprep.mubr.f32.mxu0 0.0
        %v2259 = vand.u32 %v1892, 4294901760
        %2260 = vmatmul.mubr.f32.gmra.mxu0 %v2259
        %v2261 = vpop.f32.mrf.mxu0
        %v2262 = vadd.f32 %v2042, %v2261
        %v2263 = vpop.f32.mrf.mxu0
        %2264 = vmatprep.mubr.f32.mxu0 0.0
        %v2265 = vand.u32 %v1895, 4294901760
        %2266 = vmatmul.mubr.f32.gmra.mxu0 %v2265
        %v2267 = vpop.f32.mrf.mxu0
        %v2268 = vadd.f32 %v2052, %v2267
        %v2269 = vpop.f32.mrf.mxu0
        %2270 = vmatprep.mubr.f32.mxu0 0.0
        %v2271 = vand.u32 %v1898, 4294901760
        %2272 = vmatmul.mubr.f32.gmra.mxu0 %v2271
        %v2273 = vpop.f32.mrf.mxu0
        %v2274 = vadd.f32 %v2062, %v2273
        %v2275 = vpop.f32.mrf.mxu0
        %2276 = vmatprep.mubr.f32.mxu0 0.0
        %v2277 = vand.u32 %v1901, 4294901760
        %2278 = vmatmul.mubr.f32.gmra.mxu0 %v2277
        %v2279 = vpop.f32.mrf.mxu0
        %v2280 = vadd.f32 %v2072, %v2279
        %v2281 = vpop.f32.mrf.mxu0
        %2282 = vmatprep.mubr.f32.mxu0 0.0
        %v2283 = vand.u32 %v1904, 4294901760
        %2284 = vmatmul.mubr.f32.gmra.mxu0 %v2283
        %v2285 = vpop.f32.mrf.mxu0
        %v2286 = vadd.f32 %v2082, %v2285
        %v2287 = vpop.f32.mrf.mxu0
        %2288 = vmatprep.mubr.f32.mxu0 0.0
        %v2289 = vand.u32 %v1907, 4294901760
        %2290 = vmatmul.mubr.f32.gmra.mxu0 %v2289
        %v2291 = vpop.f32.mrf.mxu0
        %v2292 = vadd.f32 %v2092, %v2291
        %v2293 = vpop.f32.mrf.mxu0
        %2294 = vmatprep.mubr.f32.mxu0 0.0
        %v2295 = vand.u32 %v1910, 4294901760
        %2296 = vmatmul.mubr.f32.gmra.mxu0 %v2295
        %v2297 = vpop.f32.mrf.mxu0
        %v2298 = vadd.f32 %v2102, %v2297
        %v2299 = vpop.f32.mrf.mxu0
        %2300 = vmatprep.mubr.f32.mxu0 0.0
        %v2301 = vand.u32 %v1913, 4294901760
        %2302 = vmatmul.mubr.f32.gmra.mxu0 %v2301
        %v2303 = vpop.f32.mrf.mxu0
        %v2304 = vadd.f32 %v2112, %v2303
        %v2305 = vpop.f32.mrf.mxu0
        %2306 = vmatprep.mubr.f32.mxu0 0.0
        %v2307 = vand.u32 %v1916, 4294901760
        %2308 = vmatmul.mubr.f32.gmra.mxu0 %v2307
        %v2309 = vpop.f32.mrf.mxu0
        %v2310 = vadd.f32 %v2122, %v2309
        %v2311 = vpop.f32.mrf.mxu0
        %2312 = vmatprep.mubr.f32.mxu0 0.0
        %v2313 = vand.u32 %v1919, 4294901760
        %2314 = vmatmul.mubr.f32.gmra.mxu0 %v2313
        %v2315 = vpop.f32.mrf.mxu0
        %v2316 = vadd.f32 %v2132, %v2315
        %v2317 = vpop.f32.mrf.mxu0
        %2318 = vmatprep.mubr.f32.mxu0 0.0
        %v2319 = vand.u32 %v1922, 4294901760
        %2320 = vmatmul.mubr.f32.gmra.mxu0 %v2319
        %v2321 = vpop.f32.mrf.mxu0
        %v2322 = vadd.f32 %v2142, %v2321
        %v2323 = vpop.f32.mrf.mxu0
        %2324 = vmatprep.mubr.f32.mxu0 0.0
        %v2325 = vand.u32 %v1925, 4294901760
        %2326 = vmatmul.mubr.f32.gmra.mxu0 %v2325
        %v2327 = vpop.f32.mrf.mxu0
        %v2328 = vadd.f32 %v2152, %v2327
        %v2329 = vpop.f32.mrf.mxu0
        %2330 = vdwg.mxu0
        %2331 = vmatprep.subr.mxu0 0.0
        %2332 = vmatpush1.msra.mxu0 0.0
        %2333 = vmatprep.subr.mxu0 0.0
        %2334 = vmatpush1.msra.mxu0 0.0
        %2335 = vmatprep.subr.mxu0 0.0
        %2336 = vmatpush1.msra.mxu0 0.0
        %2337 = vmatprep.subr.mxu0 0.0
        %2338 = vmatpush1.msra.mxu0 0.0
        %2339 = vmatprep.subr.mxu0 0.0
        %2340 = vmatpush1.msra.mxu0 0.0
        %2341 = vmatprep.subr.mxu0 0.0
        %2342 = vmatpush1.msra.mxu0 0.0
        %2343 = vmatprep.subr.mxu0 0.0
        %2344 = vmatpush1.msra.mxu0 0.0
        %2345 = vmatprep.subr.mxu0 0.0
        %2346 = vmatpush1.msra.mxu0 0.0
        %2347 = vmatprep.subr.mxu0 0.0
        %2348 = vmatpush1.msra.mxu0 0.0
        %2349 = vmatprep.subr.mxu0 0.0
        %2350 = vmatpush1.msra.mxu0 0.0
        %2351 = vmatprep.subr.mxu0 0.0
        %2352 = vmatpush1.msra.mxu0 0.0
        %2353 = vmatprep.subr.mxu0 0.0
        %2354 = vmatpush1.msra.mxu0 0.0
        %2355 = vmatprep.subr.mxu0 0.0
        %2356 = vmatpush1.msra.mxu0 0.0
        %2357 = vmatprep.subr.mxu0 0.0
        %v2358 = vand.u32 %v449, 4294901760
        %v2359 = vsub.f32 %v449, %v2358
        %2360 = vmatpush1.msra.mxu0 %v2359
        %2361 = vmatprep.subr.mxu0 0.0
        %v2362 = vand.u32 %v448, 4294901760
        %v2363 = vsub.f32 %v448, %v2362
        %2364 = vmatpush1.msra.mxu0 %v2363
        %2365 = vmatprep.subr.mxu0 0.0
        %v2366 = vand.u32 %v447, 4294901760
        %v2367 = vsub.f32 %v447, %v2366
        %2368 = vmatpush1.msra.mxu0 %v2367
        %2369 = vmatprep.subr.mxu0 0.0
        %2370 = vmatpush2.msra.mxu0 0.0
        %2371 = vmatprep.subr.mxu0 0.0
        %2372 = vmatpush2.msra.mxu0 0.0
        %2373 = vmatprep.subr.mxu0 0.0
        %2374 = vmatpush2.msra.mxu0 0.0
        %2375 = vmatprep.subr.mxu0 0.0
        %2376 = vmatpush2.msra.mxu0 0.0
        %2377 = vmatprep.subr.mxu0 0.0
        %2378 = vmatpush2.msra.mxu0 0.0
        %2379 = vmatprep.subr.mxu0 0.0
        %2380 = vmatpush2.msra.mxu0 0.0
        %2381 = vmatprep.subr.mxu0 0.0
        %2382 = vmatpush2.msra.mxu0 0.0
        %2383 = vmatprep.subr.mxu0 0.0
        %2384 = vmatpush2.msra.mxu0 0.0
        %2385 = vmatprep.subr.mxu0 0.0
        %2386 = vmatpush2.msra.mxu0 0.0
        %2387 = vmatprep.subr.mxu0 0.0
        %2388 = vmatpush2.msra.mxu0 0.0
        %2389 = vmatprep.subr.mxu0 0.0
        %2390 = vmatpush2.msra.mxu0 0.0
        %2391 = vmatprep.subr.mxu0 0.0
        %2392 = vmatpush2.msra.mxu0 0.0
        %2393 = vmatprep.subr.mxu0 0.0
        %2394 = vmatpush2.msra.mxu0 0.0
        %2395 = vmatprep.subr.mxu0 0.0
        %2396 = vmatpush2.msra.mxu0 0.0
        %2397 = vmatprep.subr.mxu0 0.0
        %2398 = vmatpush2.msra.mxu0 0.0
        %2399 = vmatprep.subr.mxu0 0.0
        %2400 = vmatpush2.msra.mxu0 0.0
        %2401 = vmatprep.mubr.f32.mxu0 0.0
        %v2402 = vand.u32 %v1880, 4294901760
        %v2403 = vsub.f32 %v1880, %v2402
        %2404 = vmatmul.mubr.f32.gmra.mxu0 %v2403
        %v2405 = vpop.f32.mrf.mxu0
        %v2406 = vadd.f32 %v2238, %v2405
        %v2407 = vpop.f32.mrf.mxu0
        %2408 = vmatprep.mubr.f32.mxu0 0.0
        %v2409 = vand.u32 %v1883, 4294901760
        %v2410 = vsub.f32 %v1883, %v2409
        %2411 = vmatmul.mubr.f32.gmra.mxu0 %v2410
        %v2412 = vpop.f32.mrf.mxu0
        %v2413 = vadd.f32 %v2244, %v2412
        %v2414 = vpop.f32.mrf.mxu0
        %2415 = vmatprep.mubr.f32.mxu0 0.0
        %v2416 = vand.u32 %v1886, 4294901760
        %v2417 = vsub.f32 %v1886, %v2416
        %2418 = vmatmul.mubr.f32.gmra.mxu0 %v2417
        %v2419 = vpop.f32.mrf.mxu0
        %v2420 = vadd.f32 %v2250, %v2419
        %v2421 = vpop.f32.mrf.mxu0
        %2422 = vmatprep.mubr.f32.mxu0 0.0
        %v2423 = vand.u32 %v1889, 4294901760
        %v2424 = vsub.f32 %v1889, %v2423
        %2425 = vmatmul.mubr.f32.gmra.mxu0 %v2424
        %v2426 = vpop.f32.mrf.mxu0
        %v2427 = vadd.f32 %v2256, %v2426
        %v2428 = vpop.f32.mrf.mxu0
        %2429 = vmatprep.mubr.f32.mxu0 0.0
        %v2430 = vand.u32 %v1892, 4294901760
        %v2431 = vsub.f32 %v1892, %v2430
        %2432 = vmatmul.mubr.f32.gmra.mxu0 %v2431
        %v2433 = vpop.f32.mrf.mxu0
        %v2434 = vadd.f32 %v2262, %v2433
        %v2435 = vpop.f32.mrf.mxu0
        %2436 = vmatprep.mubr.f32.mxu0 0.0
        %v2437 = vand.u32 %v1895, 4294901760
        %v2438 = vsub.f32 %v1895, %v2437
        %2439 = vmatmul.mubr.f32.gmra.mxu0 %v2438
        %v2440 = vpop.f32.mrf.mxu0
        %v2441 = vadd.f32 %v2268, %v2440
        %v2442 = vpop.f32.mrf.mxu0
        %2443 = vmatprep.mubr.f32.mxu0 0.0
        %v2444 = vand.u32 %v1898, 4294901760
        %v2445 = vsub.f32 %v1898, %v2444
        %2446 = vmatmul.mubr.f32.gmra.mxu0 %v2445
        %v2447 = vpop.f32.mrf.mxu0
        %v2448 = vadd.f32 %v2274, %v2447
        %v2449 = vpop.f32.mrf.mxu0
        %2450 = vmatprep.mubr.f32.mxu0 0.0
        %v2451 = vand.u32 %v1901, 4294901760
        %v2452 = vsub.f32 %v1901, %v2451
        %2453 = vmatmul.mubr.f32.gmra.mxu0 %v2452
        %v2454 = vpop.f32.mrf.mxu0
        %v2455 = vadd.f32 %v2280, %v2454
        %v2456 = vpop.f32.mrf.mxu0
        %2457 = vmatprep.mubr.f32.mxu0 0.0
        %v2458 = vand.u32 %v1904, 4294901760
        %v2459 = vsub.f32 %v1904, %v2458
        %2460 = vmatmul.mubr.f32.gmra.mxu0 %v2459
        %v2461 = vpop.f32.mrf.mxu0
        %v2462 = vadd.f32 %v2286, %v2461
        %v2463 = vpop.f32.mrf.mxu0
        %2464 = vmatprep.mubr.f32.mxu0 0.0
        %v2465 = vand.u32 %v1907, 4294901760
        %v2466 = vsub.f32 %v1907, %v2465
        %2467 = vmatmul.mubr.f32.gmra.mxu0 %v2466
        %v2468 = vpop.f32.mrf.mxu0
        %v2469 = vadd.f32 %v2292, %v2468
        %v2470 = vpop.f32.mrf.mxu0
        %2471 = vmatprep.mubr.f32.mxu0 0.0
        %v2472 = vand.u32 %v1910, 4294901760
        %v2473 = vsub.f32 %v1910, %v2472
        %2474 = vmatmul.mubr.f32.gmra.mxu0 %v2473
        %v2475 = vpop.f32.mrf.mxu0
        %v2476 = vadd.f32 %v2298, %v2475
        %v2477 = vpop.f32.mrf.mxu0
        %2478 = vmatprep.mubr.f32.mxu0 0.0
        %v2479 = vand.u32 %v1913, 4294901760
        %v2480 = vsub.f32 %v1913, %v2479
        %2481 = vmatmul.mubr.f32.gmra.mxu0 %v2480
        %v2482 = vpop.f32.mrf.mxu0
        %v2483 = vadd.f32 %v2304, %v2482
        %v2484 = vpop.f32.mrf.mxu0
        %2485 = vmatprep.mubr.f32.mxu0 0.0
        %v2486 = vand.u32 %v1916, 4294901760
        %v2487 = vsub.f32 %v1916, %v2486
        %2488 = vmatmul.mubr.f32.gmra.mxu0 %v2487
        %v2489 = vpop.f32.mrf.mxu0
        %v2490 = vadd.f32 %v2310, %v2489
        %v2491 = vpop.f32.mrf.mxu0
        %2492 = vmatprep.mubr.f32.mxu0 0.0
        %v2493 = vand.u32 %v1919, 4294901760
        %v2494 = vsub.f32 %v1919, %v2493
        %2495 = vmatmul.mubr.f32.gmra.mxu0 %v2494
        %v2496 = vpop.f32.mrf.mxu0
        %v2497 = vadd.f32 %v2316, %v2496
        %v2498 = vpop.f32.mrf.mxu0
        %2499 = vmatprep.mubr.f32.mxu0 0.0
        %v2500 = vand.u32 %v1922, 4294901760
        %v2501 = vsub.f32 %v1922, %v2500
        %2502 = vmatmul.mubr.f32.gmra.mxu0 %v2501
        %v2503 = vpop.f32.mrf.mxu0
        %v2504 = vadd.f32 %v2322, %v2503
        %v2505 = vpop.f32.mrf.mxu0
        %2506 = vmatprep.mubr.f32.mxu0 0.0
        %v2507 = vand.u32 %v1925, 4294901760
        %v2508 = vsub.f32 %v1925, %v2507
        %2509 = vmatmul.mubr.f32.gmra.mxu0 %v2508
        %v2510 = vpop.f32.mrf.mxu0
        %v2511 = vadd.f32 %v2328, %v2510
        %v2512 = vpop.f32.mrf.mxu0
        %2513 = vdwg.mxu0
        %2514 = vmatprep.subr.mxu0 0.0
        %2515 = vmatpush1.msra.mxu0 0.0
        %2516 = vmatprep.subr.mxu0 0.0
        %2517 = vmatpush1.msra.mxu0 0.0
        %2518 = vmatprep.subr.mxu0 0.0
        %2519 = vmatpush1.msra.mxu0 0.0
        %2520 = vmatprep.subr.mxu0 0.0
        %2521 = vmatpush1.msra.mxu0 0.0
        %2522 = vmatprep.subr.mxu0 0.0
        %2523 = vmatpush1.msra.mxu0 0.0
        %2524 = vmatprep.subr.mxu0 0.0
        %2525 = vmatpush1.msra.mxu0 0.0
        %2526 = vmatprep.subr.mxu0 0.0
        %2527 = vmatpush1.msra.mxu0 0.0
        %2528 = vmatprep.subr.mxu0 0.0
        %2529 = vmatpush1.msra.mxu0 0.0
        %2530 = vmatprep.subr.mxu0 0.0
        %2531 = vmatpush1.msra.mxu0 0.0
        %2532 = vmatprep.subr.mxu0 0.0
        %2533 = vmatpush1.msra.mxu0 0.0
        %2534 = vmatprep.subr.mxu0 0.0
        %2535 = vmatpush1.msra.mxu0 0.0
        %2536 = vmatprep.subr.mxu0 0.0
        %2537 = vmatpush1.msra.mxu0 0.0
        %2538 = vmatprep.subr.mxu0 0.0
        %2539 = vmatpush1.msra.mxu0 0.0
        %2540 = vmatprep.subr.mxu0 0.0
        %v2541 = vand.u32 %v449, 4294901760
        %2542 = vmatpush1.msra.mxu0 %v2541
        %2543 = vmatprep.subr.mxu0 0.0
        %v2544 = vand.u32 %v448, 4294901760
        %2545 = vmatpush1.msra.mxu0 %v2544
        %2546 = vmatprep.subr.mxu0 0.0
        %v2547 = vand.u32 %v447, 4294901760
        %2548 = vmatpush1.msra.mxu0 %v2547
        %2549 = vmatprep.subr.mxu0 0.0
        %2550 = vmatpush2.msra.mxu0 0.0
        %2551 = vmatprep.subr.mxu0 0.0
        %2552 = vmatpush2.msra.mxu0 0.0
        %2553 = vmatprep.subr.mxu0 0.0
        %2554 = vmatpush2.msra.mxu0 0.0
        %2555 = vmatprep.subr.mxu0 0.0
        %2556 = vmatpush2.msra.mxu0 0.0
        %2557 = vmatprep.subr.mxu0 0.0
        %2558 = vmatpush2.msra.mxu0 0.0
        %2559 = vmatprep.subr.mxu0 0.0
        %2560 = vmatpush2.msra.mxu0 0.0
        %2561 = vmatprep.subr.mxu0 0.0
        %2562 = vmatpush2.msra.mxu0 0.0
        %2563 = vmatprep.subr.mxu0 0.0
        %2564 = vmatpush2.msra.mxu0 0.0
        %2565 = vmatprep.subr.mxu0 0.0
        %2566 = vmatpush2.msra.mxu0 0.0
        %2567 = vmatprep.subr.mxu0 0.0
        %2568 = vmatpush2.msra.mxu0 0.0
        %2569 = vmatprep.subr.mxu0 0.0
        %2570 = vmatpush2.msra.mxu0 0.0
        %2571 = vmatprep.subr.mxu0 0.0
        %2572 = vmatpush2.msra.mxu0 0.0
        %2573 = vmatprep.subr.mxu0 0.0
        %2574 = vmatpush2.msra.mxu0 0.0
        %2575 = vmatprep.subr.mxu0 0.0
        %2576 = vmatpush2.msra.mxu0 0.0
        %2577 = vmatprep.subr.mxu0 0.0
        %2578 = vmatpush2.msra.mxu0 0.0
        %2579 = vmatprep.subr.mxu0 0.0
        %2580 = vmatpush2.msra.mxu0 0.0
        %2581 = vmatprep.mubr.f32.mxu0 0.0
        %v2582 = vand.u32 %v1880, 4294901760
        %v2583 = vsub.f32 %v1880, %v2582
        %v2584 = vand.u32 %v2583, 4294901760
        %2585 = vmatmul.mubr.f32.gmra.mxu0 %v2584
        %v2586 = vpop.f32.mrf.mxu0
        %v2587 = vadd.f32 %v2406, %v2586
        %v2588 = vpop.f32.mrf.mxu0
        %2589 = vmatprep.mubr.f32.mxu0 0.0
        %v2590 = vand.u32 %v1883, 4294901760
        %v2591 = vsub.f32 %v1883, %v2590
        %v2592 = vand.u32 %v2591, 4294901760
        %2593 = vmatmul.mubr.f32.gmra.mxu0 %v2592
        %v2594 = vpop.f32.mrf.mxu0
        %v2595 = vadd.f32 %v2413, %v2594
        %v2596 = vpop.f32.mrf.mxu0
        %2597 = vmatprep.mubr.f32.mxu0 0.0
        %v2598 = vand.u32 %v1886, 4294901760
        %v2599 = vsub.f32 %v1886, %v2598
        %v2600 = vand.u32 %v2599, 4294901760
        %2601 = vmatmul.mubr.f32.gmra.mxu0 %v2600
        %v2602 = vpop.f32.mrf.mxu0
        %v2603 = vadd.f32 %v2420, %v2602
        %v2604 = vpop.f32.mrf.mxu0
        %2605 = vmatprep.mubr.f32.mxu0 0.0
        %v2606 = vand.u32 %v1889, 4294901760
        %v2607 = vsub.f32 %v1889, %v2606
        %v2608 = vand.u32 %v2607, 4294901760
        %2609 = vmatmul.mubr.f32.gmra.mxu0 %v2608
        %v2610 = vpop.f32.mrf.mxu0
        %v2611 = vadd.f32 %v2427, %v2610
        %v2612 = vpop.f32.mrf.mxu0
        %2613 = vmatprep.mubr.f32.mxu0 0.0
        %v2614 = vand.u32 %v1892, 4294901760
        %v2615 = vsub.f32 %v1892, %v2614
        %v2616 = vand.u32 %v2615, 4294901760
        %2617 = vmatmul.mubr.f32.gmra.mxu0 %v2616
        %v2618 = vpop.f32.mrf.mxu0
        %v2619 = vadd.f32 %v2434, %v2618
        %v2620 = vpop.f32.mrf.mxu0
        %2621 = vmatprep.mubr.f32.mxu0 0.0
        %v2622 = vand.u32 %v1895, 4294901760
        %v2623 = vsub.f32 %v1895, %v2622
        %v2624 = vand.u32 %v2623, 4294901760
        %2625 = vmatmul.mubr.f32.gmra.mxu0 %v2624
        %v2626 = vpop.f32.mrf.mxu0
        %v2627 = vadd.f32 %v2441, %v2626
        %v2628 = vpop.f32.mrf.mxu0
        %2629 = vmatprep.mubr.f32.mxu0 0.0
        %v2630 = vand.u32 %v1898, 4294901760
        %v2631 = vsub.f32 %v1898, %v2630
        %v2632 = vand.u32 %v2631, 4294901760
        %2633 = vmatmul.mubr.f32.gmra.mxu0 %v2632
        %v2634 = vpop.f32.mrf.mxu0
        %v2635 = vadd.f32 %v2448, %v2634
        %v2636 = vpop.f32.mrf.mxu0
        %2637 = vmatprep.mubr.f32.mxu0 0.0
        %v2638 = vand.u32 %v1901, 4294901760
        %v2639 = vsub.f32 %v1901, %v2638
        %v2640 = vand.u32 %v2639, 4294901760
        %2641 = vmatmul.mubr.f32.gmra.mxu0 %v2640
        %v2642 = vpop.f32.mrf.mxu0
        %v2643 = vadd.f32 %v2455, %v2642
        %v2644 = vpop.f32.mrf.mxu0
        %2645 = vmatprep.mubr.f32.mxu0 0.0
        %v2646 = vand.u32 %v1904, 4294901760
        %v2647 = vsub.f32 %v1904, %v2646
        %v2648 = vand.u32 %v2647, 4294901760
        %2649 = vmatmul.mubr.f32.gmra.mxu0 %v2648
        %v2650 = vpop.f32.mrf.mxu0
        %v2651 = vadd.f32 %v2462, %v2650
        %v2652 = vpop.f32.mrf.mxu0
        %2653 = vmatprep.mubr.f32.mxu0 0.0
        %v2654 = vand.u32 %v1907, 4294901760
        %v2655 = vsub.f32 %v1907, %v2654
        %v2656 = vand.u32 %v2655, 4294901760
        %2657 = vmatmul.mubr.f32.gmra.mxu0 %v2656
        %v2658 = vpop.f32.mrf.mxu0
        %v2659 = vadd.f32 %v2469, %v2658
        %v2660 = vpop.f32.mrf.mxu0
        %2661 = vmatprep.mubr.f32.mxu0 0.0
        %v2662 = vand.u32 %v1910, 4294901760
        %v2663 = vsub.f32 %v1910, %v2662
        %v2664 = vand.u32 %v2663, 4294901760
        %2665 = vmatmul.mubr.f32.gmra.mxu0 %v2664
        %v2666 = vpop.f32.mrf.mxu0
        %v2667 = vadd.f32 %v2476, %v2666
        %v2668 = vpop.f32.mrf.mxu0
        %2669 = vmatprep.mubr.f32.mxu0 0.0
        %v2670 = vand.u32 %v1913, 4294901760
        %v2671 = vsub.f32 %v1913, %v2670
        %v2672 = vand.u32 %v2671, 4294901760
        %2673 = vmatmul.mubr.f32.gmra.mxu0 %v2672
        %v2674 = vpop.f32.mrf.mxu0
        %v2675 = vadd.f32 %v2483, %v2674
        %v2676 = vpop.f32.mrf.mxu0
        %2677 = vmatprep.mubr.f32.mxu0 0.0
        %v2678 = vand.u32 %v1916, 4294901760
        %v2679 = vsub.f32 %v1916, %v2678
        %v2680 = vand.u32 %v2679, 4294901760
        %2681 = vmatmul.mubr.f32.gmra.mxu0 %v2680
        %v2682 = vpop.f32.mrf.mxu0
        %v2683 = vadd.f32 %v2490, %v2682
        %v2684 = vpop.f32.mrf.mxu0
        %2685 = vmatprep.mubr.f32.mxu0 0.0
        %v2686 = vand.u32 %v1919, 4294901760
        %v2687 = vsub.f32 %v1919, %v2686
        %v2688 = vand.u32 %v2687, 4294901760
        %2689 = vmatmul.mubr.f32.gmra.mxu0 %v2688
        %v2690 = vpop.f32.mrf.mxu0
        %v2691 = vadd.f32 %v2497, %v2690
        %v2692 = vpop.f32.mrf.mxu0
        %2693 = vmatprep.mubr.f32.mxu0 0.0
        %v2694 = vand.u32 %v1922, 4294901760
        %v2695 = vsub.f32 %v1922, %v2694
        %v2696 = vand.u32 %v2695, 4294901760
        %2697 = vmatmul.mubr.f32.gmra.mxu0 %v2696
        %v2698 = vpop.f32.mrf.mxu0
        %v2699 = vadd.f32 %v2504, %v2698
        %v2700 = vpop.f32.mrf.mxu0
        %2701 = vmatprep.mubr.f32.mxu0 0.0
        %v2702 = vand.u32 %v1925, 4294901760
        %v2703 = vsub.f32 %v1925, %v2702
        %v2704 = vand.u32 %v2703, 4294901760
        %2705 = vmatmul.mubr.f32.gmra.mxu0 %v2704
        %v2706 = vpop.f32.mrf.mxu0
        %v2707 = vadd.f32 %v2511, %v2706
        %v2708 = vpop.f32.mrf.mxu0
        %2709 = vdwg.mxu0
        %2710 = vmatprep.subr.mxu0 0.0
        %2711 = vmatpush1.msra.mxu0 0.0
        %2712 = vmatprep.subr.mxu0 0.0
        %2713 = vmatpush1.msra.mxu0 0.0
        %2714 = vmatprep.subr.mxu0 0.0
        %2715 = vmatpush1.msra.mxu0 0.0
        %2716 = vmatprep.subr.mxu0 0.0
        %2717 = vmatpush1.msra.mxu0 0.0
        %2718 = vmatprep.subr.mxu0 0.0
        %2719 = vmatpush1.msra.mxu0 0.0
        %2720 = vmatprep.subr.mxu0 0.0
        %2721 = vmatpush1.msra.mxu0 0.0
        %2722 = vmatprep.subr.mxu0 0.0
        %2723 = vmatpush1.msra.mxu0 0.0
        %2724 = vmatprep.subr.mxu0 0.0
        %2725 = vmatpush1.msra.mxu0 0.0
        %2726 = vmatprep.subr.mxu0 0.0
        %2727 = vmatpush1.msra.mxu0 0.0
        %2728 = vmatprep.subr.mxu0 0.0
        %2729 = vmatpush1.msra.mxu0 0.0
        %2730 = vmatprep.subr.mxu0 0.0
        %2731 = vmatpush1.msra.mxu0 0.0
        %2732 = vmatprep.subr.mxu0 0.0
        %2733 = vmatpush1.msra.mxu0 0.0
        %2734 = vmatprep.subr.mxu0 0.0
        %2735 = vmatpush1.msra.mxu0 0.0
        %2736 = vmatprep.subr.mxu0 0.0
        %v2737 = vand.u32 %v449, 4294901760
        %v2738 = vsub.f32 %v449, %v2737
        %v2739 = vand.u32 %v2738, 4294901760
        %2740 = vmatpush1.msra.mxu0 %v2739
        %2741 = vmatprep.subr.mxu0 0.0
        %v2742 = vand.u32 %v448, 4294901760
        %v2743 = vsub.f32 %v448, %v2742
        %v2744 = vand.u32 %v2743, 4294901760
        %2745 = vmatpush1.msra.mxu0 %v2744
        %2746 = vmatprep.subr.mxu0 0.0
        %v2747 = vand.u32 %v447, 4294901760
        %v2748 = vsub.f32 %v447, %v2747
        %v2749 = vand.u32 %v2748, 4294901760
        %2750 = vmatpush1.msra.mxu0 %v2749
        %2751 = vmatprep.subr.mxu0 0.0
        %2752 = vmatpush2.msra.mxu0 0.0
        %2753 = vmatprep.subr.mxu0 0.0
        %2754 = vmatpush2.msra.mxu0 0.0
        %2755 = vmatprep.subr.mxu0 0.0
        %2756 = vmatpush2.msra.mxu0 0.0
        %2757 = vmatprep.subr.mxu0 0.0
        %2758 = vmatpush2.msra.mxu0 0.0
        %2759 = vmatprep.subr.mxu0 0.0
        %2760 = vmatpush2.msra.mxu0 0.0
        %2761 = vmatprep.subr.mxu0 0.0
        %2762 = vmatpush2.msra.mxu0 0.0
        %2763 = vmatprep.subr.mxu0 0.0
        %2764 = vmatpush2.msra.mxu0 0.0
        %2765 = vmatprep.subr.mxu0 0.0
        %2766 = vmatpush2.msra.mxu0 0.0
        %2767 = vmatprep.subr.mxu0 0.0
        %2768 = vmatpush2.msra.mxu0 0.0
        %2769 = vmatprep.subr.mxu0 0.0
        %2770 = vmatpush2.msra.mxu0 0.0
        %2771 = vmatprep.subr.mxu0 0.0
        %2772 = vmatpush2.msra.mxu0 0.0
        %2773 = vmatprep.subr.mxu0 0.0
        %2774 = vmatpush2.msra.mxu0 0.0
        %2775 = vmatprep.subr.mxu0 0.0
        %2776 = vmatpush2.msra.mxu0 0.0
        %2777 = vmatprep.subr.mxu0 0.0
        %2778 = vmatpush2.msra.mxu0 0.0
        %2779 = vmatprep.subr.mxu0 0.0
        %2780 = vmatpush2.msra.mxu0 0.0
        %2781 = vmatprep.subr.mxu0 0.0
        %2782 = vmatpush2.msra.mxu0 0.0
        %2783 = vmatprep.mubr.f32.mxu0 0.0
        %v2784 = vand.u32 %v1880, 4294901760
        %2785 = vmatmul.mubr.f32.gmra.mxu0 %v2784
        %v2786 = vpop.f32.mrf.mxu0
        %v2787 = vadd.f32 %v2587, %v2786
        %v2788 = vpop.f32.mrf.mxu0
        %2789 = vmatprep.mubr.f32.mxu0 0.0
        %v2790 = vand.u32 %v1883, 4294901760
        %2791 = vmatmul.mubr.f32.gmra.mxu0 %v2790
        %v2792 = vpop.f32.mrf.mxu0
        %v2793 = vadd.f32 %v2595, %v2792
        %v2794 = vpop.f32.mrf.mxu0
        %2795 = vmatprep.mubr.f32.mxu0 0.0
        %v2796 = vand.u32 %v1886, 4294901760
        %2797 = vmatmul.mubr.f32.gmra.mxu0 %v2796
        %v2798 = vpop.f32.mrf.mxu0
        %v2799 = vadd.f32 %v2603, %v2798
        %v2800 = vpop.f32.mrf.mxu0
        %2801 = vmatprep.mubr.f32.mxu0 0.0
        %v2802 = vand.u32 %v1889, 4294901760
        %2803 = vmatmul.mubr.f32.gmra.mxu0 %v2802
        %v2804 = vpop.f32.mrf.mxu0
        %v2805 = vadd.f32 %v2611, %v2804
        %v2806 = vpop.f32.mrf.mxu0
        %2807 = vmatprep.mubr.f32.mxu0 0.0
        %v2808 = vand.u32 %v1892, 4294901760
        %2809 = vmatmul.mubr.f32.gmra.mxu0 %v2808
        %v2810 = vpop.f32.mrf.mxu0
        %v2811 = vadd.f32 %v2619, %v2810
        %v2812 = vpop.f32.mrf.mxu0
        %2813 = vmatprep.mubr.f32.mxu0 0.0
        %v2814 = vand.u32 %v1895, 4294901760
        %2815 = vmatmul.mubr.f32.gmra.mxu0 %v2814
        %v2816 = vpop.f32.mrf.mxu0
        %v2817 = vadd.f32 %v2627, %v2816
        %v2818 = vpop.f32.mrf.mxu0
        %2819 = vmatprep.mubr.f32.mxu0 0.0
        %v2820 = vand.u32 %v1898, 4294901760
        %2821 = vmatmul.mubr.f32.gmra.mxu0 %v2820
        %v2822 = vpop.f32.mrf.mxu0
        %v2823 = vadd.f32 %v2635, %v2822
        %v2824 = vpop.f32.mrf.mxu0
        %2825 = vmatprep.mubr.f32.mxu0 0.0
        %v2826 = vand.u32 %v1901, 4294901760
        %2827 = vmatmul.mubr.f32.gmra.mxu0 %v2826
        %v2828 = vpop.f32.mrf.mxu0
        %v2829 = vadd.f32 %v2643, %v2828
        %v2830 = vpop.f32.mrf.mxu0
        %2831 = vmatprep.mubr.f32.mxu0 0.0
        %v2832 = vand.u32 %v1904, 4294901760
        %2833 = vmatmul.mubr.f32.gmra.mxu0 %v2832
        %v2834 = vpop.f32.mrf.mxu0
        %v2835 = vadd.f32 %v2651, %v2834
        %v2836 = vpop.f32.mrf.mxu0
        %2837 = vmatprep.mubr.f32.mxu0 0.0
        %v2838 = vand.u32 %v1907, 4294901760
        %2839 = vmatmul.mubr.f32.gmra.mxu0 %v2838
        %v2840 = vpop.f32.mrf.mxu0
        %v2841 = vadd.f32 %v2659, %v2840
        %v2842 = vpop.f32.mrf.mxu0
        %2843 = vmatprep.mubr.f32.mxu0 0.0
        %v2844 = vand.u32 %v1910, 4294901760
        %2845 = vmatmul.mubr.f32.gmra.mxu0 %v2844
        %v2846 = vpop.f32.mrf.mxu0
        %v2847 = vadd.f32 %v2667, %v2846
        %v2848 = vpop.f32.mrf.mxu0
        %2849 = vmatprep.mubr.f32.mxu0 0.0
        %v2850 = vand.u32 %v1913, 4294901760
        %2851 = vmatmul.mubr.f32.gmra.mxu0 %v2850
        %v2852 = vpop.f32.mrf.mxu0
        %v2853 = vadd.f32 %v2675, %v2852
        %v2854 = vpop.f32.mrf.mxu0
        %2855 = vmatprep.mubr.f32.mxu0 0.0
        %v2856 = vand.u32 %v1916, 4294901760
        %2857 = vmatmul.mubr.f32.gmra.mxu0 %v2856
        %v2858 = vpop.f32.mrf.mxu0
        %v2859 = vadd.f32 %v2683, %v2858
        %v2860 = vpop.f32.mrf.mxu0
        %2861 = vmatprep.mubr.f32.mxu0 0.0
        %v2862 = vand.u32 %v1919, 4294901760
        %2863 = vmatmul.mubr.f32.gmra.mxu0 %v2862
        %v2864 = vpop.f32.mrf.mxu0
        %v2865 = vadd.f32 %v2691, %v2864
        %v2866 = vpop.f32.mrf.mxu0
        %2867 = vmatprep.mubr.f32.mxu0 0.0
        %v2868 = vand.u32 %v1922, 4294901760
        %2869 = vmatmul.mubr.f32.gmra.mxu0 %v2868
        %v2870 = vpop.f32.mrf.mxu0
        %v2871 = vadd.f32 %v2699, %v2870
        %v2872 = vpop.f32.mrf.mxu0
        %2873 = vmatprep.mubr.f32.mxu0 0.0
        %v2874 = vand.u32 %v1925, 4294901760
        %2875 = vmatmul.mubr.f32.gmra.mxu0 %v2874
        %v2876 = vpop.f32.mrf.mxu0
        %v2877 = vadd.f32 %v2707, %v2876
        %v2878 = vpop.f32.mrf.mxu0
        %2879 = vdwg.mxu0
        %2880 = vmatprep.subr.mxu0 0.0
        %2881 = vmatpush1.msra.mxu0 0.0
        %2882 = vmatprep.subr.mxu0 0.0
        %2883 = vmatpush1.msra.mxu0 0.0
        %2884 = vmatprep.subr.mxu0 0.0
        %2885 = vmatpush1.msra.mxu0 0.0
        %2886 = vmatprep.subr.mxu0 0.0
        %2887 = vmatpush1.msra.mxu0 0.0
        %2888 = vmatprep.subr.mxu0 0.0
        %2889 = vmatpush1.msra.mxu0 0.0
        %2890 = vmatprep.subr.mxu0 0.0
        %2891 = vmatpush1.msra.mxu0 0.0
        %2892 = vmatprep.subr.mxu0 0.0
        %2893 = vmatpush1.msra.mxu0 0.0
        %2894 = vmatprep.subr.mxu0 0.0
        %2895 = vmatpush1.msra.mxu0 0.0
        %2896 = vmatprep.subr.mxu0 0.0
        %2897 = vmatpush1.msra.mxu0 0.0
        %2898 = vmatprep.subr.mxu0 0.0
        %2899 = vmatpush1.msra.mxu0 0.0
        %2900 = vmatprep.subr.mxu0 0.0
        %2901 = vmatpush1.msra.mxu0 0.0
        %2902 = vmatprep.subr.mxu0 0.0
        %2903 = vmatpush1.msra.mxu0 0.0
        %2904 = vmatprep.subr.mxu0 0.0
        %2905 = vmatpush1.msra.mxu0 0.0
        %2906 = vmatprep.subr.mxu0 0.0
        %v2907 = vand.u32 %v449, 4294901760
        %2908 = vmatpush1.msra.mxu0 %v2907
        %2909 = vmatprep.subr.mxu0 0.0
        %v2910 = vand.u32 %v448, 4294901760
        %2911 = vmatpush1.msra.mxu0 %v2910
        %2912 = vmatprep.subr.mxu0 0.0
        %v2913 = vand.u32 %v447, 4294901760
        %2914 = vmatpush1.msra.mxu0 %v2913
        %2915 = vmatprep.subr.mxu0 0.0
        %2916 = vmatpush2.msra.mxu0 0.0
        %2917 = vmatprep.subr.mxu0 0.0
        %2918 = vmatpush2.msra.mxu0 0.0
        %2919 = vmatprep.subr.mxu0 0.0
        %2920 = vmatpush2.msra.mxu0 0.0
        %2921 = vmatprep.subr.mxu0 0.0
        %2922 = vmatpush2.msra.mxu0 0.0
        %2923 = vmatprep.subr.mxu0 0.0
        %2924 = vmatpush2.msra.mxu0 0.0
        %2925 = vmatprep.subr.mxu0 0.0
        %2926 = vmatpush2.msra.mxu0 0.0
        %2927 = vmatprep.subr.mxu0 0.0
        %2928 = vmatpush2.msra.mxu0 0.0
        %2929 = vmatprep.subr.mxu0 0.0
        %2930 = vmatpush2.msra.mxu0 0.0
        %2931 = vmatprep.subr.mxu0 0.0
        %2932 = vmatpush2.msra.mxu0 0.0
        %2933 = vmatprep.subr.mxu0 0.0
        %2934 = vmatpush2.msra.mxu0 0.0
        %2935 = vmatprep.subr.mxu0 0.0
        %2936 = vmatpush2.msra.mxu0 0.0
        %2937 = vmatprep.subr.mxu0 0.0
        %2938 = vmatpush2.msra.mxu0 0.0
        %2939 = vmatprep.subr.mxu0 0.0
        %2940 = vmatpush2.msra.mxu0 0.0
        %2941 = vmatprep.subr.mxu0 0.0
        %2942 = vmatpush2.msra.mxu0 0.0
        %2943 = vmatprep.subr.mxu0 0.0
        %2944 = vmatpush2.msra.mxu0 0.0
        %2945 = vmatprep.subr.mxu0 0.0
        %2946 = vmatpush2.msra.mxu0 0.0
        %2947 = vmatprep.mubr.f32.mxu0 0.0
        %v2948 = vand.u32 %v1880, 4294901760
        %2949 = vmatmul.mubr.f32.gmra.mxu0 %v2948
        %v2950 = vpop.f32.mrf.mxu0
        %v2951 = vadd.f32 %v2787, %v2950
        %v2952 = vpop.f32.mrf.mxu0
        %2953 = vmatprep.mubr.f32.mxu0 0.0
        %v2954 = vand.u32 %v1883, 4294901760
        %2955 = vmatmul.mubr.f32.gmra.mxu0 %v2954
        %v2956 = vpop.f32.mrf.mxu0
        %v2957 = vadd.f32 %v2793, %v2956
        %v2958 = vpop.f32.mrf.mxu0
        %2959 = vmatprep.mubr.f32.mxu0 0.0
        %v2960 = vand.u32 %v1886, 4294901760
        %2961 = vmatmul.mubr.f32.gmra.mxu0 %v2960
        %v2962 = vpop.f32.mrf.mxu0
        %v2963 = vadd.f32 %v2799, %v2962
        %v2964 = vpop.f32.mrf.mxu0
        %2965 = vmatprep.mubr.f32.mxu0 0.0
        %v2966 = vand.u32 %v1889, 4294901760
        %2967 = vmatmul.mubr.f32.gmra.mxu0 %v2966
        %v2968 = vpop.f32.mrf.mxu0
        %v2969 = vadd.f32 %v2805, %v2968
        %v2970 = vpop.f32.mrf.mxu0
        %2971 = vmatprep.mubr.f32.mxu0 0.0
        %v2972 = vand.u32 %v1892, 4294901760
        %2973 = vmatmul.mubr.f32.gmra.mxu0 %v2972
        %v2974 = vpop.f32.mrf.mxu0
        %v2975 = vadd.f32 %v2811, %v2974
        %v2976 = vpop.f32.mrf.mxu0
        %2977 = vmatprep.mubr.f32.mxu0 0.0
        %v2978 = vand.u32 %v1895, 4294901760
        %2979 = vmatmul.mubr.f32.gmra.mxu0 %v2978
        %v2980 = vpop.f32.mrf.mxu0
        %v2981 = vadd.f32 %v2817, %v2980
        %v2982 = vpop.f32.mrf.mxu0
        %2983 = vmatprep.mubr.f32.mxu0 0.0
        %v2984 = vand.u32 %v1898, 4294901760
        %2985 = vmatmul.mubr.f32.gmra.mxu0 %v2984
        %v2986 = vpop.f32.mrf.mxu0
        %v2987 = vadd.f32 %v2823, %v2986
        %v2988 = vpop.f32.mrf.mxu0
        %2989 = vmatprep.mubr.f32.mxu0 0.0
        %v2990 = vand.u32 %v1901, 4294901760
        %2991 = vmatmul.mubr.f32.gmra.mxu0 %v2990
        %v2992 = vpop.f32.mrf.mxu0
        %v2993 = vadd.f32 %v2829, %v2992
        %v2994 = vpop.f32.mrf.mxu0
        %2995 = vmatprep.mubr.f32.mxu0 0.0
        %v2996 = vand.u32 %v1904, 4294901760
        %2997 = vmatmul.mubr.f32.gmra.mxu0 %v2996
        %v2998 = vpop.f32.mrf.mxu0
        %v2999 = vadd.f32 %v2835, %v2998
        %v3000 = vpop.f32.mrf.mxu0
        %3001 = vmatprep.mubr.f32.mxu0 0.0
        %v3002 = vand.u32 %v1907, 4294901760
        %3003 = vmatmul.mubr.f32.gmra.mxu0 %v3002
        %v3004 = vpop.f32.mrf.mxu0
        %v3005 = vadd.f32 %v2841, %v3004
        %v3006 = vpop.f32.mrf.mxu0
        %3007 = vmatprep.mubr.f32.mxu0 0.0
        %v3008 = vand.u32 %v1910, 4294901760
        %3009 = vmatmul.mubr.f32.gmra.mxu0 %v3008
        %v3010 = vpop.f32.mrf.mxu0
        %v3011 = vadd.f32 %v2847, %v3010
        %v3012 = vpop.f32.mrf.mxu0
        %3013 = vmatprep.mubr.f32.mxu0 0.0
        %v3014 = vand.u32 %v1913, 4294901760
        %3015 = vmatmul.mubr.f32.gmra.mxu0 %v3014
        %v3016 = vpop.f32.mrf.mxu0
        %v3017 = vadd.f32 %v2853, %v3016
        %v3018 = vpop.f32.mrf.mxu0
        %3019 = vmatprep.mubr.f32.mxu0 0.0
        %v3020 = vand.u32 %v1916, 4294901760
        %3021 = vmatmul.mubr.f32.gmra.mxu0 %v3020
        %v3022 = vpop.f32.mrf.mxu0
        %v3023 = vadd.f32 %v2859, %v3022
        %v3024 = vpop.f32.mrf.mxu0
        %3025 = vmatprep.mubr.f32.mxu0 0.0
        %v3026 = vand.u32 %v1919, 4294901760
        %3027 = vmatmul.mubr.f32.gmra.mxu0 %v3026
        %v3028 = vpop.f32.mrf.mxu0
        %v3029 = vadd.f32 %v2865, %v3028
        %v3030 = vpop.f32.mrf.mxu0
        %3031 = vmatprep.mubr.f32.mxu0 0.0
        %v3032 = vand.u32 %v1922, 4294901760
        %3033 = vmatmul.mubr.f32.gmra.mxu0 %v3032
        %v3034 = vpop.f32.mrf.mxu0
        %v3035 = vadd.f32 %v2871, %v3034
        %v3036 = vpop.f32.mrf.mxu0
        %3037 = vmatprep.mubr.f32.mxu0 0.0
        %v3038 = vand.u32 %v1925, 4294901760
        %3039 = vmatmul.mubr.f32.gmra.mxu0 %v3038
        %v3040 = vpop.f32.mrf.mxu0
        %v3041 = vadd.f32 %v2877, %v3040
        %v3042 = vpop.f32.mrf.mxu0
        %3043 = vdwg.mxu0
        %s3044 = sadd.s32 %s184, 2
        %s3045 = smul.u32 %s3044, 24
        %s3046 = scalar_lea.vmem %s182, %s3045
        %v3047 = vld [vmem:[%s3046] sm:$0xff]
        %v3048 = vld [vmem:[%s3046 + $0x8] sm:$0xff]
        %v3049 = vld [vmem:[%s3046 + $0x10] sm:$0x3]
        %v3050 = vld [vmem:[%s3046 + $0x18] sm:$0xff]
        %v3051 = vld [vmem:[%s3046 + $0x20] sm:$0xff]
        %v3052 = vld [vmem:[%s3046 + $0x28] sm:$0x3]
        %v3053 = vld [vmem:[%s3046 + $0x30] sm:$0xff]
        %v3054 = vld [vmem:[%s3046 + $0x38] sm:$0xff]
        %v3055 = vld [vmem:[%s3046 + $0x40] sm:$0x3]
        %v3056 = vld [vmem:[%s3046 + $0x48] sm:$0xff]
        %v3057 = vld [vmem:[%s3046 + $0x50] sm:$0xff]
        %v3058 = vld [vmem:[%s3046 + $0x58] sm:$0x3]
        %v3059 = vld [vmem:[%s3046 + $0x60] sm:$0xff]
        %v3060 = vld [vmem:[%s3046 + $0x68] sm:$0xff]
        %v3061 = vld [vmem:[%s3046 + $0x70] sm:$0x3]
        %v3062 = vld [vmem:[%s3046 + $0x78] sm:$0xff]
        %v3063 = vld [vmem:[%s3046 + $0x80] sm:$0xff]
        %v3064 = vld [vmem:[%s3046 + $0x88] sm:$0x3]
        %v3065 = vld [vmem:[%s3046 + $0x90] sm:$0xff]
        %v3066 = vld [vmem:[%s3046 + $0x98] sm:$0xff]
        %v3067 = vld [vmem:[%s3046 + $0xa0] sm:$0x3]
        %v3068 = vld [vmem:[%s3046 + $0xa8] sm:$0xff]
        %v3069 = vld [vmem:[%s3046 + $0xb0] sm:$0xff]
        %v3070 = vld [vmem:[%s3046 + $0xb8] sm:$0x3]
        %v3095 = vrot.slane %v3047, 1
        %v3096 = vrot.slane %v3048, 1
        %v3097 = vsel %vm235, %v3095, %v3096
        %v3098 = vrot.slane %v3049, 1
        %v3099 = vsel %vm235, %v3096, %v3098
        %v3100 = vrot.slane %v3050, 1
        %v3101 = vrot.slane %v3051, 1
        %v3102 = vsel %vm235, %v3100, %v3101
        %v3103 = vrot.slane %v3052, 1
        %v3104 = vsel %vm235, %v3101, %v3103
        %v3105 = vrot.slane %v3053, 1
        %v3106 = vrot.slane %v3054, 1
        %v3107 = vsel %vm235, %v3105, %v3106
        %v3108 = vrot.slane %v3055, 1
        %v3109 = vsel %vm235, %v3106, %v3108
        %v3110 = vrot.slane %v3056, 1
        %v3111 = vrot.slane %v3057, 1
        %v3112 = vsel %vm235, %v3110, %v3111
        %v3113 = vrot.slane %v3058, 1
        %v3114 = vsel %vm235, %v3111, %v3113
        %v3115 = vrot.slane %v3059, 1
        %v3116 = vrot.slane %v3060, 1
        %v3117 = vsel %vm235, %v3115, %v3116
        %v3118 = vrot.slane %v3061, 1
        %v3119 = vsel %vm235, %v3116, %v3118
        %v3120 = vrot.slane %v3062, 1
        %v3121 = vrot.slane %v3063, 1
        %v3122 = vsel %vm235, %v3120, %v3121
        %v3123 = vrot.slane %v3064, 1
        %v3124 = vsel %vm235, %v3121, %v3123
        %v3125 = vrot.slane %v3065, 1
        %v3126 = vrot.slane %v3066, 1
        %v3127 = vsel %vm235, %v3125, %v3126
        %v3128 = vrot.slane %v3067, 1
        %v3129 = vsel %vm235, %v3126, %v3128
        %v3130 = vrot.slane %v3068, 1
        %v3131 = vrot.slane %v3069, 1
        %v3132 = vsel %vm235, %v3130, %v3131
        %v3133 = vrot.slane %v3070, 1
        %v3134 = vsel %vm235, %v3131, %v3133
        %3135 = vrot.lane.b32.xlu0 %v3097, 8
        %v3136 = vpop.permute.xlu0 %3135
        %3137 = vrot.lane.b32.xlu0 %v3099, 8
        %v3138 = vpop.permute.xlu0 %3137
        %3139 = vrot.lane.b32.xlu0 %v3102, 8
        %v3140 = vpop.permute.xlu0 %3139
        %3141 = vrot.lane.b32.xlu0 %v3104, 8
        %v3142 = vpop.permute.xlu0 %3141
        %3143 = vrot.lane.b32.xlu0 %v3107, 8
        %v3144 = vpop.permute.xlu0 %3143
        %3145 = vrot.lane.b32.xlu0 %v3109, 8
        %v3146 = vpop.permute.xlu0 %3145
        %3147 = vrot.lane.b32.xlu0 %v3112, 8
        %v3148 = vpop.permute.xlu0 %3147
        %3149 = vrot.lane.b32.xlu0 %v3114, 8
        %v3150 = vpop.permute.xlu0 %3149
        %3151 = vrot.lane.b32.xlu0 %v3117, 8
        %v3152 = vpop.permute.xlu0 %3151
        %3153 = vrot.lane.b32.xlu0 %v3119, 8
        %v3154 = vpop.permute.xlu0 %3153
        %3155 = vrot.lane.b32.xlu0 %v3122, 8
        %v3156 = vpop.permute.xlu0 %3155
        %3157 = vrot.lane.b32.xlu0 %v3124, 8
        %v3158 = vpop.permute.xlu0 %3157
        %3159 = vrot.lane.b32.xlu0 %v3127, 8
        %v3160 = vpop.permute.xlu0 %3159
        %3161 = vrot.lane.b32.xlu0 %v3129, 8
        %v3162 = vpop.permute.xlu0 %3161
        %3163 = vrot.lane.b32.xlu0 %v3132, 8
        %v3164 = vpop.permute.xlu0 %3163
        %3165 = vrot.lane.b32.xlu0 %v3134, 8
        %v3166 = vpop.permute.xlu0 %3165
        %v3183 = vrot.slane %v3047, 2
        %v3184 = vrot.slane %v3048, 2
        %v3185 = vsel %vm324, %v3183, %v3184
        %v3186 = vrot.slane %v3049, 2
        %v3187 = vsel %vm324, %v3184, %v3186
        %v3188 = vrot.slane %v3050, 2
        %v3189 = vrot.slane %v3051, 2
        %v3190 = vsel %vm324, %v3188, %v3189
        %v3191 = vrot.slane %v3052, 2
        %v3192 = vsel %vm324, %v3189, %v3191
        %v3193 = vrot.slane %v3053, 2
        %v3194 = vrot.slane %v3054, 2
        %v3195 = vsel %vm324, %v3193, %v3194
        %v3196 = vrot.slane %v3055, 2
        %v3197 = vsel %vm324, %v3194, %v3196
        %v3198 = vrot.slane %v3056, 2
        %v3199 = vrot.slane %v3057, 2
        %v3200 = vsel %vm324, %v3198, %v3199
        %v3201 = vrot.slane %v3058, 2
        %v3202 = vsel %vm324, %v3199, %v3201
        %v3203 = vrot.slane %v3059, 2
        %v3204 = vrot.slane %v3060, 2
        %v3205 = vsel %vm324, %v3203, %v3204
        %v3206 = vrot.slane %v3061, 2
        %v3207 = vsel %vm324, %v3204, %v3206
        %v3208 = vrot.slane %v3062, 2
        %v3209 = vrot.slane %v3063, 2
        %v3210 = vsel %vm324, %v3208, %v3209
        %v3211 = vrot.slane %v3064, 2
        %v3212 = vsel %vm324, %v3209, %v3211
        %v3213 = vrot.slane %v3065, 2
        %v3214 = vrot.slane %v3066, 2
        %v3215 = vsel %vm324, %v3213, %v3214
        %v3216 = vrot.slane %v3067, 2
        %v3217 = vsel %vm324, %v3214, %v3216
        %v3218 = vrot.slane %v3068, 2
        %v3219 = vrot.slane %v3069, 2
        %v3220 = vsel %vm324, %v3218, %v3219
        %v3221 = vrot.slane %v3070, 2
        %v3222 = vsel %vm324, %v3219, %v3221
        %3223 = vrot.lane.b32.xlu0 %v3185, 16
        %v3224 = vpop.permute.xlu0 %3223
        %3225 = vrot.lane.b32.xlu0 %v3187, 16
        %v3226 = vpop.permute.xlu0 %3225
        %3227 = vrot.lane.b32.xlu0 %v3190, 16
        %v3228 = vpop.permute.xlu0 %3227
        %3229 = vrot.lane.b32.xlu0 %v3192, 16
        %v3230 = vpop.permute.xlu0 %3229
        %3231 = vrot.lane.b32.xlu0 %v3195, 16
        %v3232 = vpop.permute.xlu0 %3231
        %3233 = vrot.lane.b32.xlu0 %v3197, 16
        %v3234 = vpop.permute.xlu0 %3233
        %3235 = vrot.lane.b32.xlu0 %v3200, 16
        %v3236 = vpop.permute.xlu0 %3235
        %3237 = vrot.lane.b32.xlu0 %v3202, 16
        %v3238 = vpop.permute.xlu0 %3237
        %3239 = vrot.lane.b32.xlu0 %v3205, 16
        %v3240 = vpop.permute.xlu0 %3239
        %3241 = vrot.lane.b32.xlu0 %v3207, 16
        %v3242 = vpop.permute.xlu0 %3241
        %3243 = vrot.lane.b32.xlu0 %v3210, 16
        %v3244 = vpop.permute.xlu0 %3243
        %3245 = vrot.lane.b32.xlu0 %v3212, 16
        %v3246 = vpop.permute.xlu0 %3245
        %3247 = vrot.lane.b32.xlu0 %v3215, 16
        %v3248 = vpop.permute.xlu0 %3247
        %3249 = vrot.lane.b32.xlu0 %v3217, 16
        %v3250 = vpop.permute.xlu0 %3249
        %3251 = vrot.lane.b32.xlu0 %v3220, 16
        %v3252 = vpop.permute.xlu0 %3251
        %3253 = vrot.lane.b32.xlu0 %v3222, 16
        %v3254 = vpop.permute.xlu0 %3253
        %v3271 = vsel %vm413, %v3047, %v3136
        %v3272 = vsel %vm413, %v3048, %v3138
        %v3273 = vsel %vm413, %v3050, %v3140
        %v3274 = vsel %vm413, %v3051, %v3142
        %v3275 = vsel %vm413, %v3053, %v3144
        %v3276 = vsel %vm413, %v3054, %v3146
        %v3277 = vsel %vm413, %v3056, %v3148
        %v3278 = vsel %vm413, %v3057, %v3150
        %v3279 = vsel %vm413, %v3059, %v3152
        %v3280 = vsel %vm413, %v3060, %v3154
        %v3281 = vsel %vm413, %v3062, %v3156
        %v3282 = vsel %vm413, %v3063, %v3158
        %v3283 = vsel %vm413, %v3065, %v3160
        %v3284 = vsel %vm413, %v3066, %v3162
        %v3285 = vsel %vm413, %v3068, %v3164
        %v3286 = vsel %vm413, %v3069, %v3166
        %v3287 = vsel %vm430, %v3271, %v3224
        %v3288 = vsel %vm430, %v3272, %v3226
        %v3289 = vsel %vm430, %v3273, %v3228
        %v3290 = vsel %vm430, %v3274, %v3230
        %v3291 = vsel %vm430, %v3275, %v3232
        %v3292 = vsel %vm430, %v3276, %v3234
        %v3293 = vsel %vm430, %v3277, %v3236
        %v3294 = vsel %vm430, %v3278, %v3238
        %v3295 = vsel %vm430, %v3279, %v3240
        %v3296 = vsel %vm430, %v3280, %v3242
        %v3297 = vsel %vm430, %v3281, %v3244
        %v3298 = vsel %vm430, %v3282, %v3246
        %v3299 = vsel %vm430, %v3283, %v3248
        %v3300 = vsel %vm430, %v3284, %v3250
        %v3301 = vsel %vm430, %v3285, %v3252
        %v3302 = vsel %vm430, %v3286, %v3254
        %s3303 = scalar_lea.vmem %s1, 48
        %v3304 = vld [vmem:[%s3303] sm:$0xff]
        %v3305 = vld [vmem:[%s3303 + $0x8] sm:$0xff]
        %v3306 = vld [vmem:[%s3303 + $0x10] sm:$0xff]
        %v3308 = vsel %vm713, %v3287, 0
        %v3311 = vsel %vm713, %v3288, 0
        %v3314 = vsel %vm713, %v3289, 0
        %v3317 = vsel %vm713, %v3290, 0
        %v3320 = vsel %vm713, %v3291, 0
        %v3323 = vsel %vm713, %v3292, 0
        %v3326 = vsel %vm713, %v3293, 0
        %v3329 = vsel %vm713, %v3294, 0
        %v3332 = vsel %vm713, %v3295, 0
        %v3335 = vsel %vm713, %v3296, 0
        %v3338 = vsel %vm713, %v3297, 0
        %v3341 = vsel %vm713, %v3298, 0
        %v3344 = vsel %vm713, %v3299, 0
        %v3347 = vsel %vm713, %v3300, 0
        %v3350 = vsel %vm713, %v3301, 0
        %v3353 = vsel %vm713, %v3302, 0
        %3355 = vmatprep.subr.mxu0 0.0
        %3356 = vmatpush1.msra.mxu0 0.0
        %3357 = vmatprep.subr.mxu0 0.0
        %3358 = vmatpush1.msra.mxu0 0.0
        %3359 = vmatprep.subr.mxu0 0.0
        %3360 = vmatpush1.msra.mxu0 0.0
        %3361 = vmatprep.subr.mxu0 0.0
        %3362 = vmatpush1.msra.mxu0 0.0
        %3363 = vmatprep.subr.mxu0 0.0
        %3364 = vmatpush1.msra.mxu0 0.0
        %3365 = vmatprep.subr.mxu0 0.0
        %3366 = vmatpush1.msra.mxu0 0.0
        %3367 = vmatprep.subr.mxu0 0.0
        %3368 = vmatpush1.msra.mxu0 0.0
        %3369 = vmatprep.subr.mxu0 0.0
        %3370 = vmatpush1.msra.mxu0 0.0
        %3371 = vmatprep.subr.mxu0 0.0
        %3372 = vmatpush1.msra.mxu0 0.0
        %3373 = vmatprep.subr.mxu0 0.0
        %3374 = vmatpush1.msra.mxu0 0.0
        %3375 = vmatprep.subr.mxu0 0.0
        %3376 = vmatpush1.msra.mxu0 0.0
        %3377 = vmatprep.subr.mxu0 0.0
        %3378 = vmatpush1.msra.mxu0 0.0
        %3379 = vmatprep.subr.mxu0 0.0
        %3380 = vmatpush1.msra.mxu0 0.0
        %3381 = vmatprep.subr.mxu0 0.0
        %v3382 = vand.u32 %v3306, 4294901760
        %3383 = vmatpush1.msra.mxu0 %v3382
        %3384 = vmatprep.subr.mxu0 0.0
        %v3385 = vand.u32 %v3305, 4294901760
        %3386 = vmatpush1.msra.mxu0 %v3385
        %3387 = vmatprep.subr.mxu0 0.0
        %v3388 = vand.u32 %v3304, 4294901760
        %3389 = vmatpush1.msra.mxu0 %v3388
        %3390 = vmatprep.subr.mxu0 0.0
        %3391 = vmatpush2.msra.mxu0 0.0
        %3392 = vmatprep.subr.mxu0 0.0
        %3393 = vmatpush2.msra.mxu0 0.0
        %3394 = vmatprep.subr.mxu0 0.0
        %3395 = vmatpush2.msra.mxu0 0.0
        %3396 = vmatprep.subr.mxu0 0.0
        %3397 = vmatpush2.msra.mxu0 0.0
        %3398 = vmatprep.subr.mxu0 0.0
        %3399 = vmatpush2.msra.mxu0 0.0
        %3400 = vmatprep.subr.mxu0 0.0
        %3401 = vmatpush2.msra.mxu0 0.0
        %3402 = vmatprep.subr.mxu0 0.0
        %3403 = vmatpush2.msra.mxu0 0.0
        %3404 = vmatprep.subr.mxu0 0.0
        %3405 = vmatpush2.msra.mxu0 0.0
        %3406 = vmatprep.subr.mxu0 0.0
        %3407 = vmatpush2.msra.mxu0 0.0
        %3408 = vmatprep.subr.mxu0 0.0
        %3409 = vmatpush2.msra.mxu0 0.0
        %3410 = vmatprep.subr.mxu0 0.0
        %3411 = vmatpush2.msra.mxu0 0.0
        %3412 = vmatprep.subr.mxu0 0.0
        %3413 = vmatpush2.msra.mxu0 0.0
        %3414 = vmatprep.subr.mxu0 0.0
        %3415 = vmatpush2.msra.mxu0 0.0
        %3416 = vmatprep.subr.mxu0 0.0
        %3417 = vmatpush2.msra.mxu0 0.0
        %3418 = vmatprep.subr.mxu0 0.0
        %3419 = vmatpush2.msra.mxu0 0.0
        %3420 = vmatprep.subr.mxu0 0.0
        %3421 = vmatpush2.msra.mxu0 0.0
        %3422 = vmatprep.mubr.f32.mxu0 0.0
        %v3423 = vand.u32 %v3308, 4294901760
        %v3424 = vsub.f32 %v3308, %v3423
        %v3425 = vand.u32 %v3424, 4294901760
        %v3426 = vsub.f32 %v3424, %v3425
        %v3427 = vand.u32 %v3426, 4294901760
        %3428 = vmatmul.mubr.f32.gmra.mxu0 %v3427
        %v3429 = vpop.f32.mrf.mxu0
        %v3430 = vadd.f32 0.0, %v3429
        %v3431 = vpop.f32.mrf.mxu0
        %3432 = vmatprep.mubr.f32.mxu0 0.0
        %v3433 = vand.u32 %v3311, 4294901760
        %v3434 = vsub.f32 %v3311, %v3433
        %v3435 = vand.u32 %v3434, 4294901760
        %v3436 = vsub.f32 %v3434, %v3435
        %v3437 = vand.u32 %v3436, 4294901760
        %3438 = vmatmul.mubr.f32.gmra.mxu0 %v3437
        %v3439 = vpop.f32.mrf.mxu0
        %v3440 = vadd.f32 0.0, %v3439
        %v3441 = vpop.f32.mrf.mxu0
        %3442 = vmatprep.mubr.f32.mxu0 0.0
        %v3443 = vand.u32 %v3314, 4294901760
        %v3444 = vsub.f32 %v3314, %v3443
        %v3445 = vand.u32 %v3444, 4294901760
        %v3446 = vsub.f32 %v3444, %v3445
        %v3447 = vand.u32 %v3446, 4294901760
        %3448 = vmatmul.mubr.f32.gmra.mxu0 %v3447
        %v3449 = vpop.f32.mrf.mxu0
        %v3450 = vadd.f32 0.0, %v3449
        %v3451 = vpop.f32.mrf.mxu0
        %3452 = vmatprep.mubr.f32.mxu0 0.0
        %v3453 = vand.u32 %v3317, 4294901760
        %v3454 = vsub.f32 %v3317, %v3453
        %v3455 = vand.u32 %v3454, 4294901760
        %v3456 = vsub.f32 %v3454, %v3455
        %v3457 = vand.u32 %v3456, 4294901760
        %3458 = vmatmul.mubr.f32.gmra.mxu0 %v3457
        %v3459 = vpop.f32.mrf.mxu0
        %v3460 = vadd.f32 0.0, %v3459
        %v3461 = vpop.f32.mrf.mxu0
        %3462 = vmatprep.mubr.f32.mxu0 0.0
        %v3463 = vand.u32 %v3320, 4294901760
        %v3464 = vsub.f32 %v3320, %v3463
        %v3465 = vand.u32 %v3464, 4294901760
        %v3466 = vsub.f32 %v3464, %v3465
        %v3467 = vand.u32 %v3466, 4294901760
        %3468 = vmatmul.mubr.f32.gmra.mxu0 %v3467
        %v3469 = vpop.f32.mrf.mxu0
        %v3470 = vadd.f32 0.0, %v3469
        %v3471 = vpop.f32.mrf.mxu0
        %3472 = vmatprep.mubr.f32.mxu0 0.0
        %v3473 = vand.u32 %v3323, 4294901760
        %v3474 = vsub.f32 %v3323, %v3473
        %v3475 = vand.u32 %v3474, 4294901760
        %v3476 = vsub.f32 %v3474, %v3475
        %v3477 = vand.u32 %v3476, 4294901760
        %3478 = vmatmul.mubr.f32.gmra.mxu0 %v3477
        %v3479 = vpop.f32.mrf.mxu0
        %v3480 = vadd.f32 0.0, %v3479
        %v3481 = vpop.f32.mrf.mxu0
        %3482 = vmatprep.mubr.f32.mxu0 0.0
        %v3483 = vand.u32 %v3326, 4294901760
        %v3484 = vsub.f32 %v3326, %v3483
        %v3485 = vand.u32 %v3484, 4294901760
        %v3486 = vsub.f32 %v3484, %v3485
        %v3487 = vand.u32 %v3486, 4294901760
        %3488 = vmatmul.mubr.f32.gmra.mxu0 %v3487
        %v3489 = vpop.f32.mrf.mxu0
        %v3490 = vadd.f32 0.0, %v3489
        %v3491 = vpop.f32.mrf.mxu0
        %3492 = vmatprep.mubr.f32.mxu0 0.0
        %v3493 = vand.u32 %v3329, 4294901760
        %v3494 = vsub.f32 %v3329, %v3493
        %v3495 = vand.u32 %v3494, 4294901760
        %v3496 = vsub.f32 %v3494, %v3495
        %v3497 = vand.u32 %v3496, 4294901760
        %3498 = vmatmul.mubr.f32.gmra.mxu0 %v3497
        %v3499 = vpop.f32.mrf.mxu0
        %v3500 = vadd.f32 0.0, %v3499
        %v3501 = vpop.f32.mrf.mxu0
        %3502 = vmatprep.mubr.f32.mxu0 0.0
        %v3503 = vand.u32 %v3332, 4294901760
        %v3504 = vsub.f32 %v3332, %v3503
        %v3505 = vand.u32 %v3504, 4294901760
        %v3506 = vsub.f32 %v3504, %v3505
        %v3507 = vand.u32 %v3506, 4294901760
        %3508 = vmatmul.mubr.f32.gmra.mxu0 %v3507
        %v3509 = vpop.f32.mrf.mxu0
        %v3510 = vadd.f32 0.0, %v3509
        %v3511 = vpop.f32.mrf.mxu0
        %3512 = vmatprep.mubr.f32.mxu0 0.0
        %v3513 = vand.u32 %v3335, 4294901760
        %v3514 = vsub.f32 %v3335, %v3513
        %v3515 = vand.u32 %v3514, 4294901760
        %v3516 = vsub.f32 %v3514, %v3515
        %v3517 = vand.u32 %v3516, 4294901760
        %3518 = vmatmul.mubr.f32.gmra.mxu0 %v3517
        %v3519 = vpop.f32.mrf.mxu0
        %v3520 = vadd.f32 0.0, %v3519
        %v3521 = vpop.f32.mrf.mxu0
        %3522 = vmatprep.mubr.f32.mxu0 0.0
        %v3523 = vand.u32 %v3338, 4294901760
        %v3524 = vsub.f32 %v3338, %v3523
        %v3525 = vand.u32 %v3524, 4294901760
        %v3526 = vsub.f32 %v3524, %v3525
        %v3527 = vand.u32 %v3526, 4294901760
        %3528 = vmatmul.mubr.f32.gmra.mxu0 %v3527
        %v3529 = vpop.f32.mrf.mxu0
        %v3530 = vadd.f32 0.0, %v3529
        %v3531 = vpop.f32.mrf.mxu0
        %3532 = vmatprep.mubr.f32.mxu0 0.0
        %v3533 = vand.u32 %v3341, 4294901760
        %v3534 = vsub.f32 %v3341, %v3533
        %v3535 = vand.u32 %v3534, 4294901760
        %v3536 = vsub.f32 %v3534, %v3535
        %v3537 = vand.u32 %v3536, 4294901760
        %3538 = vmatmul.mubr.f32.gmra.mxu0 %v3537
        %v3539 = vpop.f32.mrf.mxu0
        %v3540 = vadd.f32 0.0, %v3539
        %v3541 = vpop.f32.mrf.mxu0
        %3542 = vmatprep.mubr.f32.mxu0 0.0
        %v3543 = vand.u32 %v3344, 4294901760
        %v3544 = vsub.f32 %v3344, %v3543
        %v3545 = vand.u32 %v3544, 4294901760
        %v3546 = vsub.f32 %v3544, %v3545
        %v3547 = vand.u32 %v3546, 4294901760
        %3548 = vmatmul.mubr.f32.gmra.mxu0 %v3547
        %v3549 = vpop.f32.mrf.mxu0
        %v3550 = vadd.f32 0.0, %v3549
        %v3551 = vpop.f32.mrf.mxu0
        %3552 = vmatprep.mubr.f32.mxu0 0.0
        %v3553 = vand.u32 %v3347, 4294901760
        %v3554 = vsub.f32 %v3347, %v3553
        %v3555 = vand.u32 %v3554, 4294901760
        %v3556 = vsub.f32 %v3554, %v3555
        %v3557 = vand.u32 %v3556, 4294901760
        %3558 = vmatmul.mubr.f32.gmra.mxu0 %v3557
        %v3559 = vpop.f32.mrf.mxu0
        %v3560 = vadd.f32 0.0, %v3559
        %v3561 = vpop.f32.mrf.mxu0
        %3562 = vmatprep.mubr.f32.mxu0 0.0
        %v3563 = vand.u32 %v3350, 4294901760
        %v3564 = vsub.f32 %v3350, %v3563
        %v3565 = vand.u32 %v3564, 4294901760
        %v3566 = vsub.f32 %v3564, %v3565
        %v3567 = vand.u32 %v3566, 4294901760
        %3568 = vmatmul.mubr.f32.gmra.mxu0 %v3567
        %v3569 = vpop.f32.mrf.mxu0
        %v3570 = vadd.f32 0.0, %v3569
        %v3571 = vpop.f32.mrf.mxu0
        %3572 = vmatprep.mubr.f32.mxu0 0.0
        %v3573 = vand.u32 %v3353, 4294901760
        %v3574 = vsub.f32 %v3353, %v3573
        %v3575 = vand.u32 %v3574, 4294901760
        %v3576 = vsub.f32 %v3574, %v3575
        %v3577 = vand.u32 %v3576, 4294901760
        %3578 = vmatmul.mubr.f32.gmra.mxu0 %v3577
        %v3579 = vpop.f32.mrf.mxu0
        %v3580 = vadd.f32 0.0, %v3579
        %v3581 = vpop.f32.mrf.mxu0
        %3582 = vdwg.mxu0
        %3583 = vmatprep.subr.mxu0 0.0
        %3584 = vmatpush1.msra.mxu0 0.0
        %3585 = vmatprep.subr.mxu0 0.0
        %3586 = vmatpush1.msra.mxu0 0.0
        %3587 = vmatprep.subr.mxu0 0.0
        %3588 = vmatpush1.msra.mxu0 0.0
        %3589 = vmatprep.subr.mxu0 0.0
        %3590 = vmatpush1.msra.mxu0 0.0
        %3591 = vmatprep.subr.mxu0 0.0
        %3592 = vmatpush1.msra.mxu0 0.0
        %3593 = vmatprep.subr.mxu0 0.0
        %3594 = vmatpush1.msra.mxu0 0.0
        %3595 = vmatprep.subr.mxu0 0.0
        %3596 = vmatpush1.msra.mxu0 0.0
        %3597 = vmatprep.subr.mxu0 0.0
        %3598 = vmatpush1.msra.mxu0 0.0
        %3599 = vmatprep.subr.mxu0 0.0
        %3600 = vmatpush1.msra.mxu0 0.0
        %3601 = vmatprep.subr.mxu0 0.0
        %3602 = vmatpush1.msra.mxu0 0.0
        %3603 = vmatprep.subr.mxu0 0.0
        %3604 = vmatpush1.msra.mxu0 0.0
        %3605 = vmatprep.subr.mxu0 0.0
        %3606 = vmatpush1.msra.mxu0 0.0
        %3607 = vmatprep.subr.mxu0 0.0
        %3608 = vmatpush1.msra.mxu0 0.0
        %3609 = vmatprep.subr.mxu0 0.0
        %v3610 = vand.u32 %v3306, 4294901760
        %v3611 = vsub.f32 %v3306, %v3610
        %v3612 = vand.u32 %v3611, 4294901760
        %v3613 = vsub.f32 %v3611, %v3612
        %v3614 = vand.u32 %v3613, 4294901760
        %3615 = vmatpush1.msra.mxu0 %v3614
        %3616 = vmatprep.subr.mxu0 0.0
        %v3617 = vand.u32 %v3305, 4294901760
        %v3618 = vsub.f32 %v3305, %v3617
        %v3619 = vand.u32 %v3618, 4294901760
        %v3620 = vsub.f32 %v3618, %v3619
        %v3621 = vand.u32 %v3620, 4294901760
        %3622 = vmatpush1.msra.mxu0 %v3621
        %3623 = vmatprep.subr.mxu0 0.0
        %v3624 = vand.u32 %v3304, 4294901760
        %v3625 = vsub.f32 %v3304, %v3624
        %v3626 = vand.u32 %v3625, 4294901760
        %v3627 = vsub.f32 %v3625, %v3626
        %v3628 = vand.u32 %v3627, 4294901760
        %3629 = vmatpush1.msra.mxu0 %v3628
        %3630 = vmatprep.subr.mxu0 0.0
        %3631 = vmatpush2.msra.mxu0 0.0
        %3632 = vmatprep.subr.mxu0 0.0
        %3633 = vmatpush2.msra.mxu0 0.0
        %3634 = vmatprep.subr.mxu0 0.0
        %3635 = vmatpush2.msra.mxu0 0.0
        %3636 = vmatprep.subr.mxu0 0.0
        %3637 = vmatpush2.msra.mxu0 0.0
        %3638 = vmatprep.subr.mxu0 0.0
        %3639 = vmatpush2.msra.mxu0 0.0
        %3640 = vmatprep.subr.mxu0 0.0
        %3641 = vmatpush2.msra.mxu0 0.0
        %3642 = vmatprep.subr.mxu0 0.0
        %3643 = vmatpush2.msra.mxu0 0.0
        %3644 = vmatprep.subr.mxu0 0.0
        %3645 = vmatpush2.msra.mxu0 0.0
        %3646 = vmatprep.subr.mxu0 0.0
        %3647 = vmatpush2.msra.mxu0 0.0
        %3648 = vmatprep.subr.mxu0 0.0
        %3649 = vmatpush2.msra.mxu0 0.0
        %3650 = vmatprep.subr.mxu0 0.0
        %3651 = vmatpush2.msra.mxu0 0.0
        %3652 = vmatprep.subr.mxu0 0.0
        %3653 = vmatpush2.msra.mxu0 0.0
        %3654 = vmatprep.subr.mxu0 0.0
        %3655 = vmatpush2.msra.mxu0 0.0
        %3656 = vmatprep.subr.mxu0 0.0
        %3657 = vmatpush2.msra.mxu0 0.0
        %3658 = vmatprep.subr.mxu0 0.0
        %3659 = vmatpush2.msra.mxu0 0.0
        %3660 = vmatprep.subr.mxu0 0.0
        %3661 = vmatpush2.msra.mxu0 0.0
        %3662 = vmatprep.mubr.f32.mxu0 0.0
        %v3663 = vand.u32 %v3308, 4294901760
        %3664 = vmatmul.mubr.f32.gmra.mxu0 %v3663
        %v3665 = vpop.f32.mrf.mxu0
        %v3666 = vadd.f32 %v3430, %v3665
        %v3667 = vpop.f32.mrf.mxu0
        %3668 = vmatprep.mubr.f32.mxu0 0.0
        %v3669 = vand.u32 %v3311, 4294901760
        %3670 = vmatmul.mubr.f32.gmra.mxu0 %v3669
        %v3671 = vpop.f32.mrf.mxu0
        %v3672 = vadd.f32 %v3440, %v3671
        %v3673 = vpop.f32.mrf.mxu0
        %3674 = vmatprep.mubr.f32.mxu0 0.0
        %v3675 = vand.u32 %v3314, 4294901760
        %3676 = vmatmul.mubr.f32.gmra.mxu0 %v3675
        %v3677 = vpop.f32.mrf.mxu0
        %v3678 = vadd.f32 %v3450, %v3677
        %v3679 = vpop.f32.mrf.mxu0
        %3680 = vmatprep.mubr.f32.mxu0 0.0
        %v3681 = vand.u32 %v3317, 4294901760
        %3682 = vmatmul.mubr.f32.gmra.mxu0 %v3681
        %v3683 = vpop.f32.mrf.mxu0
        %v3684 = vadd.f32 %v3460, %v3683
        %v3685 = vpop.f32.mrf.mxu0
        %3686 = vmatprep.mubr.f32.mxu0 0.0
        %v3687 = vand.u32 %v3320, 4294901760
        %3688 = vmatmul.mubr.f32.gmra.mxu0 %v3687
        %v3689 = vpop.f32.mrf.mxu0
        %v3690 = vadd.f32 %v3470, %v3689
        %v3691 = vpop.f32.mrf.mxu0
        %3692 = vmatprep.mubr.f32.mxu0 0.0
        %v3693 = vand.u32 %v3323, 4294901760
        %3694 = vmatmul.mubr.f32.gmra.mxu0 %v3693
        %v3695 = vpop.f32.mrf.mxu0
        %v3696 = vadd.f32 %v3480, %v3695
        %v3697 = vpop.f32.mrf.mxu0
        %3698 = vmatprep.mubr.f32.mxu0 0.0
        %v3699 = vand.u32 %v3326, 4294901760
        %3700 = vmatmul.mubr.f32.gmra.mxu0 %v3699
        %v3701 = vpop.f32.mrf.mxu0
        %v3702 = vadd.f32 %v3490, %v3701
        %v3703 = vpop.f32.mrf.mxu0
        %3704 = vmatprep.mubr.f32.mxu0 0.0
        %v3705 = vand.u32 %v3329, 4294901760
        %3706 = vmatmul.mubr.f32.gmra.mxu0 %v3705
        %v3707 = vpop.f32.mrf.mxu0
        %v3708 = vadd.f32 %v3500, %v3707
        %v3709 = vpop.f32.mrf.mxu0
        %3710 = vmatprep.mubr.f32.mxu0 0.0
        %v3711 = vand.u32 %v3332, 4294901760
        %3712 = vmatmul.mubr.f32.gmra.mxu0 %v3711
        %v3713 = vpop.f32.mrf.mxu0
        %v3714 = vadd.f32 %v3510, %v3713
        %v3715 = vpop.f32.mrf.mxu0
        %3716 = vmatprep.mubr.f32.mxu0 0.0
        %v3717 = vand.u32 %v3335, 4294901760
        %3718 = vmatmul.mubr.f32.gmra.mxu0 %v3717
        %v3719 = vpop.f32.mrf.mxu0
        %v3720 = vadd.f32 %v3520, %v3719
        %v3721 = vpop.f32.mrf.mxu0
        %3722 = vmatprep.mubr.f32.mxu0 0.0
        %v3723 = vand.u32 %v3338, 4294901760
        %3724 = vmatmul.mubr.f32.gmra.mxu0 %v3723
        %v3725 = vpop.f32.mrf.mxu0
        %v3726 = vadd.f32 %v3530, %v3725
        %v3727 = vpop.f32.mrf.mxu0
        %3728 = vmatprep.mubr.f32.mxu0 0.0
        %v3729 = vand.u32 %v3341, 4294901760
        %3730 = vmatmul.mubr.f32.gmra.mxu0 %v3729
        %v3731 = vpop.f32.mrf.mxu0
        %v3732 = vadd.f32 %v3540, %v3731
        %v3733 = vpop.f32.mrf.mxu0
        %3734 = vmatprep.mubr.f32.mxu0 0.0
        %v3735 = vand.u32 %v3344, 4294901760
        %3736 = vmatmul.mubr.f32.gmra.mxu0 %v3735
        %v3737 = vpop.f32.mrf.mxu0
        %v3738 = vadd.f32 %v3550, %v3737
        %v3739 = vpop.f32.mrf.mxu0
        %3740 = vmatprep.mubr.f32.mxu0 0.0
        %v3741 = vand.u32 %v3347, 4294901760
        %3742 = vmatmul.mubr.f32.gmra.mxu0 %v3741
        %v3743 = vpop.f32.mrf.mxu0
        %v3744 = vadd.f32 %v3560, %v3743
        %v3745 = vpop.f32.mrf.mxu0
        %3746 = vmatprep.mubr.f32.mxu0 0.0
        %v3747 = vand.u32 %v3350, 4294901760
        %3748 = vmatmul.mubr.f32.gmra.mxu0 %v3747
        %v3749 = vpop.f32.mrf.mxu0
        %v3750 = vadd.f32 %v3570, %v3749
        %v3751 = vpop.f32.mrf.mxu0
        %3752 = vmatprep.mubr.f32.mxu0 0.0
        %v3753 = vand.u32 %v3353, 4294901760
        %3754 = vmatmul.mubr.f32.gmra.mxu0 %v3753
        %v3755 = vpop.f32.mrf.mxu0
        %v3756 = vadd.f32 %v3580, %v3755
        %v3757 = vpop.f32.mrf.mxu0
        %3758 = vdwg.mxu0
        %3759 = vmatprep.subr.mxu0 0.0
        %3760 = vmatpush1.msra.mxu0 0.0
        %3761 = vmatprep.subr.mxu0 0.0
        %3762 = vmatpush1.msra.mxu0 0.0
        %3763 = vmatprep.subr.mxu0 0.0
        %3764 = vmatpush1.msra.mxu0 0.0
        %3765 = vmatprep.subr.mxu0 0.0
        %3766 = vmatpush1.msra.mxu0 0.0
        %3767 = vmatprep.subr.mxu0 0.0
        %3768 = vmatpush1.msra.mxu0 0.0
        %3769 = vmatprep.subr.mxu0 0.0
        %3770 = vmatpush1.msra.mxu0 0.0
        %3771 = vmatprep.subr.mxu0 0.0
        %3772 = vmatpush1.msra.mxu0 0.0
        %3773 = vmatprep.subr.mxu0 0.0
        %3774 = vmatpush1.msra.mxu0 0.0
        %3775 = vmatprep.subr.mxu0 0.0
        %3776 = vmatpush1.msra.mxu0 0.0
        %3777 = vmatprep.subr.mxu0 0.0
        %3778 = vmatpush1.msra.mxu0 0.0
        %3779 = vmatprep.subr.mxu0 0.0
        %3780 = vmatpush1.msra.mxu0 0.0
        %3781 = vmatprep.subr.mxu0 0.0
        %3782 = vmatpush1.msra.mxu0 0.0
        %3783 = vmatprep.subr.mxu0 0.0
        %3784 = vmatpush1.msra.mxu0 0.0
        %3785 = vmatprep.subr.mxu0 0.0
        %v3786 = vand.u32 %v3306, 4294901760
        %v3787 = vsub.f32 %v3306, %v3786
        %3788 = vmatpush1.msra.mxu0 %v3787
        %3789 = vmatprep.subr.mxu0 0.0
        %v3790 = vand.u32 %v3305, 4294901760
        %v3791 = vsub.f32 %v3305, %v3790
        %3792 = vmatpush1.msra.mxu0 %v3791
        %3793 = vmatprep.subr.mxu0 0.0
        %v3794 = vand.u32 %v3304, 4294901760
        %v3795 = vsub.f32 %v3304, %v3794
        %3796 = vmatpush1.msra.mxu0 %v3795
        %3797 = vmatprep.subr.mxu0 0.0
        %3798 = vmatpush2.msra.mxu0 0.0
        %3799 = vmatprep.subr.mxu0 0.0
        %3800 = vmatpush2.msra.mxu0 0.0
        %3801 = vmatprep.subr.mxu0 0.0
        %3802 = vmatpush2.msra.mxu0 0.0
        %3803 = vmatprep.subr.mxu0 0.0
        %3804 = vmatpush2.msra.mxu0 0.0
        %3805 = vmatprep.subr.mxu0 0.0
        %3806 = vmatpush2.msra.mxu0 0.0
        %3807 = vmatprep.subr.mxu0 0.0
        %3808 = vmatpush2.msra.mxu0 0.0
        %3809 = vmatprep.subr.mxu0 0.0
        %3810 = vmatpush2.msra.mxu0 0.0
        %3811 = vmatprep.subr.mxu0 0.0
        %3812 = vmatpush2.msra.mxu0 0.0
        %3813 = vmatprep.subr.mxu0 0.0
        %3814 = vmatpush2.msra.mxu0 0.0
        %3815 = vmatprep.subr.mxu0 0.0
        %3816 = vmatpush2.msra.mxu0 0.0
        %3817 = vmatprep.subr.mxu0 0.0
        %3818 = vmatpush2.msra.mxu0 0.0
        %3819 = vmatprep.subr.mxu0 0.0
        %3820 = vmatpush2.msra.mxu0 0.0
        %3821 = vmatprep.subr.mxu0 0.0
        %3822 = vmatpush2.msra.mxu0 0.0
        %3823 = vmatprep.subr.mxu0 0.0
        %3824 = vmatpush2.msra.mxu0 0.0
        %3825 = vmatprep.subr.mxu0 0.0
        %3826 = vmatpush2.msra.mxu0 0.0
        %3827 = vmatprep.subr.mxu0 0.0
        %3828 = vmatpush2.msra.mxu0 0.0
        %3829 = vmatprep.mubr.f32.mxu0 0.0
        %v3830 = vand.u32 %v3308, 4294901760
        %v3831 = vsub.f32 %v3308, %v3830
        %3832 = vmatmul.mubr.f32.gmra.mxu0 %v3831
        %v3833 = vpop.f32.mrf.mxu0
        %v3834 = vadd.f32 %v3666, %v3833
        %v3835 = vpop.f32.mrf.mxu0
        %3836 = vmatprep.mubr.f32.mxu0 0.0
        %v3837 = vand.u32 %v3311, 4294901760
        %v3838 = vsub.f32 %v3311, %v3837
        %3839 = vmatmul.mubr.f32.gmra.mxu0 %v3838
        %v3840 = vpop.f32.mrf.mxu0
        %v3841 = vadd.f32 %v3672, %v3840
        %v3842 = vpop.f32.mrf.mxu0
        %3843 = vmatprep.mubr.f32.mxu0 0.0
        %v3844 = vand.u32 %v3314, 4294901760
        %v3845 = vsub.f32 %v3314, %v3844
        %3846 = vmatmul.mubr.f32.gmra.mxu0 %v3845
        %v3847 = vpop.f32.mrf.mxu0
        %v3848 = vadd.f32 %v3678, %v3847
        %v3849 = vpop.f32.mrf.mxu0
        %3850 = vmatprep.mubr.f32.mxu0 0.0
        %v3851 = vand.u32 %v3317, 4294901760
        %v3852 = vsub.f32 %v3317, %v3851
        %3853 = vmatmul.mubr.f32.gmra.mxu0 %v3852
        %v3854 = vpop.f32.mrf.mxu0
        %v3855 = vadd.f32 %v3684, %v3854
        %v3856 = vpop.f32.mrf.mxu0
        %3857 = vmatprep.mubr.f32.mxu0 0.0
        %v3858 = vand.u32 %v3320, 4294901760
        %v3859 = vsub.f32 %v3320, %v3858
        %3860 = vmatmul.mubr.f32.gmra.mxu0 %v3859
        %v3861 = vpop.f32.mrf.mxu0
        %v3862 = vadd.f32 %v3690, %v3861
        %v3863 = vpop.f32.mrf.mxu0
        %3864 = vmatprep.mubr.f32.mxu0 0.0
        %v3865 = vand.u32 %v3323, 4294901760
        %v3866 = vsub.f32 %v3323, %v3865
        %3867 = vmatmul.mubr.f32.gmra.mxu0 %v3866
        %v3868 = vpop.f32.mrf.mxu0
        %v3869 = vadd.f32 %v3696, %v3868
        %v3870 = vpop.f32.mrf.mxu0
        %3871 = vmatprep.mubr.f32.mxu0 0.0
        %v3872 = vand.u32 %v3326, 4294901760
        %v3873 = vsub.f32 %v3326, %v3872
        %3874 = vmatmul.mubr.f32.gmra.mxu0 %v3873
        %v3875 = vpop.f32.mrf.mxu0
        %v3876 = vadd.f32 %v3702, %v3875
        %v3877 = vpop.f32.mrf.mxu0
        %3878 = vmatprep.mubr.f32.mxu0 0.0
        %v3879 = vand.u32 %v3329, 4294901760
        %v3880 = vsub.f32 %v3329, %v3879
        %3881 = vmatmul.mubr.f32.gmra.mxu0 %v3880
        %v3882 = vpop.f32.mrf.mxu0
        %v3883 = vadd.f32 %v3708, %v3882
        %v3884 = vpop.f32.mrf.mxu0
        %3885 = vmatprep.mubr.f32.mxu0 0.0
        %v3886 = vand.u32 %v3332, 4294901760
        %v3887 = vsub.f32 %v3332, %v3886
        %3888 = vmatmul.mubr.f32.gmra.mxu0 %v3887
        %v3889 = vpop.f32.mrf.mxu0
        %v3890 = vadd.f32 %v3714, %v3889
        %v3891 = vpop.f32.mrf.mxu0
        %3892 = vmatprep.mubr.f32.mxu0 0.0
        %v3893 = vand.u32 %v3335, 4294901760
        %v3894 = vsub.f32 %v3335, %v3893
        %3895 = vmatmul.mubr.f32.gmra.mxu0 %v3894
        %v3896 = vpop.f32.mrf.mxu0
        %v3897 = vadd.f32 %v3720, %v3896
        %v3898 = vpop.f32.mrf.mxu0
        %3899 = vmatprep.mubr.f32.mxu0 0.0
        %v3900 = vand.u32 %v3338, 4294901760
        %v3901 = vsub.f32 %v3338, %v3900
        %3902 = vmatmul.mubr.f32.gmra.mxu0 %v3901
        %v3903 = vpop.f32.mrf.mxu0
        %v3904 = vadd.f32 %v3726, %v3903
        %v3905 = vpop.f32.mrf.mxu0
        %3906 = vmatprep.mubr.f32.mxu0 0.0
        %v3907 = vand.u32 %v3341, 4294901760
        %v3908 = vsub.f32 %v3341, %v3907
        %3909 = vmatmul.mubr.f32.gmra.mxu0 %v3908
        %v3910 = vpop.f32.mrf.mxu0
        %v3911 = vadd.f32 %v3732, %v3910
        %v3912 = vpop.f32.mrf.mxu0
        %3913 = vmatprep.mubr.f32.mxu0 0.0
        %v3914 = vand.u32 %v3344, 4294901760
        %v3915 = vsub.f32 %v3344, %v3914
        %3916 = vmatmul.mubr.f32.gmra.mxu0 %v3915
        %v3917 = vpop.f32.mrf.mxu0
        %v3918 = vadd.f32 %v3738, %v3917
        %v3919 = vpop.f32.mrf.mxu0
        %3920 = vmatprep.mubr.f32.mxu0 0.0
        %v3921 = vand.u32 %v3347, 4294901760
        %v3922 = vsub.f32 %v3347, %v3921
        %3923 = vmatmul.mubr.f32.gmra.mxu0 %v3922
        %v3924 = vpop.f32.mrf.mxu0
        %v3925 = vadd.f32 %v3744, %v3924
        %v3926 = vpop.f32.mrf.mxu0
        %3927 = vmatprep.mubr.f32.mxu0 0.0
        %v3928 = vand.u32 %v3350, 4294901760
        %v3929 = vsub.f32 %v3350, %v3928
        %3930 = vmatmul.mubr.f32.gmra.mxu0 %v3929
        %v3931 = vpop.f32.mrf.mxu0
        %v3932 = vadd.f32 %v3750, %v3931
        %v3933 = vpop.f32.mrf.mxu0
        %3934 = vmatprep.mubr.f32.mxu0 0.0
        %v3935 = vand.u32 %v3353, 4294901760
        %v3936 = vsub.f32 %v3353, %v3935
        %3937 = vmatmul.mubr.f32.gmra.mxu0 %v3936
        %v3938 = vpop.f32.mrf.mxu0
        %v3939 = vadd.f32 %v3756, %v3938
        %v3940 = vpop.f32.mrf.mxu0
        %3941 = vdwg.mxu0
        %3942 = vmatprep.subr.mxu0 0.0
        %3943 = vmatpush1.msra.mxu0 0.0
        %3944 = vmatprep.subr.mxu0 0.0
        %3945 = vmatpush1.msra.mxu0 0.0
        %3946 = vmatprep.subr.mxu0 0.0
        %3947 = vmatpush1.msra.mxu0 0.0
        %3948 = vmatprep.subr.mxu0 0.0
        %3949 = vmatpush1.msra.mxu0 0.0
        %3950 = vmatprep.subr.mxu0 0.0
        %3951 = vmatpush1.msra.mxu0 0.0
        %3952 = vmatprep.subr.mxu0 0.0
        %3953 = vmatpush1.msra.mxu0 0.0
        %3954 = vmatprep.subr.mxu0 0.0
        %3955 = vmatpush1.msra.mxu0 0.0
        %3956 = vmatprep.subr.mxu0 0.0
        %3957 = vmatpush1.msra.mxu0 0.0
        %3958 = vmatprep.subr.mxu0 0.0
        %3959 = vmatpush1.msra.mxu0 0.0
        %3960 = vmatprep.subr.mxu0 0.0
        %3961 = vmatpush1.msra.mxu0 0.0
        %3962 = vmatprep.subr.mxu0 0.0
        %3963 = vmatpush1.msra.mxu0 0.0
        %3964 = vmatprep.subr.mxu0 0.0
        %3965 = vmatpush1.msra.mxu0 0.0
        %3966 = vmatprep.subr.mxu0 0.0
        %3967 = vmatpush1.msra.mxu0 0.0
        %3968 = vmatprep.subr.mxu0 0.0
        %v3969 = vand.u32 %v3306, 4294901760
        %3970 = vmatpush1.msra.mxu0 %v3969
        %3971 = vmatprep.subr.mxu0 0.0
        %v3972 = vand.u32 %v3305, 4294901760
        %3973 = vmatpush1.msra.mxu0 %v3972
        %3974 = vmatprep.subr.mxu0 0.0
        %v3975 = vand.u32 %v3304, 4294901760
        %3976 = vmatpush1.msra.mxu0 %v3975
        %3977 = vmatprep.subr.mxu0 0.0
        %3978 = vmatpush2.msra.mxu0 0.0
        %3979 = vmatprep.subr.mxu0 0.0
        %3980 = vmatpush2.msra.mxu0 0.0
        %3981 = vmatprep.subr.mxu0 0.0
        %3982 = vmatpush2.msra.mxu0 0.0
        %3983 = vmatprep.subr.mxu0 0.0
        %3984 = vmatpush2.msra.mxu0 0.0
        %3985 = vmatprep.subr.mxu0 0.0
        %3986 = vmatpush2.msra.mxu0 0.0
        %3987 = vmatprep.subr.mxu0 0.0
        %3988 = vmatpush2.msra.mxu0 0.0
        %3989 = vmatprep.subr.mxu0 0.0
        %3990 = vmatpush2.msra.mxu0 0.0
        %3991 = vmatprep.subr.mxu0 0.0
        %3992 = vmatpush2.msra.mxu0 0.0
        %3993 = vmatprep.subr.mxu0 0.0
        %3994 = vmatpush2.msra.mxu0 0.0
        %3995 = vmatprep.subr.mxu0 0.0
        %3996 = vmatpush2.msra.mxu0 0.0
        %3997 = vmatprep.subr.mxu0 0.0
        %3998 = vmatpush2.msra.mxu0 0.0
        %3999 = vmatprep.subr.mxu0 0.0
        %4000 = vmatpush2.msra.mxu0 0.0
        %4001 = vmatprep.subr.mxu0 0.0
        %4002 = vmatpush2.msra.mxu0 0.0
        %4003 = vmatprep.subr.mxu0 0.0
        %4004 = vmatpush2.msra.mxu0 0.0
        %4005 = vmatprep.subr.mxu0 0.0
        %4006 = vmatpush2.msra.mxu0 0.0
        %4007 = vmatprep.subr.mxu0 0.0
        %4008 = vmatpush2.msra.mxu0 0.0
        %4009 = vmatprep.mubr.f32.mxu0 0.0
        %v4010 = vand.u32 %v3308, 4294901760
        %v4011 = vsub.f32 %v3308, %v4010
        %v4012 = vand.u32 %v4011, 4294901760
        %4013 = vmatmul.mubr.f32.gmra.mxu0 %v4012
        %v4014 = vpop.f32.mrf.mxu0
        %v4015 = vadd.f32 %v3834, %v4014
        %v4016 = vpop.f32.mrf.mxu0
        %4017 = vmatprep.mubr.f32.mxu0 0.0
        %v4018 = vand.u32 %v3311, 4294901760
        %v4019 = vsub.f32 %v3311, %v4018
        %v4020 = vand.u32 %v4019, 4294901760
        %4021 = vmatmul.mubr.f32.gmra.mxu0 %v4020
        %v4022 = vpop.f32.mrf.mxu0
        %v4023 = vadd.f32 %v3841, %v4022
        %v4024 = vpop.f32.mrf.mxu0
        %4025 = vmatprep.mubr.f32.mxu0 0.0
        %v4026 = vand.u32 %v3314, 4294901760
        %v4027 = vsub.f32 %v3314, %v4026
        %v4028 = vand.u32 %v4027, 4294901760
        %4029 = vmatmul.mubr.f32.gmra.mxu0 %v4028
        %v4030 = vpop.f32.mrf.mxu0
        %v4031 = vadd.f32 %v3848, %v4030
        %v4032 = vpop.f32.mrf.mxu0
        %4033 = vmatprep.mubr.f32.mxu0 0.0
        %v4034 = vand.u32 %v3317, 4294901760
        %v4035 = vsub.f32 %v3317, %v4034
        %v4036 = vand.u32 %v4035, 4294901760
        %4037 = vmatmul.mubr.f32.gmra.mxu0 %v4036
        %v4038 = vpop.f32.mrf.mxu0
        %v4039 = vadd.f32 %v3855, %v4038
        %v4040 = vpop.f32.mrf.mxu0
        %4041 = vmatprep.mubr.f32.mxu0 0.0
        %v4042 = vand.u32 %v3320, 4294901760
        %v4043 = vsub.f32 %v3320, %v4042
        %v4044 = vand.u32 %v4043, 4294901760
        %4045 = vmatmul.mubr.f32.gmra.mxu0 %v4044
        %v4046 = vpop.f32.mrf.mxu0
        %v4047 = vadd.f32 %v3862, %v4046
        %v4048 = vpop.f32.mrf.mxu0
        %4049 = vmatprep.mubr.f32.mxu0 0.0
        %v4050 = vand.u32 %v3323, 4294901760
        %v4051 = vsub.f32 %v3323, %v4050
        %v4052 = vand.u32 %v4051, 4294901760
        %4053 = vmatmul.mubr.f32.gmra.mxu0 %v4052
        %v4054 = vpop.f32.mrf.mxu0
        %v4055 = vadd.f32 %v3869, %v4054
        %v4056 = vpop.f32.mrf.mxu0
        %4057 = vmatprep.mubr.f32.mxu0 0.0
        %v4058 = vand.u32 %v3326, 4294901760
        %v4059 = vsub.f32 %v3326, %v4058
        %v4060 = vand.u32 %v4059, 4294901760
        %4061 = vmatmul.mubr.f32.gmra.mxu0 %v4060
        %v4062 = vpop.f32.mrf.mxu0
        %v4063 = vadd.f32 %v3876, %v4062
        %v4064 = vpop.f32.mrf.mxu0
        %4065 = vmatprep.mubr.f32.mxu0 0.0
        %v4066 = vand.u32 %v3329, 4294901760
        %v4067 = vsub.f32 %v3329, %v4066
        %v4068 = vand.u32 %v4067, 4294901760
        %4069 = vmatmul.mubr.f32.gmra.mxu0 %v4068
        %v4070 = vpop.f32.mrf.mxu0
        %v4071 = vadd.f32 %v3883, %v4070
        %v4072 = vpop.f32.mrf.mxu0
        %4073 = vmatprep.mubr.f32.mxu0 0.0
        %v4074 = vand.u32 %v3332, 4294901760
        %v4075 = vsub.f32 %v3332, %v4074
        %v4076 = vand.u32 %v4075, 4294901760
        %4077 = vmatmul.mubr.f32.gmra.mxu0 %v4076
        %v4078 = vpop.f32.mrf.mxu0
        %v4079 = vadd.f32 %v3890, %v4078
        %v4080 = vpop.f32.mrf.mxu0
        %4081 = vmatprep.mubr.f32.mxu0 0.0
        %v4082 = vand.u32 %v3335, 4294901760
        %v4083 = vsub.f32 %v3335, %v4082
        %v4084 = vand.u32 %v4083, 4294901760
        %4085 = vmatmul.mubr.f32.gmra.mxu0 %v4084
        %v4086 = vpop.f32.mrf.mxu0
        %v4087 = vadd.f32 %v3897, %v4086
        %v4088 = vpop.f32.mrf.mxu0
        %4089 = vmatprep.mubr.f32.mxu0 0.0
        %v4090 = vand.u32 %v3338, 4294901760
        %v4091 = vsub.f32 %v3338, %v4090
        %v4092 = vand.u32 %v4091, 4294901760
        %4093 = vmatmul.mubr.f32.gmra.mxu0 %v4092
        %v4094 = vpop.f32.mrf.mxu0
        %v4095 = vadd.f32 %v3904, %v4094
        %v4096 = vpop.f32.mrf.mxu0
        %4097 = vmatprep.mubr.f32.mxu0 0.0
        %v4098 = vand.u32 %v3341, 4294901760
        %v4099 = vsub.f32 %v3341, %v4098
        %v4100 = vand.u32 %v4099, 4294901760
        %4101 = vmatmul.mubr.f32.gmra.mxu0 %v4100
        %v4102 = vpop.f32.mrf.mxu0
        %v4103 = vadd.f32 %v3911, %v4102
        %v4104 = vpop.f32.mrf.mxu0
        %4105 = vmatprep.mubr.f32.mxu0 0.0
        %v4106 = vand.u32 %v3344, 4294901760
        %v4107 = vsub.f32 %v3344, %v4106
        %v4108 = vand.u32 %v4107, 4294901760
        %4109 = vmatmul.mubr.f32.gmra.mxu0 %v4108
        %v4110 = vpop.f32.mrf.mxu0
        %v4111 = vadd.f32 %v3918, %v4110
        %v4112 = vpop.f32.mrf.mxu0
        %4113 = vmatprep.mubr.f32.mxu0 0.0
        %v4114 = vand.u32 %v3347, 4294901760
        %v4115 = vsub.f32 %v3347, %v4114
        %v4116 = vand.u32 %v4115, 4294901760
        %4117 = vmatmul.mubr.f32.gmra.mxu0 %v4116
        %v4118 = vpop.f32.mrf.mxu0
        %v4119 = vadd.f32 %v3925, %v4118
        %v4120 = vpop.f32.mrf.mxu0
        %4121 = vmatprep.mubr.f32.mxu0 0.0
        %v4122 = vand.u32 %v3350, 4294901760
        %v4123 = vsub.f32 %v3350, %v4122
        %v4124 = vand.u32 %v4123, 4294901760
        %4125 = vmatmul.mubr.f32.gmra.mxu0 %v4124
        %v4126 = vpop.f32.mrf.mxu0
        %v4127 = vadd.f32 %v3932, %v4126
        %v4128 = vpop.f32.mrf.mxu0
        %4129 = vmatprep.mubr.f32.mxu0 0.0
        %v4130 = vand.u32 %v3353, 4294901760
        %v4131 = vsub.f32 %v3353, %v4130
        %v4132 = vand.u32 %v4131, 4294901760
        %4133 = vmatmul.mubr.f32.gmra.mxu0 %v4132
        %v4134 = vpop.f32.mrf.mxu0
        %v4135 = vadd.f32 %v3939, %v4134
        %v4136 = vpop.f32.mrf.mxu0
        %4137 = vdwg.mxu0
        %4138 = vmatprep.subr.mxu0 0.0
        %4139 = vmatpush1.msra.mxu0 0.0
        %4140 = vmatprep.subr.mxu0 0.0
        %4141 = vmatpush1.msra.mxu0 0.0
        %4142 = vmatprep.subr.mxu0 0.0
        %4143 = vmatpush1.msra.mxu0 0.0
        %4144 = vmatprep.subr.mxu0 0.0
        %4145 = vmatpush1.msra.mxu0 0.0
        %4146 = vmatprep.subr.mxu0 0.0
        %4147 = vmatpush1.msra.mxu0 0.0
        %4148 = vmatprep.subr.mxu0 0.0
        %4149 = vmatpush1.msra.mxu0 0.0
        %4150 = vmatprep.subr.mxu0 0.0
        %4151 = vmatpush1.msra.mxu0 0.0
        %4152 = vmatprep.subr.mxu0 0.0
        %4153 = vmatpush1.msra.mxu0 0.0
        %4154 = vmatprep.subr.mxu0 0.0
        %4155 = vmatpush1.msra.mxu0 0.0
        %4156 = vmatprep.subr.mxu0 0.0
        %4157 = vmatpush1.msra.mxu0 0.0
        %4158 = vmatprep.subr.mxu0 0.0
        %4159 = vmatpush1.msra.mxu0 0.0
        %4160 = vmatprep.subr.mxu0 0.0
        %4161 = vmatpush1.msra.mxu0 0.0
        %4162 = vmatprep.subr.mxu0 0.0
        %4163 = vmatpush1.msra.mxu0 0.0
        %4164 = vmatprep.subr.mxu0 0.0
        %v4165 = vand.u32 %v3306, 4294901760
        %v4166 = vsub.f32 %v3306, %v4165
        %v4167 = vand.u32 %v4166, 4294901760
        %4168 = vmatpush1.msra.mxu0 %v4167
        %4169 = vmatprep.subr.mxu0 0.0
        %v4170 = vand.u32 %v3305, 4294901760
        %v4171 = vsub.f32 %v3305, %v4170
        %v4172 = vand.u32 %v4171, 4294901760
        %4173 = vmatpush1.msra.mxu0 %v4172
        %4174 = vmatprep.subr.mxu0 0.0
        %v4175 = vand.u32 %v3304, 4294901760
        %v4176 = vsub.f32 %v3304, %v4175
        %v4177 = vand.u32 %v4176, 4294901760
        %4178 = vmatpush1.msra.mxu0 %v4177
        %4179 = vmatprep.subr.mxu0 0.0
        %4180 = vmatpush2.msra.mxu0 0.0
        %4181 = vmatprep.subr.mxu0 0.0
        %4182 = vmatpush2.msra.mxu0 0.0
        %4183 = vmatprep.subr.mxu0 0.0
        %4184 = vmatpush2.msra.mxu0 0.0
        %4185 = vmatprep.subr.mxu0 0.0
        %4186 = vmatpush2.msra.mxu0 0.0
        %4187 = vmatprep.subr.mxu0 0.0
        %4188 = vmatpush2.msra.mxu0 0.0
        %4189 = vmatprep.subr.mxu0 0.0
        %4190 = vmatpush2.msra.mxu0 0.0
        %4191 = vmatprep.subr.mxu0 0.0
        %4192 = vmatpush2.msra.mxu0 0.0
        %4193 = vmatprep.subr.mxu0 0.0
        %4194 = vmatpush2.msra.mxu0 0.0
        %4195 = vmatprep.subr.mxu0 0.0
        %4196 = vmatpush2.msra.mxu0 0.0
        %4197 = vmatprep.subr.mxu0 0.0
        %4198 = vmatpush2.msra.mxu0 0.0
        %4199 = vmatprep.subr.mxu0 0.0
        %4200 = vmatpush2.msra.mxu0 0.0
        %4201 = vmatprep.subr.mxu0 0.0
        %4202 = vmatpush2.msra.mxu0 0.0
        %4203 = vmatprep.subr.mxu0 0.0
        %4204 = vmatpush2.msra.mxu0 0.0
        %4205 = vmatprep.subr.mxu0 0.0
        %4206 = vmatpush2.msra.mxu0 0.0
        %4207 = vmatprep.subr.mxu0 0.0
        %4208 = vmatpush2.msra.mxu0 0.0
        %4209 = vmatprep.subr.mxu0 0.0
        %4210 = vmatpush2.msra.mxu0 0.0
        %4211 = vmatprep.mubr.f32.mxu0 0.0
        %v4212 = vand.u32 %v3308, 4294901760
        %4213 = vmatmul.mubr.f32.gmra.mxu0 %v4212
        %v4214 = vpop.f32.mrf.mxu0
        %v4215 = vadd.f32 %v4015, %v4214
        %v4216 = vpop.f32.mrf.mxu0
        %4217 = vmatprep.mubr.f32.mxu0 0.0
        %v4218 = vand.u32 %v3311, 4294901760
        %4219 = vmatmul.mubr.f32.gmra.mxu0 %v4218
        %v4220 = vpop.f32.mrf.mxu0
        %v4221 = vadd.f32 %v4023, %v4220
        %v4222 = vpop.f32.mrf.mxu0
        %4223 = vmatprep.mubr.f32.mxu0 0.0
        %v4224 = vand.u32 %v3314, 4294901760
        %4225 = vmatmul.mubr.f32.gmra.mxu0 %v4224
        %v4226 = vpop.f32.mrf.mxu0
        %v4227 = vadd.f32 %v4031, %v4226
        %v4228 = vpop.f32.mrf.mxu0
        %4229 = vmatprep.mubr.f32.mxu0 0.0
        %v4230 = vand.u32 %v3317, 4294901760
        %4231 = vmatmul.mubr.f32.gmra.mxu0 %v4230
        %v4232 = vpop.f32.mrf.mxu0
        %v4233 = vadd.f32 %v4039, %v4232
        %v4234 = vpop.f32.mrf.mxu0
        %4235 = vmatprep.mubr.f32.mxu0 0.0
        %v4236 = vand.u32 %v3320, 4294901760
        %4237 = vmatmul.mubr.f32.gmra.mxu0 %v4236
        %v4238 = vpop.f32.mrf.mxu0
        %v4239 = vadd.f32 %v4047, %v4238
        %v4240 = vpop.f32.mrf.mxu0
        %4241 = vmatprep.mubr.f32.mxu0 0.0
        %v4242 = vand.u32 %v3323, 4294901760
        %4243 = vmatmul.mubr.f32.gmra.mxu0 %v4242
        %v4244 = vpop.f32.mrf.mxu0
        %v4245 = vadd.f32 %v4055, %v4244
        %v4246 = vpop.f32.mrf.mxu0
        %4247 = vmatprep.mubr.f32.mxu0 0.0
        %v4248 = vand.u32 %v3326, 4294901760
        %4249 = vmatmul.mubr.f32.gmra.mxu0 %v4248
        %v4250 = vpop.f32.mrf.mxu0
        %v4251 = vadd.f32 %v4063, %v4250
        %v4252 = vpop.f32.mrf.mxu0
        %4253 = vmatprep.mubr.f32.mxu0 0.0
        %v4254 = vand.u32 %v3329, 4294901760
        %4255 = vmatmul.mubr.f32.gmra.mxu0 %v4254
        %v4256 = vpop.f32.mrf.mxu0
        %v4257 = vadd.f32 %v4071, %v4256
        %v4258 = vpop.f32.mrf.mxu0
        %4259 = vmatprep.mubr.f32.mxu0 0.0
        %v4260 = vand.u32 %v3332, 4294901760
        %4261 = vmatmul.mubr.f32.gmra.mxu0 %v4260
        %v4262 = vpop.f32.mrf.mxu0
        %v4263 = vadd.f32 %v4079, %v4262
        %v4264 = vpop.f32.mrf.mxu0
        %4265 = vmatprep.mubr.f32.mxu0 0.0
        %v4266 = vand.u32 %v3335, 4294901760
        %4267 = vmatmul.mubr.f32.gmra.mxu0 %v4266
        %v4268 = vpop.f32.mrf.mxu0
        %v4269 = vadd.f32 %v4087, %v4268
        %v4270 = vpop.f32.mrf.mxu0
        %4271 = vmatprep.mubr.f32.mxu0 0.0
        %v4272 = vand.u32 %v3338, 4294901760
        %4273 = vmatmul.mubr.f32.gmra.mxu0 %v4272
        %v4274 = vpop.f32.mrf.mxu0
        %v4275 = vadd.f32 %v4095, %v4274
        %v4276 = vpop.f32.mrf.mxu0
        %4277 = vmatprep.mubr.f32.mxu0 0.0
        %v4278 = vand.u32 %v3341, 4294901760
        %4279 = vmatmul.mubr.f32.gmra.mxu0 %v4278
        %v4280 = vpop.f32.mrf.mxu0
        %v4281 = vadd.f32 %v4103, %v4280
        %v4282 = vpop.f32.mrf.mxu0
        %4283 = vmatprep.mubr.f32.mxu0 0.0
        %v4284 = vand.u32 %v3344, 4294901760
        %4285 = vmatmul.mubr.f32.gmra.mxu0 %v4284
        %v4286 = vpop.f32.mrf.mxu0
        %v4287 = vadd.f32 %v4111, %v4286
        %v4288 = vpop.f32.mrf.mxu0
        %4289 = vmatprep.mubr.f32.mxu0 0.0
        %v4290 = vand.u32 %v3347, 4294901760
        %4291 = vmatmul.mubr.f32.gmra.mxu0 %v4290
        %v4292 = vpop.f32.mrf.mxu0
        %v4293 = vadd.f32 %v4119, %v4292
        %v4294 = vpop.f32.mrf.mxu0
        %4295 = vmatprep.mubr.f32.mxu0 0.0
        %v4296 = vand.u32 %v3350, 4294901760
        %4297 = vmatmul.mubr.f32.gmra.mxu0 %v4296
        %v4298 = vpop.f32.mrf.mxu0
        %v4299 = vadd.f32 %v4127, %v4298
        %v4300 = vpop.f32.mrf.mxu0
        %4301 = vmatprep.mubr.f32.mxu0 0.0
        %v4302 = vand.u32 %v3353, 4294901760
        %4303 = vmatmul.mubr.f32.gmra.mxu0 %v4302
        %v4304 = vpop.f32.mrf.mxu0
        %v4305 = vadd.f32 %v4135, %v4304
        %v4306 = vpop.f32.mrf.mxu0
        %4307 = vdwg.mxu0
        %4308 = vmatprep.subr.mxu0 0.0
        %4309 = vmatpush1.msra.mxu0 0.0
        %4310 = vmatprep.subr.mxu0 0.0
        %4311 = vmatpush1.msra.mxu0 0.0
        %4312 = vmatprep.subr.mxu0 0.0
        %4313 = vmatpush1.msra.mxu0 0.0
        %4314 = vmatprep.subr.mxu0 0.0
        %4315 = vmatpush1.msra.mxu0 0.0
        %4316 = vmatprep.subr.mxu0 0.0
        %4317 = vmatpush1.msra.mxu0 0.0
        %4318 = vmatprep.subr.mxu0 0.0
        %4319 = vmatpush1.msra.mxu0 0.0
        %4320 = vmatprep.subr.mxu0 0.0
        %4321 = vmatpush1.msra.mxu0 0.0
        %4322 = vmatprep.subr.mxu0 0.0
        %4323 = vmatpush1.msra.mxu0 0.0
        %4324 = vmatprep.subr.mxu0 0.0
        %4325 = vmatpush1.msra.mxu0 0.0
        %4326 = vmatprep.subr.mxu0 0.0
        %4327 = vmatpush1.msra.mxu0 0.0
        %4328 = vmatprep.subr.mxu0 0.0
        %4329 = vmatpush1.msra.mxu0 0.0
        %4330 = vmatprep.subr.mxu0 0.0
        %4331 = vmatpush1.msra.mxu0 0.0
        %4332 = vmatprep.subr.mxu0 0.0
        %4333 = vmatpush1.msra.mxu0 0.0
        %4334 = vmatprep.subr.mxu0 0.0
        %v4335 = vand.u32 %v3306, 4294901760
        %4336 = vmatpush1.msra.mxu0 %v4335
        %4337 = vmatprep.subr.mxu0 0.0
        %v4338 = vand.u32 %v3305, 4294901760
        %4339 = vmatpush1.msra.mxu0 %v4338
        %4340 = vmatprep.subr.mxu0 0.0
        %v4341 = vand.u32 %v3304, 4294901760
        %4342 = vmatpush1.msra.mxu0 %v4341
        %4343 = vmatprep.subr.mxu0 0.0
        %4344 = vmatpush2.msra.mxu0 0.0
        %4345 = vmatprep.subr.mxu0 0.0
        %4346 = vmatpush2.msra.mxu0 0.0
        %4347 = vmatprep.subr.mxu0 0.0
        %4348 = vmatpush2.msra.mxu0 0.0
        %4349 = vmatprep.subr.mxu0 0.0
        %4350 = vmatpush2.msra.mxu0 0.0
        %4351 = vmatprep.subr.mxu0 0.0
        %4352 = vmatpush2.msra.mxu0 0.0
        %4353 = vmatprep.subr.mxu0 0.0
        %4354 = vmatpush2.msra.mxu0 0.0
        %4355 = vmatprep.subr.mxu0 0.0
        %4356 = vmatpush2.msra.mxu0 0.0
        %4357 = vmatprep.subr.mxu0 0.0
        %4358 = vmatpush2.msra.mxu0 0.0
        %4359 = vmatprep.subr.mxu0 0.0
        %4360 = vmatpush2.msra.mxu0 0.0
        %4361 = vmatprep.subr.mxu0 0.0
        %4362 = vmatpush2.msra.mxu0 0.0
        %4363 = vmatprep.subr.mxu0 0.0
        %4364 = vmatpush2.msra.mxu0 0.0
        %4365 = vmatprep.subr.mxu0 0.0
        %4366 = vmatpush2.msra.mxu0 0.0
        %4367 = vmatprep.subr.mxu0 0.0
        %4368 = vmatpush2.msra.mxu0 0.0
        %4369 = vmatprep.subr.mxu0 0.0
        %4370 = vmatpush2.msra.mxu0 0.0
        %4371 = vmatprep.subr.mxu0 0.0
        %4372 = vmatpush2.msra.mxu0 0.0
        %4373 = vmatprep.subr.mxu0 0.0
        %4374 = vmatpush2.msra.mxu0 0.0
        %4375 = vmatprep.mubr.f32.mxu0 0.0
        %v4376 = vand.u32 %v3308, 4294901760
        %4377 = vmatmul.mubr.f32.gmra.mxu0 %v4376
        %v4378 = vpop.f32.mrf.mxu0
        %v4379 = vadd.f32 %v4215, %v4378
        %v4380 = vpop.f32.mrf.mxu0
        %4381 = vmatprep.mubr.f32.mxu0 0.0
        %v4382 = vand.u32 %v3311, 4294901760
        %4383 = vmatmul.mubr.f32.gmra.mxu0 %v4382
        %v4384 = vpop.f32.mrf.mxu0
        %v4385 = vadd.f32 %v4221, %v4384
        %v4386 = vpop.f32.mrf.mxu0
        %4387 = vmatprep.mubr.f32.mxu0 0.0
        %v4388 = vand.u32 %v3314, 4294901760
        %4389 = vmatmul.mubr.f32.gmra.mxu0 %v4388
        %v4390 = vpop.f32.mrf.mxu0
        %v4391 = vadd.f32 %v4227, %v4390
        %v4392 = vpop.f32.mrf.mxu0
        %4393 = vmatprep.mubr.f32.mxu0 0.0
        %v4394 = vand.u32 %v3317, 4294901760
        %4395 = vmatmul.mubr.f32.gmra.mxu0 %v4394
        %v4396 = vpop.f32.mrf.mxu0
        %v4397 = vadd.f32 %v4233, %v4396
        %v4398 = vpop.f32.mrf.mxu0
        %4399 = vmatprep.mubr.f32.mxu0 0.0
        %v4400 = vand.u32 %v3320, 4294901760
        %4401 = vmatmul.mubr.f32.gmra.mxu0 %v4400
        %v4402 = vpop.f32.mrf.mxu0
        %v4403 = vadd.f32 %v4239, %v4402
        %v4404 = vpop.f32.mrf.mxu0
        %4405 = vmatprep.mubr.f32.mxu0 0.0
        %v4406 = vand.u32 %v3323, 4294901760
        %4407 = vmatmul.mubr.f32.gmra.mxu0 %v4406
        %v4408 = vpop.f32.mrf.mxu0
        %v4409 = vadd.f32 %v4245, %v4408
        %v4410 = vpop.f32.mrf.mxu0
        %4411 = vmatprep.mubr.f32.mxu0 0.0
        %v4412 = vand.u32 %v3326, 4294901760
        %4413 = vmatmul.mubr.f32.gmra.mxu0 %v4412
        %v4414 = vpop.f32.mrf.mxu0
        %v4415 = vadd.f32 %v4251, %v4414
        %v4416 = vpop.f32.mrf.mxu0
        %4417 = vmatprep.mubr.f32.mxu0 0.0
        %v4418 = vand.u32 %v3329, 4294901760
        %4419 = vmatmul.mubr.f32.gmra.mxu0 %v4418
        %v4420 = vpop.f32.mrf.mxu0
        %v4421 = vadd.f32 %v4257, %v4420
        %v4422 = vpop.f32.mrf.mxu0
        %4423 = vmatprep.mubr.f32.mxu0 0.0
        %v4424 = vand.u32 %v3332, 4294901760
        %4425 = vmatmul.mubr.f32.gmra.mxu0 %v4424
        %v4426 = vpop.f32.mrf.mxu0
        %v4427 = vadd.f32 %v4263, %v4426
        %v4428 = vpop.f32.mrf.mxu0
        %4429 = vmatprep.mubr.f32.mxu0 0.0
        %v4430 = vand.u32 %v3335, 4294901760
        %4431 = vmatmul.mubr.f32.gmra.mxu0 %v4430
        %v4432 = vpop.f32.mrf.mxu0
        %v4433 = vadd.f32 %v4269, %v4432
        %v4434 = vpop.f32.mrf.mxu0
        %4435 = vmatprep.mubr.f32.mxu0 0.0
        %v4436 = vand.u32 %v3338, 4294901760
        %4437 = vmatmul.mubr.f32.gmra.mxu0 %v4436
        %v4438 = vpop.f32.mrf.mxu0
        %v4439 = vadd.f32 %v4275, %v4438
        %v4440 = vpop.f32.mrf.mxu0
        %4441 = vmatprep.mubr.f32.mxu0 0.0
        %v4442 = vand.u32 %v3341, 4294901760
        %4443 = vmatmul.mubr.f32.gmra.mxu0 %v4442
        %v4444 = vpop.f32.mrf.mxu0
        %v4445 = vadd.f32 %v4281, %v4444
        %v4446 = vpop.f32.mrf.mxu0
        %4447 = vmatprep.mubr.f32.mxu0 0.0
        %v4448 = vand.u32 %v3344, 4294901760
        %4449 = vmatmul.mubr.f32.gmra.mxu0 %v4448
        %v4450 = vpop.f32.mrf.mxu0
        %v4451 = vadd.f32 %v4287, %v4450
        %v4452 = vpop.f32.mrf.mxu0
        %4453 = vmatprep.mubr.f32.mxu0 0.0
        %v4454 = vand.u32 %v3347, 4294901760
        %4455 = vmatmul.mubr.f32.gmra.mxu0 %v4454
        %v4456 = vpop.f32.mrf.mxu0
        %v4457 = vadd.f32 %v4293, %v4456
        %v4458 = vpop.f32.mrf.mxu0
        %4459 = vmatprep.mubr.f32.mxu0 0.0
        %v4460 = vand.u32 %v3350, 4294901760
        %4461 = vmatmul.mubr.f32.gmra.mxu0 %v4460
        %v4462 = vpop.f32.mrf.mxu0
        %v4463 = vadd.f32 %v4299, %v4462
        %v4464 = vpop.f32.mrf.mxu0
        %4465 = vmatprep.mubr.f32.mxu0 0.0
        %v4466 = vand.u32 %v3353, 4294901760
        %4467 = vmatmul.mubr.f32.gmra.mxu0 %v4466
        %v4468 = vpop.f32.mrf.mxu0
        %v4469 = vadd.f32 %v4305, %v4468
        %v4470 = vpop.f32.mrf.mxu0
        %4471 = vdwg.mxu0
        %v4472 = vadd.f32 %v2951, %v4379
        %v4473 = vadd.f32 %v2957, %v4385
        %v4474 = vadd.f32 %v2963, %v4391
        %v4475 = vadd.f32 %v2969, %v4397
        %v4476 = vadd.f32 %v2975, %v4403
        %v4477 = vadd.f32 %v2981, %v4409
        %v4478 = vadd.f32 %v2987, %v4415
        %v4479 = vadd.f32 %v2993, %v4421
        %v4480 = vadd.f32 %v2999, %v4427
        %v4481 = vadd.f32 %v3005, %v4433
        %v4482 = vadd.f32 %v3011, %v4439
        %v4483 = vadd.f32 %v3017, %v4445
        %v4484 = vadd.f32 %v3023, %v4451
        %v4485 = vadd.f32 %v3029, %v4457
        %v4486 = vadd.f32 %v3035, %v4463
        %v4487 = vadd.f32 %v3041, %v4469
        %v4488 = vld [vmem:[%s2] sm:$0x1]
        %v4490 = vlaneseq
        %v4491 = vshrl.u32 %v4490, 7
        %v4492 = vsub.s32 0, %v4491
        %v4493 = vrot.slane %v4488, %v4492
        %v4495 = vadd.f32 %v4472, %v4493
        %v4496 = vadd.f32 %v4473, %v4493
        %v4497 = vadd.f32 %v4474, %v4493
        %v4498 = vadd.f32 %v4475, %v4493
        %v4499 = vadd.f32 %v4476, %v4493
        %v4500 = vadd.f32 %v4477, %v4493
        %v4501 = vadd.f32 %v4478, %v4493
        %v4502 = vadd.f32 %v4479, %v4493
        %v4503 = vadd.f32 %v4480, %v4493
        %v4504 = vadd.f32 %v4481, %v4493
        %v4505 = vadd.f32 %v4482, %v4493
        %v4506 = vadd.f32 %v4483, %v4493
        %v4507 = vadd.f32 %v4484, %v4493
        %v4508 = vadd.f32 %v4485, %v4493
        %v4509 = vadd.f32 %v4486, %v4493
        %v4510 = vadd.f32 %v4487, %v4493
        %v4511 = vmax.f32 %v4495, 0.0
        %v4512 = vmax.f32 %v4496, 0.0
        %v4513 = vmax.f32 %v4497, 0.0
        %v4514 = vmax.f32 %v4498, 0.0
        %v4515 = vmax.f32 %v4499, 0.0
        %v4516 = vmax.f32 %v4500, 0.0
        %v4517 = vmax.f32 %v4501, 0.0
        %v4518 = vmax.f32 %v4502, 0.0
        %v4519 = vmax.f32 %v4503, 0.0
        %v4520 = vmax.f32 %v4504, 0.0
        %v4521 = vmax.f32 %v4505, 0.0
        %v4522 = vmax.f32 %v4506, 0.0
        %v4523 = vmax.f32 %v4507, 0.0
        %v4524 = vmax.f32 %v4508, 0.0
        %v4525 = vmax.f32 %v4509, 0.0
        %v4526 = vmax.f32 %v4510, 0.0
        %4527 = vst [vmem:[%s177] sm:$0xff] %v4511
        %4528 = vst [vmem:[%s177 + $0x8] sm:$0xff] %v4512
        %4529 = vst [vmem:[%s177 + $0x10] sm:$0xff] %v4513
        %4530 = vst [vmem:[%s177 + $0x18] sm:$0xff] %v4514
        %4531 = vst [vmem:[%s177 + $0x20] sm:$0xff] %v4515
        %4532 = vst [vmem:[%s177 + $0x28] sm:$0xff] %v4516
        %4533 = vst [vmem:[%s177 + $0x30] sm:$0xff] %v4517
        %4534 = vst [vmem:[%s177 + $0x38] sm:$0xff] %v4518
        %4535 = vst [vmem:[%s177 + $0x40] sm:$0xff] %v4519
        %4536 = vst [vmem:[%s177 + $0x48] sm:$0xff] %v4520
        %4537 = vst [vmem:[%s177 + $0x50] sm:$0xff] %v4521
        %4538 = vst [vmem:[%s177 + $0x58] sm:$0xff] %v4522
        %4539 = vst [vmem:[%s177 + $0x60] sm:$0xff] %v4523
        %4540 = vst [vmem:[%s177 + $0x68] sm:$0xff] %v4524
        %4541 = vst [vmem:[%s177 + $0x70] sm:$0xff] %v4525
        %4542 = vst [vmem:[%s177 + $0x78] sm:$0xff] %v4526
        %s4543 = sand.u32 %s107, 1
        %s4544 = scalar_lea.sflag [#allocation3], %s4543
        %s4545 = sand.u32 %s107, 1
        %s4546 = smul.addr %s4545, 128
        %s4547 = scalar_lea.vmem [#allocation2], %s4546
        // Predicated region
        $region33: #{tpu_custom_call.1} parent=31 // pred_check
          %p4548 = pneg %p117
        $region34: #{tpu_custom_call.1} parent=31 // pred_check_branch
          %4550 = sbr.rel (%p4548) target = $region36
        $region35: #{tpu_custom_call.1} parent=31 // pred_region
          %s4551 = smul.u32 8, %s22
          %s4553 = ssub.s32 2048, 2048
          %4554 = vsyncadd %s4544, %s4553
          %s4555 = smul.addr %s4551, 2
          %s4556 = smul.addr %s21, 32
          %s4557 = sadd.s32 %s4555, %s4556
          %s4558 = smul.addr %s4557, 128
          %s4559 = scalar_lea.hbm %s3, %s4558
          %s4560 = sshll.u32 %s4547, 4
          %s4561 = int_to_ptr.vmem [resolvable:$true] %s4560
          %4566 = dma.vmem_to_hbm [thread:$0]  %s4561, 2048, %s4559, %s4544, 128, 128, 8
        $region36: #{tpu_custom_call.1} parent=31 // pred_fallthru
          _
      $region32: #{tpu_custom_call.1} parent=5 // pred_fallthru
        _
      %p4567 = scmp.le.s32.totalorder 2, %s12
      // Predicated region
      $region37: #{tpu_custom_call.1} parent=5 // pred_check
        %p4568 = pneg %p4567
      $region38: #{tpu_custom_call.1} parent=5 // pred_check_branch
        %4570 = sbr.rel (%p4568) target = $region40
      $region39: #{tpu_custom_call.1} parent=5 // pred_region
        %s4571 = ssub.s32 %s12, 2
        // Predicated region
        $region41: #{tpu_custom_call.1} parent=39 // pred_check
          %p4572 = pneg %p123
        $region42: #{tpu_custom_call.1} parent=39 // pred_check_branch
          %4574 = sbr.rel (%p4572) target = $region44
        $region43: #{tpu_custom_call.1} parent=39 // pred_region
          %s4575 = sand.u32 %s108, 1
          %s4576 = scalar_lea.sflag [#allocation3], %s4575
          %s4577 = sand.u32 %s108, 1
          %s4578 = smul.addr %s4577, 128
          %s4579 = scalar_lea.vmem [#allocation2], %s4578
          %4580 = dma.done %s4576, 2048
        $region44: #{tpu_custom_call.1} parent=39 // pred_fallthru
          _
      $region40: #{tpu_custom_call.1} parent=5 // pred_fallthru
        _
    $region6: #{tpu_custom_call.1} parent=1 // loop_footer
      %s16 = sadd.s32 1, %s12
    $region7: #{tpu_custom_call.1} parent=1 // loop_footer_branch
      %11 = sbr.rel target = $region3
    $region8: #{tpu_custom_call.1} parent=1 // loop_exit
      _
    %4581 = vsyncpa [#allocation3], 1
    %s4582 = scalar_lea.sflag [#allocation3], 1
    %4583 = vsyncpa %s4582, 1

</llo_original>
